<compile_context>
chip_gen: v7x
topology: tpu7x:2x2x1
jax: 0.10.0
libtpu: 0.0.40
codegen_flags: <defaults>
</compile_context>

<pallas_src>
import jax
import jax.numpy as jnp
from jax.experimental import pallas as pl
from jax.experimental.pallas import tpu as pltpu  # noqa: F401  (kept for TPU-specific tuning hooks)


# ---------------------------------------------------------------------------
# Pallas kernels (hot path)
# ---------------------------------------------------------------------------

def _matmul_shift_relu_kernel(x_ref, w_ref, shift_ref, o_ref):
    """o = relu(x @ w + shift).  BN scale is pre-folded into w at prep time."""
    y = jnp.dot(x_ref[...], w_ref[...], preferred_element_type=jnp.float32)
    o_ref[...] = jnp.maximum(y + shift_ref[...], 0.0).astype(o_ref.dtype)


def _conv3_head_fused_kernel(cols_ref, w3_ref, s3_ref, wh_ref, bh_ref, q_ref):
    """Fused conv3 (+ folded BN + ReLU) and Linear head.

    cols_ref : (P, N, K3)  conv3 im2col patches, spatial-major (P = OH3*OW3)
    w3_ref   : (K3, C3)    conv3 weight, BN scale folded, K3 zero-padded
    s3_ref   : (1, C3)     folded BN shift
    wh_ref   : (P, C3, A)  head weight, one (C3, A) block per spatial position
    bh_ref   : (1, A)      head bias
    q_ref    : (N, A)      Q-values
    """
    p_count = cols_ref.shape[0]          # static (== 4 here), fully unrolled
    acc = jnp.zeros(q_ref.shape, jnp.float32)
    for p in range(p_count):
        y = jnp.dot(cols_ref[p], w3_ref[...],
                    preferred_element_type=jnp.float32)
        y = jnp.maximum(y + s3_ref[...], 0.0)          # (N, C3) conv3 act
        acc = acc + jnp.dot(y, wh_ref[p],
                            preferred_element_type=jnp.float32)
    q_ref[...] = (acc + bh_ref[...]).astype(q_ref.dtype)


def matmul_shift_relu(x, w, shift):
    m = x.shape[0]
    n = w.shape[1]
    return pl.pallas_call(
        _matmul_shift_relu_kernel,
        out_shape=jax.ShapeDtypeStruct((m, n), jnp.float32),
    )(x, w, shift)


def conv3_head_fused(cols3, w3, s3, wh, bh):
    n = cols3.shape[1]
    a = wh.shape[2]
    return pl.pallas_call(
        _conv3_head_fused_kernel,
        out_shape=jax.ShapeDtypeStruct((n, a), jnp.float32),
    )(cols3, w3, s3, wh, bh)


# ---------------------------------------------------------------------------
# Glue: im2col (pure data movement, fused by XLA inside the jit)
# ---------------------------------------------------------------------------

def _extract_patches(x_nhwc, kernel_size, stride):
    n, h, w, c = x_nhwc.shape
    oh = (h - kernel_size) // stride + 1
    ow = (w - kernel_size) // stride + 1
    taps = []
    for i in range(kernel_size):
        for j in range(kernel_size):
            taps.append(
                x_nhwc[:, i:i + stride * (oh - 1) + 1:stride,
                          j:j + stride * (ow - 1) + 1:stride, :])
    p = jnp.stack(taps, axis=3)                 # (N, OH, OW, KH*KW, C)
    return p, (n, oh, ow, c)


def im2col(x_nhwc, kernel_size, stride):
    """-> (N*OH*OW, KH*KW*C); rows in (n, oh, ow) order, cols in (ki, kj, c)."""
    p, (n, oh, ow, c) = _extract_patches(x_nhwc, kernel_size, stride)
    return p.reshape(n * oh * ow, kernel_size * kernel_size * c), (n, oh, ow)


def im2col_spatial_major(x_nhwc, kernel_size, stride):
    """-> (OH*OW, N, KH*KW*C): one (N, K) patch block per output position."""
    p, (n, oh, ow, c) = _extract_patches(x_nhwc, kernel_size, stride)
    p = jnp.transpose(p, (1, 2, 0, 3, 4))       # (OH, OW, N, KH*KW, C)
    return p.reshape(oh * ow, n, kernel_size * kernel_size * c), (n, oh, ow)


def _pad_k_last(x, k_to):
    pad = k_to - x.shape[-1]
    if pad > 0:
        width = [(0, 0)] * (x.ndim - 1) + [(0, pad)]
        x = jnp.pad(x, width)
    return x


def conv2d_size_out(size, kernel_size=5, stride=2):
    return (size - (kernel_size - 1) - 1) // stride + 1


def _round_up(v, m):
    return ((v + m - 1) // m) * m


# ---------------------------------------------------------------------------
# One-time parameter preparation (hoisted out of the forward path)
# ---------------------------------------------------------------------------

def prepare_params(params, h, w, eps=1e-5):
    """Fold BN into weights, reshape conv weights to matmul form, pad every
    contraction dim to a multiple of 128, and pre-permute/split the head
    weight per conv3 spatial position.  Done once, outside the jit."""

    def prep_conv(w_oihw, bias, bn):
        gamma, beta, mean, var = bn
        scale = gamma / jnp.sqrt(var + eps)                      # (OC,)
        shift = ((bias - mean) * scale + beta).reshape(1, -1)    # (1, OC)
        oc, ic, kh, kw = w_oihw.shape
        # (OC, IC, KH, KW) -> (KH*KW*IC, OC), matching im2col (ki, kj, c) order
        w_mat = jnp.transpose(w_oihw, (2, 3, 1, 0)).reshape(kh * kw * ic, oc)
        w_mat = w_mat * scale[None, :]                           # fold BN scale
        k_pad = _round_up(w_mat.shape[0], 128)                   # lane-align K
        w_mat = jnp.pad(w_mat, ((0, k_pad - w_mat.shape[0]), (0, 0)))
        return w_mat.astype(jnp.float32), shift.astype(jnp.float32)

    p = {}
    p["w1"], p["s1"] = prep_conv(params["conv1_w"], params["conv1_b"],
                                 params["bn1"])    # K:  75 -> 128
    p["w2"], p["s2"] = prep_conv(params["conv2_w"], params["conv2_b"],
                                 params["bn2"])    # K: 400 -> 512
    p["w3"], p["s3"] = prep_conv(params["conv3_w"], params["conv3_b"],
                                 params["bn3"])    # K: 800 -> 896

    convw = conv2d_size_out(conv2d_size_out(conv2d_size_out(w)))
    convh = conv2d_size_out(conv2d_size_out(conv2d_size_out(h)))
    c_out = 32
    # PyTorch flattens (C, H, W); our conv3 kernel consumes the activation per
    # spatial position in NHWC order.  Permute + split the head weight once so
    # the fused kernel only needs static first-axis indexing.
    hw_ = params["head_w"]                                       # (A, C*Hc*Wc)
    n_actions = hw_.shape[0]
    hw_ = hw_.reshape(n_actions, c_out, convh, convw)
    hw_ = jnp.transpose(hw_, (2, 3, 1, 0))                       # (Hc, Wc, C, A)
    p["wh"] = hw_.reshape(convh * convw, c_out, n_actions).astype(jnp.float32)
    p["bh"] = params["head_b"].reshape(1, -1).astype(jnp.float32)
    return p


# ---------------------------------------------------------------------------
# Parameter init (PyTorch-like shapes)
# ---------------------------------------------------------------------------

def init_dqn_params(key, h, w):
    ks = jax.random.split(key, 20)

    def conv(kw_, kb_, oc, ic, k):
        fan_in = ic * k * k
        std = 1.0 / jnp.sqrt(fan_in)
        wgt = jax.random.uniform(kw_, (oc, ic, k, k), jnp.float32, -std, std)
        bias = jax.random.uniform(kb_, (oc,), jnp.float32, -std, std)
        return wgt, bias

    def bn(kg, kb, km, kv, c):
        gamma = 1.0 + 0.1 * jax.random.normal(kg, (c,), jnp.float32)
        beta = 0.1 * jax.random.normal(kb, (c,), jnp.float32)
        mean = 0.1 * jax.random.normal(km, (c,), jnp.float32)
        var = jax.random.uniform(kv, (c,), jnp.float32, 0.5, 1.5)
        return gamma, beta, mean, var

    p = {}
    p["conv1_w"], p["conv1_b"] = conv(ks[0], ks[1], 16, 3, 5)
    p["bn1"] = bn(ks[2], ks[3], ks[4], ks[5], 16)
    p["conv2_w"], p["conv2_b"] = conv(ks[6], ks[7], 32, 16, 5)
    p["bn2"] = bn(ks[8], ks[9], ks[10], ks[11], 32)
    p["conv3_w"], p["conv3_b"] = conv(ks[12], ks[13], 32, 32, 5)
    p["bn3"] = bn(ks[14], ks[15], ks[16], ks[17], 32)

    convw = conv2d_size_out(conv2d_size_out(conv2d_size_out(w)))
    convh = conv2d_size_out(conv2d_size_out(conv2d_size_out(h)))
    lin_in = convw * convh * 32
    std = 1.0 / jnp.sqrt(lin_in)
    p["head_w"] = jax.random.uniform(ks[18], (2, lin_in), jnp.float32, -std, std)
    p["head_b"] = jax.random.uniform(ks[19], (2,), jnp.float32, -std, std)
    return p


# ---------------------------------------------------------------------------
# DQN forward (single jit; conv1, conv2, and fused conv3+head Pallas kernels)
# ---------------------------------------------------------------------------

@jax.jit
def dqn_forward(prepped, x_nchw):
    """x_nchw: (N, 3, H, W) float32 -> (N, 2) float32."""
    x = jnp.transpose(x_nchw, (0, 2, 3, 1))      # NHWC

    # conv1 + bn1 + relu
    cols, (n, oh, ow) = im2col(x, 5, 2)
    cols = _pad_k_last(cols, prepped["w1"].shape[0])
    x = matmul_shift_relu(cols, prepped["w1"], prepped["s1"]).reshape(n, oh, ow, -1)

    # conv2 + bn2 + relu
    cols, (n, oh, ow) = im2col(x, 5, 2)
    cols = _pad_k_last(cols, prepped["w2"].shape[0])
    x = matmul_shift_relu(cols, prepped["w2"], prepped["s2"]).reshape(n, oh, ow, -1)

    # conv3 + bn3 + relu + Linear head, fused into one kernel -> (N, 2)
    cols, _ = im2col_spatial_major(x, 5, 2)      # (P, N, K3)
    cols = _pad_k_last(cols, prepped["w3"].shape[0])
    return conv3_head_fused(cols, prepped["w3"], prepped["s3"],
                            prepped["wh"], prepped["bh"])


# ---------------------------------------------------------------------------
# Main
# ---------------------------------------------------------------------------

if __name__ == "__main__":
    H, W, N = 40, 40, 2   # final feature map 2x2x32 -> head input = 128
    key = jax.random.PRNGKey(0)
    kp, kx = jax.random.split(key)

    params = init_dqn_params(kp, H, W)
    prepped = prepare_params(params, H, W)       # one-time weight prep
    x = jax.random.normal(kx, (N, 3, H, W), jnp.float32)

    out = dqn_forward(prepped, x)
    out = jax.block_until_ready(out)

    assert out.shape == (N, 2), out.shape
    assert out.dtype == jnp.float32
    assert bool(jnp.all(jnp.isfinite(out)))
    print("KERNEL_OK")
</pallas_src>

<mosaic_0001>
module attributes {stable_mosaic.version = 11 : i64} {
  func.func @_matmul_shift_relu_kernel(%arg0: memref<648x128xf32, #tpu.memory_space<vmem>>, %arg1: memref<128x16xf32, #tpu.memory_space<vmem>>, %arg2: memref<1x16xf32, #tpu.memory_space<vmem>>, %arg3: memref<648x16xf32, #tpu.memory_space<vmem>>) attributes {dimension_semantics = [], scalar_prefetch = 0 : i64, scratch_operands = 0 : i64, tpu.core_type = #tpu.core_type<tc>} {
    %c0 = arith.constant 0 : index
    %c0_0 = arith.constant 0 : index
    %0 = vector.load %arg0[%c0, %c0_0] : memref<648x128xf32, #tpu.memory_space<vmem>>, vector<648x128xf32>
    %c0_1 = arith.constant 0 : index
    %c0_2 = arith.constant 0 : index
    %1 = vector.load %arg1[%c0_1, %c0_2] : memref<128x16xf32, #tpu.memory_space<vmem>>, vector<128x16xf32>
    %cst = arith.constant dense<0.000000e+00> : vector<648x16xf32>
    %2 = tpu.matmul %0, %1, %cst {dimension_numbers = #tpu.dot_dimension_numbers<[1], [0], [0], [1], [0, 0, 1, 1], [], []>} : vector<648x128xf32>, vector<128x16xf32>, vector<648x16xf32> -> vector<648x16xf32>
    %c0_3 = arith.constant 0 : index
    %c0_4 = arith.constant 0 : index
    %3 = vector.load %arg2[%c0_3, %c0_4] : memref<1x16xf32, #tpu.memory_space<vmem>>, vector<1x16xf32>
    %4 = vector.broadcast %3 : vector<1x16xf32> to vector<648x16xf32>
    %5 = arith.addf %2, %4 : vector<648x16xf32>
    %cst_5 = arith.constant 0.000000e+00 : f32
    %6 = vector.broadcast %cst_5 : f32 to vector<648x16xf32>
    %7 = arith.maximumf %5, %6 : vector<648x16xf32>
    %c0_6 = arith.constant 0 : index
    %c0_7 = arith.constant 0 : index
    %8 = vector.load %arg3[%c0_6, %c0_7] : memref<648x16xf32, #tpu.memory_space<vmem>>, vector<648x16xf32>
    tpu.vector_store %arg3[%c0_6, %c0_7], %7 {strides = array<i32>} : memref<648x16xf32, #tpu.memory_space<vmem>>, vector<648x16xf32>,
    return
  }
}

module attributes {stable_mosaic.version = 11 : i64} {
  func.func @_matmul_shift_relu_kernel(%arg0: memref<98x512xf32, #tpu.memory_space<vmem>>, %arg1: memref<512x32xf32, #tpu.memory_space<vmem>>, %arg2: memref<1x32xf32, #tpu.memory_space<vmem>>, %arg3: memref<98x32xf32, #tpu.memory_space<vmem>>) attributes {dimension_semantics = [], scalar_prefetch = 0 : i64, scratch_operands = 0 : i64, tpu.core_type = #tpu.core_type<tc>} {
    %c0 = arith.constant 0 : index
    %c0_0 = arith.constant 0 : index
    %0 = vector.load %arg0[%c0, %c0_0] : memref<98x512xf32, #tpu.memory_space<vmem>>, vector<98x512xf32>
    %c0_1 = arith.constant 0 : index
    %c0_2 = arith.constant 0 : index
    %1 = vector.load %arg1[%c0_1, %c0_2] : memref<512x32xf32, #tpu.memory_space<vmem>>, vector<512x32xf32>
    %cst = arith.constant dense<0.000000e+00> : vector<98x32xf32>
    %2 = tpu.matmul %0, %1, %cst {dimension_numbers = #tpu.dot_dimension_numbers<[1], [0], [0], [1], [0, 0, 1, 1], [], []>} : vector<98x512xf32>, vector<512x32xf32>, vector<98x32xf32> -> vector<98x32xf32>
    %c0_3 = arith.constant 0 : index
    %c0_4 = arith.constant 0 : index
    %3 = vector.load %arg2[%c0_3, %c0_4] : memref<1x32xf32, #tpu.memory_space<vmem>>, vector<1x32xf32>
    %4 = vector.broadcast %3 : vector<1x32xf32> to vector<98x32xf32>
    %5 = arith.addf %2, %4 : vector<98x32xf32>
    %cst_5 = arith.constant 0.000000e+00 : f32
    %6 = vector.broadcast %cst_5 : f32 to vector<98x32xf32>
    %7 = arith.maximumf %5, %6 : vector<98x32xf32>
    %c0_6 = arith.constant 0 : index
    %c0_7 = arith.constant 0 : index
    %8 = vector.load %arg3[%c0_6, %c0_7] : memref<98x32xf32, #tpu.memory_space<vmem>>, vector<98x32xf32>
    tpu.vector_store %arg3[%c0_6, %c0_7], %7 {strides = array<i32>} : memref<98x32xf32, #tpu.memory_space<vmem>>, vector<98x32xf32>,
    return
  }
}

module attributes {stable_mosaic.version = 11 : i64} {
  func.func @_conv3_head_fused_kernel(%arg0: memref<4x2x896xf32, #tpu.memory_space<vmem>>, %arg1: memref<896x32xf32, #tpu.memory_space<vmem>>, %arg2: memref<1x32xf32, #tpu.memory_space<vmem>>, %arg3: memref<4x32x2xf32, #tpu.memory_space<vmem>>, %arg4: memref<1x2xf32, #tpu.memory_space<vmem>>, %arg5: memref<2x2xf32, #tpu.memory_space<vmem>>) attributes {dimension_semantics = [], scalar_prefetch = 0 : i64, scratch_operands = 0 : i64, tpu.core_type = #tpu.core_type<tc>} {
    %cst = arith.constant 0.000000e+00 : f32
    %0 = vector.broadcast %cst : f32 to vector<2x2xf32>
    %c0 = arith.constant 0 : index
    %c0_0 = arith.constant 0 : index
    %c0_1 = arith.constant 0 : index
    %1 = vector.load %arg0[%c0, %c0_0, %c0_1] : memref<4x2x896xf32, #tpu.memory_space<vmem>>, vector<1x2x896xf32>
    %2 = vector.shape_cast %1 : vector<1x2x896xf32> to vector<2x896xf32>
    %c0_2 = arith.constant 0 : index
    %c0_3 = arith.constant 0 : index
    %3 = vector.load %arg1[%c0_2, %c0_3] : memref<896x32xf32, #tpu.memory_space<vmem>>, vector<896x32xf32>
    %cst_4 = arith.constant dense<0.000000e+00> : vector<2x32xf32>
    %4 = tpu.matmul %2, %3, %cst_4 {dimension_numbers = #tpu.dot_dimension_numbers<[1], [0], [0], [1], [0, 0, 1, 1], [], []>} : vector<2x896xf32>, vector<896x32xf32>, vector<2x32xf32> -> vector<2x32xf32>
    %c0_5 = arith.constant 0 : index
    %c0_6 = arith.constant 0 : index
    %5 = vector.load %arg2[%c0_5, %c0_6] : memref<1x32xf32, #tpu.memory_space<vmem>>, vector<1x32xf32>
    %6 = vector.broadcast %5 : vector<1x32xf32> to vector<2x32xf32>
    %7 = arith.addf %4, %6 : vector<2x32xf32>
    %cst_7 = arith.constant 0.000000e+00 : f32
    %8 = vector.broadcast %cst_7 : f32 to vector<2x32xf32>
    %9 = arith.maximumf %7, %8 : vector<2x32xf32>
    %c0_8 = arith.constant 0 : index
    %c0_9 = arith.constant 0 : index
    %c0_10 = arith.constant 0 : index
    %10 = vector.load %arg3[%c0_8, %c0_9, %c0_10] : memref<4x32x2xf32, #tpu.memory_space<vmem>>, vector<1x32x2xf32>
    %11 = vector.shape_cast %10 : vector<1x32x2xf32> to vector<32x2xf32>
    %cst_11 = arith.constant dense<0.000000e+00> : vector<2x2xf32>
    %12 = tpu.matmul %9, %11, %cst_11 {dimension_numbers = #tpu.dot_dimension_numbers<[1], [0], [0], [1], [0, 0, 1, 1], [], []>} : vector<2x32xf32>, vector<32x2xf32>, vector<2x2xf32> -> vector<2x2xf32>
    %13 = arith.addf %0, %12 : vector<2x2xf32>
    %c1 = arith.constant 1 : index
    %c0_12 = arith.constant 0 : index
    %c0_13 = arith.constant 0 : index
    %14 = vector.load %arg0[%c1, %c0_12, %c0_13] : memref<4x2x896xf32, #tpu.memory_space<vmem>>, vector<1x2x896xf32>
    %15 = vector.shape_cast %14 : vector<1x2x896xf32> to vector<2x896xf32>
    %c0_14 = arith.constant 0 : index
    %c0_15 = arith.constant 0 : index
    %16 = vector.load %arg1[%c0_14, %c0_15] : memref<896x32xf32, #tpu.memory_space<vmem>>, vector<896x32xf32>
    %cst_16 = arith.constant dense<0.000000e+00> : vector<2x32xf32>
    %17 = tpu.matmul %15, %16, %cst_16 {dimension_numbers = #tpu.dot_dimension_numbers<[1], [0], [0], [1], [0, 0, 1, 1], [], []>} : vector<2x896xf32>, vector<896x32xf32>, vector<2x32xf32> -> vector<2x32xf32>
    %c0_17 = arith.constant 0 : index
    %c0_18 = arith.constant 0 : index
    %18 = vector.load %arg2[%c0_17, %c0_18] : memref<1x32xf32, #tpu.memory_space<vmem>>, vector<1x32xf32>
    %19 = vector.broadcast %18 : vector<1x32xf32> to vector<2x32xf32>
    %20 = arith.addf %17, %19 : vector<2x32xf32>
    %cst_19 = arith.constant 0.000000e+00 : f32
    %21 = vector.broadcast %cst_19 : f32 to vector<2x32xf32>
    %22 = arith.maximumf %20, %21 : vector<2x32xf32>
    %c1_20 = arith.constant 1 : index
    %c0_21 = arith.constant 0 : index
    %c0_22 = arith.constant 0 : index
    %23 = vector.load %arg3[%c1_20, %c0_21, %c0_22] : memref<4x32x2xf32, #tpu.memory_space<vmem>>, vector<1x32x2xf32>
    %24 = vector.shape_cast %23 : vector<1x32x2xf32> to vector<32x2xf32>
    %cst_23 = arith.constant dense<0.000000e+00> : vector<2x2xf32>
    %25 = tpu.matmul %22, %24, %cst_23 {dimension_numbers = #tpu.dot_dimension_numbers<[1], [0], [0], [1], [0, 0, 1, 1], [], []>} : vector<2x32xf32>, vector<32x2xf32>, vector<2x2xf32> -> vector<2x2xf32>
    %26 = arith.addf %13, %25 : vector<2x2xf32>
    %c2 = arith.constant 2 : index
    %c0_24 = arith.constant 0 : index
    %c0_25 = arith.constant 0 : index
    %27 = vector.load %arg0[%c2, %c0_24, %c0_25] : memref<4x2x896xf32, #tpu.memory_space<vmem>>, vector<1x2x896xf32>
    %28 = vector.shape_cast %27 : vector<1x2x896xf32> to vector<2x896xf32>
    %c0_26 = arith.constant 0 : index
    %c0_27 = arith.constant 0 : index
    %29 = vector.load %arg1[%c0_26, %c0_27] : memref<896x32xf32, #tpu.memory_space<vmem>>, vector<896x32xf32>
    %cst_28 = arith.constant dense<0.000000e+00> : vector<2x32xf32>
    %30 = tpu.matmul %28, %29, %cst_28 {dimension_numbers = #tpu.dot_dimension_numbers<[1], [0], [0], [1], [0, 0, 1, 1], [], []>} : vector<2x896xf32>, vector<896x32xf32>, vector<2x32xf32> -> vector<2x32xf32>
    %c0_29 = arith.constant 0 : index
    %c0_30 = arith.constant 0 : index
    %31 = vector.load %arg2[%c0_29, %c0_30] : memref<1x32xf32, #tpu.memory_space<vmem>>, vector<1x32xf32>
    %32 = vector.broadcast %31 : vector<1x32xf32> to vector<2x32xf32>
    %33 = arith.addf %30, %32 : vector<2x32xf32>
    %cst_31 = arith.constant 0.000000e+00 : f32
    %34 = vector.broadcast %cst_31 : f32 to vector<2x32xf32>
    %35 = arith.maximumf %33, %34 : vector<2x32xf32>
    %c2_32 = arith.constant 2 : index
    %c0_33 = arith.constant 0 : index
    %c0_34 = arith.constant 0 : index
    %36 = vector.load %arg3[%c2_32, %c0_33, %c0_34] : memref<4x32x2xf32, #tpu.memory_space<vmem>>, vector<1x32x2xf32>
    %37 = vector.shape_cast %36 : vector<1x32x2xf32> to vector<32x2xf32>
    %cst_35 = arith.constant dense<0.000000e+00> : vector<2x2xf32>
    %38 = tpu.matmul %35, %37, %cst_35 {dimension_numbers = #tpu.dot_dimension_numbers<[1], [0], [0], [1], [0, 0, 1, 1], [], []>} : vector<2x32xf32>, vector<32x2xf32>, vector<2x2xf32> -> vector<2x2xf32>
    %39 = arith.addf %26, %38 : vector<2x2xf32>
    %c3 = arith.constant 3 : index
    %c0_36 = arith.constant 0 : index
    %c0_37 = arith.constant 0 : index
    %40 = vector.load %arg0[%c3, %c0_36, %c0_37] : memref<4x2x896xf32, #tpu.memory_space<vmem>>, vector<1x2x896xf32>
    %41 = vector.shape_cast %40 : vector<1x2x896xf32> to vector<2x896xf32>
    %c0_38 = arith.constant 0 : index
    %c0_39 = arith.constant 0 : index
    %42 = vector.load %arg1[%c0_38, %c0_39] : memref<896x32xf32, #tpu.memory_space<vmem>>, vector<896x32xf32>
    %cst_40 = arith.constant dense<0.000000e+00> : vector<2x32xf32>
    %43 = tpu.matmul %41, %42, %cst_40 {dimension_numbers = #tpu.dot_dimension_numbers<[1], [0], [0], [1], [0, 0, 1, 1], [], []>} : vector<2x896xf32>, vector<896x32xf32>, vector<2x32xf32> -> vector<2x32xf32>
    %c0_41 = arith.constant 0 : index
    %c0_42 = arith.constant 0 : index
    %44 = vector.load %arg2[%c0_41, %c0_42] : memref<1x32xf32, #tpu.memory_space<vmem>>, vector<1x32xf32>
    %45 = vector.broadcast %44 : vector<1x32xf32> to vector<2x32xf32>
    %46 = arith.addf %43, %45 : vector<2x32xf32>
    %cst_43 = arith.constant 0.000000e+00 : f32
    %47 = vector.broadcast %cst_43 : f32 to vector<2x32xf32>
    %48 = arith.maximumf %46, %47 : vector<2x32xf32>
    %c3_44 = arith.constant 3 : index
    %c0_45 = arith.constant 0 : index
    %c0_46 = arith.constant 0 : index
    %49 = vector.load %arg3[%c3_44, %c0_45, %c0_46] : memref<4x32x2xf32, #tpu.memory_space<vmem>>, vector<1x32x2xf32>
    %50 = vector.shape_cast %49 : vector<1x32x2xf32> to vector<32x2xf32>
    %cst_47 = arith.constant dense<0.000000e+00> : vector<2x2xf32>
    %51 = tpu.matmul %48, %50, %cst_47 {dimension_numbers = #tpu.dot_dimension_numbers<[1], [0], [0], [1], [0, 0, 1, 1], [], []>} : vector<2x32xf32>, vector<32x2xf32>, vector<2x2xf32> -> vector<2x2xf32>
    %52 = arith.addf %39, %51 : vector<2x2xf32>
    %c0_48 = arith.constant 0 : index
    %c0_49 = arith.constant 0 : index
    %53 = vector.load %arg4[%c0_48, %c0_49] : memref<1x2xf32, #tpu.memory_space<vmem>>, vector<1x2xf32>
    %54 = vector.broadcast %53 : vector<1x2xf32> to vector<2x2xf32>
    %55 = arith.addf %52, %54 : vector<2x2xf32>
    %c0_50 = arith.constant 0 : index
    %c0_51 = arith.constant 0 : index
    %56 = vector.load %arg5[%c0_50, %c0_51] : memref<2x2xf32, #tpu.memory_space<vmem>>, vector<2x2xf32>
    tpu.vector_store %arg5[%c0_50, %c0_51], %55 {strides = array<i32>} : memref<2x2xf32, #tpu.memory_space<vmem>>, vector<2x2xf32>,
    return
  }
}

</mosaic_0001>

<llo_original>
// kernel: dqn_forward.3
$region0: #{dqn_forward.3}
  #allocation0 [shape = 'u32[]', space=smem, size = 0x4, offset = 0x4, fixed_abs, tag = 'smem constant byte address 0x4 - core index']
  #allocation1 [shape = 'u32[144,128]{1,0:T(1,128)}', space=vmem, size = 0x12000, scoped, tag = 'internal scratch']
  %s0 = inlined_call_operand.vmem [shape: f32[648,128], index: 0, kind: input, shape index: {}]
  %s1 = inlined_call_operand.vmem [shape: f32[128,16], index: 1, kind: input, shape index: {}]
  %s2 = inlined_call_operand.vmem [shape: f32[1,16], index: 2, kind: input, shape index: {}]
  %s3 = inlined_call_operand.vmem [shape: f32[648,16], index: 3, kind: output, shape index: {}]
  %s4 = sld [smem:[#allocation0]]
  $region22: #{dqn_forward.3} parent=0
    _
  %s6 = ssub.s32 1, %s4
  %s7 = scalar_select 0, %s6, %s4
  // Predicated region
  $region2: #{dqn_forward.3} parent=0 // pred_check
    _
  $region3: #{dqn_forward.3} parent=0 // pred_check_branch
    %9 = sbr.rel (0) target = $region5
  $region4: #{dqn_forward.3} parent=0 // pred_region
    _
  $region5: #{dqn_forward.3} parent=0 // pred_fallthru
    _
  // Predicated region
  $region6: #{dqn_forward.3} parent=0 // pred_check
    _
  $region7: #{dqn_forward.3} parent=0 // pred_check_branch
    %11 = sbr.rel (0) target = $region9
  $region8: #{dqn_forward.3} parent=0 // pred_region
    _
  $region9: #{dqn_forward.3} parent=0 // pred_fallthru
    _
  // Predicated region
  $region10: #{dqn_forward.3} parent=0 // pred_check
    _
  $region11: #{dqn_forward.3} parent=0 // pred_check_branch
    %13 = sbr.rel (0) target = $region13
  $region12: #{dqn_forward.3} parent=0 // pred_region
    _
  $region13: #{dqn_forward.3} parent=0 // pred_fallthru
    _
  %v14 = vld [vmem:[%s0] sm:$0xff]
  %v15 = vld [vmem:[%s0 + $0x8] sm:$0xff]
  %v16 = vld [vmem:[%s0 + $0x10] sm:$0xff]
  %v17 = vld [vmem:[%s0 + $0x18] sm:$0xff]
  %v18 = vld [vmem:[%s0 + $0x20] sm:$0xff]
  %v19 = vld [vmem:[%s0 + $0x28] sm:$0xff]
  %v20 = vld [vmem:[%s0 + $0x30] sm:$0xff]
  %v21 = vld [vmem:[%s0 + $0x38] sm:$0xff]
  %v22 = vld [vmem:[%s0 + $0x40] sm:$0xff]
  %v23 = vld [vmem:[%s0 + $0x48] sm:$0xff]
  %v24 = vld [vmem:[%s0 + $0x50] sm:$0xff]
  %v25 = vld [vmem:[%s0 + $0x58] sm:$0xff]
  %v26 = vld [vmem:[%s0 + $0x60] sm:$0xff]
  %v27 = vld [vmem:[%s0 + $0x68] sm:$0xff]
  %v28 = vld [vmem:[%s0 + $0x70] sm:$0xff]
  %v29 = vld [vmem:[%s0 + $0x78] sm:$0xff]
  %v30 = vld [vmem:[%s0 + $0x80] sm:$0xff]
  %v31 = vld [vmem:[%s0 + $0x88] sm:$0xff]
  %v32 = vld [vmem:[%s0 + $0x90] sm:$0xff]
  %v33 = vld [vmem:[%s0 + $0x98] sm:$0xff]
  %v34 = vld [vmem:[%s0 + $0xa0] sm:$0xff]
  %v35 = vld [vmem:[%s0 + $0xa8] sm:$0xff]
  %v36 = vld [vmem:[%s0 + $0xb0] sm:$0xff]
  %v37 = vld [vmem:[%s0 + $0xb8] sm:$0xff]
  %v38 = vld [vmem:[%s0 + $0xc0] sm:$0xff]
  %v39 = vld [vmem:[%s0 + $0xc8] sm:$0xff]
  %v40 = vld [vmem:[%s0 + $0xd0] sm:$0xff]
  %v41 = vld [vmem:[%s0 + $0xd8] sm:$0xff]
  %v42 = vld [vmem:[%s0 + $0xe0] sm:$0xff]
  %v43 = vld [vmem:[%s0 + $0xe8] sm:$0xff]
  %v44 = vld [vmem:[%s0 + $0xf0] sm:$0xff]
  %v45 = vld [vmem:[%s0 + $0xf8] sm:$0xff]
  %v46 = vld [vmem:[%s0 + $0x100] sm:$0xff]
  %v47 = vld [vmem:[%s0 + $0x108] sm:$0xff]
  %v48 = vld [vmem:[%s0 + $0x110] sm:$0xff]
  %v49 = vld [vmem:[%s0 + $0x118] sm:$0xff]
  %v50 = vld [vmem:[%s0 + $0x120] sm:$0xff]
  %v51 = vld [vmem:[%s0 + $0x128] sm:$0xff]
  %v52 = vld [vmem:[%s0 + $0x130] sm:$0xff]
  %v53 = vld [vmem:[%s0 + $0x138] sm:$0xff]
  %v54 = vld [vmem:[%s0 + $0x140] sm:$0xff]
  %v55 = vld [vmem:[%s0 + $0x148] sm:$0xff]
  %v56 = vld [vmem:[%s0 + $0x150] sm:$0xff]
  %v57 = vld [vmem:[%s0 + $0x158] sm:$0xff]
  %v58 = vld [vmem:[%s0 + $0x160] sm:$0xff]
  %v59 = vld [vmem:[%s0 + $0x168] sm:$0xff]
  %v60 = vld [vmem:[%s0 + $0x170] sm:$0xff]
  %v61 = vld [vmem:[%s0 + $0x178] sm:$0xff]
  %v62 = vld [vmem:[%s0 + $0x180] sm:$0xff]
  %v63 = vld [vmem:[%s0 + $0x188] sm:$0xff]
  %v64 = vld [vmem:[%s0 + $0x190] sm:$0xff]
  %v65 = vld [vmem:[%s0 + $0x198] sm:$0xff]
  %v66 = vld [vmem:[%s0 + $0x1a0] sm:$0xff]
  %v67 = vld [vmem:[%s0 + $0x1a8] sm:$0xff]
  %v68 = vld [vmem:[%s0 + $0x1b0] sm:$0xff]
  %v69 = vld [vmem:[%s0 + $0x1b8] sm:$0xff]
  %v70 = vld [vmem:[%s0 + $0x1c0] sm:$0xff]
  %v71 = vld [vmem:[%s0 + $0x1c8] sm:$0xff]
  %v72 = vld [vmem:[%s0 + $0x1d0] sm:$0xff]
  %v73 = vld [vmem:[%s0 + $0x1d8] sm:$0xff]
  %v74 = vld [vmem:[%s0 + $0x1e0] sm:$0xff]
  %v75 = vld [vmem:[%s0 + $0x1e8] sm:$0xff]
  %v76 = vld [vmem:[%s0 + $0x1f0] sm:$0xff]
  %v77 = vld [vmem:[%s0 + $0x1f8] sm:$0xff]
  %v78 = vld [vmem:[%s0 + $0x200] sm:$0xff]
  %v79 = vld [vmem:[%s0 + $0x208] sm:$0xff]
  %v80 = vld [vmem:[%s0 + $0x210] sm:$0xff]
  %v81 = vld [vmem:[%s0 + $0x218] sm:$0xff]
  %v82 = vld [vmem:[%s0 + $0x220] sm:$0xff]
  %v83 = vld [vmem:[%s0 + $0x228] sm:$0xff]
  %v84 = vld [vmem:[%s0 + $0x230] sm:$0xff]
  %v85 = vld [vmem:[%s0 + $0x238] sm:$0xff]
  %v86 = vld [vmem:[%s0 + $0x240] sm:$0xff]
  %v87 = vld [vmem:[%s0 + $0x248] sm:$0xff]
  %v88 = vld [vmem:[%s0 + $0x250] sm:$0xff]
  %v89 = vld [vmem:[%s0 + $0x258] sm:$0xff]
  %v90 = vld [vmem:[%s0 + $0x260] sm:$0xff]
  %v91 = vld [vmem:[%s0 + $0x268] sm:$0xff]
  %v92 = vld [vmem:[%s0 + $0x270] sm:$0xff]
  %v93 = vld [vmem:[%s0 + $0x278] sm:$0xff]
  %v94 = vld [vmem:[%s0 + $0x280] sm:$0xff]
  %v95 = vld [vmem:[%s1] sm:$0xff]
  %v96 = vld [vmem:[%s1 + $0x8] sm:$0xff]
  %v97 = vld [vmem:[%s1 + $0x10] sm:$0xff]
  %v98 = vld [vmem:[%s1 + $0x18] sm:$0xff]
  %v99 = vld [vmem:[%s1 + $0x20] sm:$0xff]
  %v100 = vld [vmem:[%s1 + $0x28] sm:$0xff]
  %v101 = vld [vmem:[%s1 + $0x30] sm:$0xff]
  %v102 = vld [vmem:[%s1 + $0x38] sm:$0xff]
  %v103 = vld [vmem:[%s1 + $0x40] sm:$0xff]
  %v104 = vld [vmem:[%s1 + $0x48] sm:$0xff]
  %v105 = vld [vmem:[%s1 + $0x50] sm:$0xff]
  %v106 = vld [vmem:[%s1 + $0x58] sm:$0xff]
  %v107 = vld [vmem:[%s1 + $0x60] sm:$0xff]
  %v108 = vld [vmem:[%s1 + $0x68] sm:$0xff]
  %v109 = vld [vmem:[%s1 + $0x70] sm:$0xff]
  %v110 = vld [vmem:[%s1 + $0x78] sm:$0xff]
  %v111 = vld [vmem:[%s2] sm:$0x1]
  %v113 = vlaneseq
  %v114 = vshrl.u32 %v113, 7
  %v115 = vsub.s32 0, %v114
  %v116 = vrot.slane %v111, %v115
  %118 = vmatprep.subr.mxu0 0.0
  %119 = vmatpush1.msra.mxu0 %v95
  %120 = vmatprep.subr.mxu0 0.0
  %121 = vmatpush1.msra.mxu0 %v96
  %122 = vmatprep.subr.mxu0 0.0
  %123 = vmatpush1.msra.mxu0 %v97
  %124 = vmatprep.subr.mxu0 0.0
  %125 = vmatpush1.msra.mxu0 %v98
  %126 = vmatprep.subr.mxu0 0.0
  %127 = vmatpush1.msra.mxu0 %v99
  %128 = vmatprep.subr.mxu0 0.0
  %129 = vmatpush1.msra.mxu0 %v100
  %130 = vmatprep.subr.mxu0 0.0
  %131 = vmatpush1.msra.mxu0 %v101
  %132 = vmatprep.subr.mxu0 0.0
  %133 = vmatpush1.msra.mxu0 %v102
  %134 = vmatprep.subr.mxu0 0.0
  %135 = vmatpush1.msra.mxu0 %v103
  %136 = vmatprep.subr.mxu0 0.0
  %137 = vmatpush1.msra.mxu0 %v104
  %138 = vmatprep.subr.mxu0 0.0
  %139 = vmatpush1.msra.mxu0 %v105
  %140 = vmatprep.subr.mxu0 0.0
  %141 = vmatpush1.msra.mxu0 %v106
  %142 = vmatprep.subr.mxu0 0.0
  %143 = vmatpush1.msra.mxu0 %v107
  %144 = vmatprep.subr.mxu0 0.0
  %145 = vmatpush1.msra.mxu0 %v108
  %146 = vmatprep.subr.mxu0 0.0
  %147 = vmatpush1.msra.mxu0 %v109
  %148 = vmatprep.subr.mxu0 0.0
  %149 = vmatpush1.msra.mxu0 %v110
  %150 = vmatprep.subr.mxu0 0.0
  %151 = vmatpush1.msra.mxu0 0.0
  %152 = vmatprep.subr.mxu0 0.0
  %153 = vmatpush1.msra.mxu0 0.0
  %154 = vmatprep.subr.mxu0 0.0
  %155 = vmatpush1.msra.mxu0 0.0
  %156 = vmatprep.subr.mxu0 0.0
  %157 = vmatpush1.msra.mxu0 0.0
  %158 = vmatprep.subr.mxu0 0.0
  %159 = vmatpush1.msra.mxu0 0.0
  %160 = vmatprep.subr.mxu0 0.0
  %161 = vmatpush1.msra.mxu0 0.0
  %162 = vmatprep.subr.mxu0 0.0
  %163 = vmatpush1.msra.mxu0 0.0
  %164 = vmatprep.subr.mxu0 0.0
  %165 = vmatpush1.msra.mxu0 0.0
  %166 = vmatprep.subr.mxu0 0.0
  %167 = vmatpush1.msra.mxu0 0.0
  %168 = vmatprep.subr.mxu0 0.0
  %169 = vmatpush1.msra.mxu0 0.0
  %170 = vmatprep.subr.mxu0 0.0
  %171 = vmatpush1.msra.mxu0 0.0
  %172 = vmatprep.subr.mxu0 0.0
  %173 = vmatpush1.msra.mxu0 0.0
  %174 = vmatprep.subr.mxu0 0.0
  %175 = vmatpush1.msra.mxu0 0.0
  %176 = vmatprep.subr.mxu0 0.0
  %177 = vmatpush1.msra.mxu0 0.0
  %178 = vmatprep.subr.mxu0 0.0
  %179 = vmatpush1.msra.mxu0 0.0
  %180 = vmatprep.subr.mxu0 0.0
  %181 = vmatpush1.msra.mxu0 0.0
  %182 = vmatprep.mubr.f32.mxu0 0.0
  %183 = vmatmul.mubr.f32.gmra.mrb[0].mxu0 %v14
  %v184 = vpop.f32.mrb[0].mxu0
  %v185 = vadd.f32 %v116, %v184
  %v186 = vpop.f32.mrb[0].mxu0
  %187 = vmatprep.mubr.f32.mxu0 0.0
  %188 = vmatmul.mubr.f32.gmra.mrb[0].mxu0 %v15
  %v189 = vpop.f32.mrb[0].mxu0
  %v190 = vadd.f32 %v116, %v189
  %v191 = vpop.f32.mrb[0].mxu0
  %192 = vmatprep.mubr.f32.mxu0 0.0
  %193 = vmatmul.mubr.f32.gmra.mrb[0].mxu0 %v16
  %v194 = vpop.f32.mrb[0].mxu0
  %v195 = vadd.f32 %v116, %v194
  %v196 = vpop.f32.mrb[0].mxu0
  %197 = vmatprep.mubr.f32.mxu0 0.0
  %198 = vmatmul.mubr.f32.gmra.mrb[0].mxu0 %v17
  %v199 = vpop.f32.mrb[0].mxu0
  %v200 = vadd.f32 %v116, %v199
  %v201 = vpop.f32.mrb[0].mxu0
  %202 = vmatprep.mubr.f32.mxu0 0.0
  %203 = vmatmul.mubr.f32.gmra.mrb[0].mxu0 %v18
  %v204 = vpop.f32.mrb[0].mxu0
  %v205 = vadd.f32 %v116, %v204
  %v206 = vpop.f32.mrb[0].mxu0
  %207 = vmatprep.mubr.f32.mxu0 0.0
  %208 = vmatmul.mubr.f32.gmra.mrb[0].mxu0 %v19
  %v209 = vpop.f32.mrb[0].mxu0
  %v210 = vadd.f32 %v116, %v209
  %v211 = vpop.f32.mrb[0].mxu0
  %212 = vmatprep.mubr.f32.mxu0 0.0
  %213 = vmatmul.mubr.f32.gmra.mrb[0].mxu0 %v20
  %v214 = vpop.f32.mrb[0].mxu0
  %v215 = vadd.f32 %v116, %v214
  %v216 = vpop.f32.mrb[0].mxu0
  %217 = vmatprep.mubr.f32.mxu0 0.0
  %218 = vmatmul.mubr.f32.gmra.mrb[0].mxu0 %v21
  %v219 = vpop.f32.mrb[0].mxu0
  %v220 = vadd.f32 %v116, %v219
  %v221 = vpop.f32.mrb[0].mxu0
  %222 = vmatprep.mubr.f32.mxu0 0.0
  %223 = vmatmul.mubr.f32.gmra.mrb[0].mxu0 %v22
  %v224 = vpop.f32.mrb[0].mxu0
  %v225 = vadd.f32 %v116, %v224
  %v226 = vpop.f32.mrb[0].mxu0
  %227 = vmatprep.mubr.f32.mxu0 0.0
  %228 = vmatmul.mubr.f32.gmra.mrb[0].mxu0 %v23
  %v229 = vpop.f32.mrb[0].mxu0
  %v230 = vadd.f32 %v116, %v229
  %v231 = vpop.f32.mrb[0].mxu0
  %232 = vmatprep.mubr.f32.mxu0 0.0
  %233 = vmatmul.mubr.f32.gmra.mrb[0].mxu0 %v24
  %v234 = vpop.f32.mrb[0].mxu0
  %v235 = vadd.f32 %v116, %v234
  %v236 = vpop.f32.mrb[0].mxu0
  %237 = vmatprep.mubr.f32.mxu0 0.0
  %238 = vmatmul.mubr.f32.gmra.mrb[0].mxu0 %v25
  %v239 = vpop.f32.mrb[0].mxu0
  %v240 = vadd.f32 %v116, %v239
  %v241 = vpop.f32.mrb[0].mxu0
  %242 = vmatprep.mubr.f32.mxu0 0.0
  %243 = vmatmul.mubr.f32.gmra.mrb[0].mxu0 %v26
  %v244 = vpop.f32.mrb[0].mxu0
  %v245 = vadd.f32 %v116, %v244
  %v246 = vpop.f32.mrb[0].mxu0
  %247 = vmatprep.mubr.f32.mxu0 0.0
  %248 = vmatmul.mubr.f32.gmra.mrb[0].mxu0 %v27
  %v249 = vpop.f32.mrb[0].mxu0
  %v250 = vadd.f32 %v116, %v249
  %v251 = vpop.f32.mrb[0].mxu0
  %252 = vmatprep.mubr.f32.mxu0 0.0
  %253 = vmatmul.mubr.f32.gmra.mrb[0].mxu0 %v28
  %v254 = vpop.f32.mrb[0].mxu0
  %v255 = vadd.f32 %v116, %v254
  %v256 = vpop.f32.mrb[0].mxu0
  %257 = vmatprep.mubr.f32.mxu0 0.0
  %258 = vmatmul.mubr.f32.gmra.mrb[0].mxu0 %v29
  %v259 = vpop.f32.mrb[0].mxu0
  %v260 = vadd.f32 %v116, %v259
  %v261 = vpop.f32.mrb[0].mxu0
  %262 = vmatprep.mubr.f32.mxu0 0.0
  %263 = vmatmul.mubr.f32.gmra.mrb[0].mxu0 %v30
  %v264 = vpop.f32.mrb[0].mxu0
  %v265 = vadd.f32 %v116, %v264
  %v266 = vpop.f32.mrb[0].mxu0
  %267 = vmatprep.mubr.f32.mxu0 0.0
  %268 = vmatmul.mubr.f32.gmra.mrb[0].mxu0 %v31
  %v269 = vpop.f32.mrb[0].mxu0
  %v270 = vadd.f32 %v116, %v269
  %v271 = vpop.f32.mrb[0].mxu0
  %272 = vmatprep.mubr.f32.mxu0 0.0
  %273 = vmatmul.mubr.f32.gmra.mrb[0].mxu0 %v32
  %v274 = vpop.f32.mrb[0].mxu0
  %v275 = vadd.f32 %v116, %v274
  %v276 = vpop.f32.mrb[0].mxu0
  %277 = vmatprep.mubr.f32.mxu0 0.0
  %278 = vmatmul.mubr.f32.gmra.mrb[0].mxu0 %v33
  %v279 = vpop.f32.mrb[0].mxu0
  %v280 = vadd.f32 %v116, %v279
  %v281 = vpop.f32.mrb[0].mxu0
  %282 = vmatprep.mubr.f32.mxu0 0.0
  %283 = vmatmul.mubr.f32.gmra.mrb[0].mxu0 %v34
  %v284 = vpop.f32.mrb[0].mxu0
  %v285 = vadd.f32 %v116, %v284
  %v286 = vpop.f32.mrb[0].mxu0
  %287 = vmatprep.mubr.f32.mxu0 0.0
  %288 = vmatmul.mubr.f32.gmra.mrb[0].mxu0 %v35
  %v289 = vpop.f32.mrb[0].mxu0
  %v290 = vadd.f32 %v116, %v289
  %v291 = vpop.f32.mrb[0].mxu0
  %292 = vmatprep.mubr.f32.mxu0 0.0
  %293 = vmatmul.mubr.f32.gmra.mrb[0].mxu0 %v36
  %v294 = vpop.f32.mrb[0].mxu0
  %v295 = vadd.f32 %v116, %v294
  %v296 = vpop.f32.mrb[0].mxu0
  %297 = vmatprep.mubr.f32.mxu0 0.0
  %298 = vmatmul.mubr.f32.gmra.mrb[0].mxu0 %v37
  %v299 = vpop.f32.mrb[0].mxu0
  %v300 = vadd.f32 %v116, %v299
  %v301 = vpop.f32.mrb[0].mxu0
  %302 = vmatprep.mubr.f32.mxu0 0.0
  %303 = vmatmul.mubr.f32.gmra.mrb[0].mxu0 %v38
  %v304 = vpop.f32.mrb[0].mxu0
  %v305 = vadd.f32 %v116, %v304
  %v306 = vpop.f32.mrb[0].mxu0
  %307 = vmatprep.mubr.f32.mxu0 0.0
  %308 = vmatmul.mubr.f32.gmra.mrb[0].mxu0 %v39
  %v309 = vpop.f32.mrb[0].mxu0
  %v310 = vadd.f32 %v116, %v309
  %v311 = vpop.f32.mrb[0].mxu0
  %312 = vmatprep.mubr.f32.mxu0 0.0
  %313 = vmatmul.mubr.f32.gmra.mrb[0].mxu0 %v40
  %v314 = vpop.f32.mrb[0].mxu0
  %v315 = vadd.f32 %v116, %v314
  %v316 = vpop.f32.mrb[0].mxu0
  %317 = vmatprep.mubr.f32.mxu0 0.0
  %318 = vmatmul.mubr.f32.gmra.mrb[0].mxu0 %v41
  %v319 = vpop.f32.mrb[0].mxu0
  %v320 = vadd.f32 %v116, %v319
  %v321 = vpop.f32.mrb[0].mxu0
  %322 = vmatprep.mubr.f32.mxu0 0.0
  %323 = vmatmul.mubr.f32.gmra.mrb[0].mxu0 %v42
  %v324 = vpop.f32.mrb[0].mxu0
  %v325 = vadd.f32 %v116, %v324
  %v326 = vpop.f32.mrb[0].mxu0
  %327 = vmatprep.mubr.f32.mxu0 0.0
  %328 = vmatmul.mubr.f32.gmra.mrb[0].mxu0 %v43
  %v329 = vpop.f32.mrb[0].mxu0
  %v330 = vadd.f32 %v116, %v329
  %v331 = vpop.f32.mrb[0].mxu0
  %332 = vmatprep.mubr.f32.mxu0 0.0
  %333 = vmatmul.mubr.f32.gmra.mrb[0].mxu0 %v44
  %v334 = vpop.f32.mrb[0].mxu0
  %v335 = vadd.f32 %v116, %v334
  %v336 = vpop.f32.mrb[0].mxu0
  %337 = vmatprep.mubr.f32.mxu0 0.0
  %338 = vmatmul.mubr.f32.gmra.mrb[0].mxu0 %v45
  %v339 = vpop.f32.mrb[0].mxu0
  %v340 = vadd.f32 %v116, %v339
  %v341 = vpop.f32.mrb[0].mxu0
  %342 = vmatprep.mubr.f32.mxu0 0.0
  %343 = vmatmul.mubr.f32.gmra.mrb[0].mxu0 %v46
  %v344 = vpop.f32.mrb[0].mxu0
  %v345 = vadd.f32 %v116, %v344
  %v346 = vpop.f32.mrb[0].mxu0
  %347 = vmatprep.mubr.f32.mxu0 0.0
  %348 = vmatmul.mubr.f32.gmra.mrb[0].mxu0 %v47
  %v349 = vpop.f32.mrb[0].mxu0
  %v350 = vadd.f32 %v116, %v349
  %v351 = vpop.f32.mrb[0].mxu0
  %352 = vmatprep.mubr.f32.mxu0 0.0
  %353 = vmatmul.mubr.f32.gmra.mrb[0].mxu0 %v48
  %v354 = vpop.f32.mrb[0].mxu0
  %v355 = vadd.f32 %v116, %v354
  %v356 = vpop.f32.mrb[0].mxu0
  %357 = vmatprep.mubr.f32.mxu0 0.0
  %358 = vmatmul.mubr.f32.gmra.mrb[0].mxu0 %v49
  %v359 = vpop.f32.mrb[0].mxu0
  %v360 = vadd.f32 %v116, %v359
  %v361 = vpop.f32.mrb[0].mxu0
  %362 = vmatprep.mubr.f32.mxu0 0.0
  %363 = vmatmul.mubr.f32.gmra.mrb[0].mxu0 %v50
  %v364 = vpop.f32.mrb[0].mxu0
  %v365 = vadd.f32 %v116, %v364
  %v366 = vpop.f32.mrb[0].mxu0
  %367 = vmatprep.mubr.f32.mxu0 0.0
  %368 = vmatmul.mubr.f32.gmra.mrb[0].mxu0 %v51
  %v369 = vpop.f32.mrb[0].mxu0
  %v370 = vadd.f32 %v116, %v369
  %v371 = vpop.f32.mrb[0].mxu0
  %372 = vmatprep.mubr.f32.mxu0 0.0
  %373 = vmatmul.mubr.f32.gmra.mrb[0].mxu0 %v52
  %v374 = vpop.f32.mrb[0].mxu0
  %v375 = vadd.f32 %v116, %v374
  %v376 = vpop.f32.mrb[0].mxu0
  %377 = vmatprep.mubr.f32.mxu0 0.0
  %378 = vmatmul.mubr.f32.gmra.mrb[0].mxu0 %v53
  %v379 = vpop.f32.mrb[0].mxu0
  %v380 = vadd.f32 %v116, %v379
  %v381 = vpop.f32.mrb[0].mxu0
  %382 = vmatprep.mubr.f32.mxu0 0.0
  %383 = vmatmul.mubr.f32.gmra.mrb[0].mxu0 %v54
  %v384 = vpop.f32.mrb[0].mxu0
  %v385 = vadd.f32 %v116, %v384
  %v386 = vpop.f32.mrb[0].mxu0
  %387 = vmatprep.mubr.f32.mxu0 0.0
  %388 = vmatmul.mubr.f32.gmra.mrb[0].mxu0 %v55
  %v389 = vpop.f32.mrb[0].mxu0
  %v390 = vadd.f32 %v116, %v389
  %v391 = vpop.f32.mrb[0].mxu0
  %392 = vmatprep.mubr.f32.mxu0 0.0
  %393 = vmatmul.mubr.f32.gmra.mrb[0].mxu0 %v56
  %v394 = vpop.f32.mrb[0].mxu0
  %v395 = vadd.f32 %v116, %v394
  %v396 = vpop.f32.mrb[0].mxu0
  %397 = vmatprep.mubr.f32.mxu0 0.0
  %398 = vmatmul.mubr.f32.gmra.mrb[0].mxu0 %v57
  %v399 = vpop.f32.mrb[0].mxu0
  %v400 = vadd.f32 %v116, %v399
  %v401 = vpop.f32.mrb[0].mxu0
  %402 = vmatprep.mubr.f32.mxu0 0.0
  %403 = vmatmul.mubr.f32.gmra.mrb[0].mxu0 %v58
  %v404 = vpop.f32.mrb[0].mxu0
  %v405 = vadd.f32 %v116, %v404
  %v406 = vpop.f32.mrb[0].mxu0
  %407 = vmatprep.mubr.f32.mxu0 0.0
  %408 = vmatmul.mubr.f32.gmra.mrb[0].mxu0 %v59
  %v409 = vpop.f32.mrb[0].mxu0
  %v410 = vadd.f32 %v116, %v409
  %v411 = vpop.f32.mrb[0].mxu0
  %412 = vmatprep.mubr.f32.mxu0 0.0
  %413 = vmatmul.mubr.f32.gmra.mrb[0].mxu0 %v60
  %v414 = vpop.f32.mrb[0].mxu0
  %v415 = vadd.f32 %v116, %v414
  %v416 = vpop.f32.mrb[0].mxu0
  %417 = vmatprep.mubr.f32.mxu0 0.0
  %418 = vmatmul.mubr.f32.gmra.mrb[0].mxu0 %v61
  %v419 = vpop.f32.mrb[0].mxu0
  %v420 = vadd.f32 %v116, %v419
  %v421 = vpop.f32.mrb[0].mxu0
  %422 = vmatprep.mubr.f32.mxu0 0.0
  %423 = vmatmul.mubr.f32.gmra.mrb[0].mxu0 %v62
  %v424 = vpop.f32.mrb[0].mxu0
  %v425 = vadd.f32 %v116, %v424
  %v426 = vpop.f32.mrb[0].mxu0
  %427 = vmatprep.mubr.f32.mxu0 0.0
  %428 = vmatmul.mubr.f32.gmra.mrb[0].mxu0 %v63
  %v429 = vpop.f32.mrb[0].mxu0
  %v430 = vadd.f32 %v116, %v429
  %v431 = vpop.f32.mrb[0].mxu0
  %432 = vmatprep.mubr.f32.mxu0 0.0
  %433 = vmatmul.mubr.f32.gmra.mrb[0].mxu0 %v64
  %v434 = vpop.f32.mrb[0].mxu0
  %v435 = vadd.f32 %v116, %v434
  %v436 = vpop.f32.mrb[0].mxu0
  %437 = vmatprep.mubr.f32.mxu0 0.0
  %438 = vmatmul.mubr.f32.gmra.mrb[0].mxu0 %v65
  %v439 = vpop.f32.mrb[0].mxu0
  %v440 = vadd.f32 %v116, %v439
  %v441 = vpop.f32.mrb[0].mxu0
  %442 = vmatprep.mubr.f32.mxu0 0.0
  %443 = vmatmul.mubr.f32.gmra.mrb[0].mxu0 %v66
  %v444 = vpop.f32.mrb[0].mxu0
  %v445 = vadd.f32 %v116, %v444
  %v446 = vpop.f32.mrb[0].mxu0
  %447 = vmatprep.mubr.f32.mxu0 0.0
  %448 = vmatmul.mubr.f32.gmra.mrb[0].mxu0 %v67
  %v449 = vpop.f32.mrb[0].mxu0
  %v450 = vadd.f32 %v116, %v449
  %v451 = vpop.f32.mrb[0].mxu0
  %452 = vmatprep.mubr.f32.mxu0 0.0
  %453 = vmatmul.mubr.f32.gmra.mrb[0].mxu0 %v68
  %v454 = vpop.f32.mrb[0].mxu0
  %v455 = vadd.f32 %v116, %v454
  %v456 = vpop.f32.mrb[0].mxu0
  %457 = vmatprep.mubr.f32.mxu0 0.0
  %458 = vmatmul.mubr.f32.gmra.mrb[0].mxu0 %v69
  %v459 = vpop.f32.mrb[0].mxu0
  %v460 = vadd.f32 %v116, %v459
  %v461 = vpop.f32.mrb[0].mxu0
  %462 = vmatprep.mubr.f32.mxu0 0.0
  %463 = vmatmul.mubr.f32.gmra.mrb[0].mxu0 %v70
  %v464 = vpop.f32.mrb[0].mxu0
  %v465 = vadd.f32 %v116, %v464
  %v466 = vpop.f32.mrb[0].mxu0
  %467 = vmatprep.mubr.f32.mxu0 0.0
  %468 = vmatmul.mubr.f32.gmra.mrb[0].mxu0 %v71
  %v469 = vpop.f32.mrb[0].mxu0
  %v470 = vadd.f32 %v116, %v469
  %v471 = vpop.f32.mrb[0].mxu0
  %472 = vmatprep.mubr.f32.mxu0 0.0
  %473 = vmatmul.mubr.f32.gmra.mrb[0].mxu0 %v72
  %v474 = vpop.f32.mrb[0].mxu0
  %v475 = vadd.f32 %v116, %v474
  %v476 = vpop.f32.mrb[0].mxu0
  %477 = vmatprep.mubr.f32.mxu0 0.0
  %478 = vmatmul.mubr.f32.gmra.mrb[0].mxu0 %v73
  %v479 = vpop.f32.mrb[0].mxu0
  %v480 = vadd.f32 %v116, %v479
  %v481 = vpop.f32.mrb[0].mxu0
  %482 = vmatprep.mubr.f32.mxu0 0.0
  %483 = vmatmul.mubr.f32.gmra.mrb[0].mxu0 %v74
  %v484 = vpop.f32.mrb[0].mxu0
  %v485 = vadd.f32 %v116, %v484
  %v486 = vpop.f32.mrb[0].mxu0
  %487 = vmatprep.mubr.f32.mxu0 0.0
  %488 = vmatmul.mubr.f32.gmra.mrb[0].mxu0 %v75
  %v489 = vpop.f32.mrb[0].mxu0
  %v490 = vadd.f32 %v116, %v489
  %v491 = vpop.f32.mrb[0].mxu0
  %492 = vmatprep.mubr.f32.mxu0 0.0
  %493 = vmatmul.mubr.f32.gmra.mrb[0].mxu0 %v76
  %v494 = vpop.f32.mrb[0].mxu0
  %v495 = vadd.f32 %v116, %v494
  %v496 = vpop.f32.mrb[0].mxu0
  %497 = vmatprep.mubr.f32.mxu0 0.0
  %498 = vmatmul.mubr.f32.gmra.mrb[0].mxu0 %v77
  %v499 = vpop.f32.mrb[0].mxu0
  %v500 = vadd.f32 %v116, %v499
  %v501 = vpop.f32.mrb[0].mxu0
  %502 = vmatprep.mubr.f32.mxu0 0.0
  %503 = vmatmul.mubr.f32.gmra.mrb[0].mxu0 %v78
  %v504 = vpop.f32.mrb[0].mxu0
  %v505 = vadd.f32 %v116, %v504
  %v506 = vpop.f32.mrb[0].mxu0
  %507 = vmatprep.mubr.f32.mxu0 0.0
  %508 = vmatmul.mubr.f32.gmra.mrb[0].mxu0 %v79
  %v509 = vpop.f32.mrb[0].mxu0
  %v510 = vadd.f32 %v116, %v509
  %v511 = vpop.f32.mrb[0].mxu0
  %512 = vmatprep.mubr.f32.mxu0 0.0
  %513 = vmatmul.mubr.f32.gmra.mrb[0].mxu0 %v80
  %v514 = vpop.f32.mrb[0].mxu0
  %v515 = vadd.f32 %v116, %v514
  %v516 = vpop.f32.mrb[0].mxu0
  %517 = vmatprep.mubr.f32.mxu0 0.0
  %518 = vmatmul.mubr.f32.gmra.mrb[0].mxu0 %v81
  %v519 = vpop.f32.mrb[0].mxu0
  %v520 = vadd.f32 %v116, %v519
  %v521 = vpop.f32.mrb[0].mxu0
  %522 = vmatprep.mubr.f32.mxu0 0.0
  %523 = vmatmul.mubr.f32.gmra.mrb[0].mxu0 %v82
  %v524 = vpop.f32.mrb[0].mxu0
  %v525 = vadd.f32 %v116, %v524
  %v526 = vpop.f32.mrb[0].mxu0
  %527 = vmatprep.mubr.f32.mxu0 0.0
  %528 = vmatmul.mubr.f32.gmra.mrb[0].mxu0 %v83
  %v529 = vpop.f32.mrb[0].mxu0
  %v530 = vadd.f32 %v116, %v529
  %v531 = vpop.f32.mrb[0].mxu0
  %532 = vmatprep.mubr.f32.mxu0 0.0
  %533 = vmatmul.mubr.f32.gmra.mrb[0].mxu0 %v84
  %v534 = vpop.f32.mrb[0].mxu0
  %v535 = vadd.f32 %v116, %v534
  %v536 = vpop.f32.mrb[0].mxu0
  %537 = vmatprep.mubr.f32.mxu0 0.0
  %538 = vmatmul.mubr.f32.gmra.mrb[0].mxu0 %v85
  %v539 = vpop.f32.mrb[0].mxu0
  %v540 = vadd.f32 %v116, %v539
  %v541 = vpop.f32.mrb[0].mxu0
  %542 = vmatprep.mubr.f32.mxu0 0.0
  %543 = vmatmul.mubr.f32.gmra.mrb[0].mxu0 %v86
  %v544 = vpop.f32.mrb[0].mxu0
  %v545 = vadd.f32 %v116, %v544
  %v546 = vpop.f32.mrb[0].mxu0
  %547 = vmatprep.mubr.f32.mxu0 0.0
  %548 = vmatmul.mubr.f32.gmra.mrb[0].mxu0 %v87
  %v549 = vpop.f32.mrb[0].mxu0
  %v550 = vadd.f32 %v116, %v549
  %v551 = vpop.f32.mrb[0].mxu0
  %552 = vmatprep.mubr.f32.mxu0 0.0
  %553 = vmatmul.mubr.f32.gmra.mrb[0].mxu0 %v88
  %v554 = vpop.f32.mrb[0].mxu0
  %v555 = vadd.f32 %v116, %v554
  %v556 = vpop.f32.mrb[0].mxu0
  %557 = vmatprep.mubr.f32.mxu0 0.0
  %558 = vmatmul.mubr.f32.gmra.mrb[0].mxu0 %v89
  %v559 = vpop.f32.mrb[0].mxu0
  %v560 = vadd.f32 %v116, %v559
  %v561 = vpop.f32.mrb[0].mxu0
  %562 = vmatprep.mubr.f32.mxu0 0.0
  %563 = vmatmul.mubr.f32.gmra.mrb[0].mxu0 %v90
  %v564 = vpop.f32.mrb[0].mxu0
  %v565 = vadd.f32 %v116, %v564
  %v566 = vpop.f32.mrb[0].mxu0
  %567 = vmatprep.mubr.f32.mxu0 0.0
  %568 = vmatmul.mubr.f32.gmra.mrb[0].mxu0 %v91
  %v569 = vpop.f32.mrb[0].mxu0
  %v570 = vadd.f32 %v116, %v569
  %v571 = vpop.f32.mrb[0].mxu0
  %572 = vmatprep.mubr.f32.mxu0 0.0
  %573 = vmatmul.mubr.f32.gmra.mrb[0].mxu0 %v92
  %v574 = vpop.f32.mrb[0].mxu0
  %v575 = vadd.f32 %v116, %v574
  %v576 = vpop.f32.mrb[0].mxu0
  %577 = vmatprep.mubr.f32.mxu0 0.0
  %578 = vmatmul.mubr.f32.gmra.mrb[0].mxu0 %v93
  %v579 = vpop.f32.mrb[0].mxu0
  %v580 = vadd.f32 %v116, %v579
  %v581 = vpop.f32.mrb[0].mxu0
  %582 = vmatprep.mubr.f32.mxu0 0.0
  %583 = vmatmul.mubr.f32.gmra.mrb[0].mxu0 %v94
  %v584 = vpop.f32.mrb[0].mxu0
  %v585 = vadd.f32 %v116, %v584
  %v586 = vpop.f32.mrb[0].mxu0
  %587 = vdwg.mxu0
  %v588 = vmax.f32 %v185, 0.0
  %v589 = vmax.f32 %v190, 0.0
  %v590 = vmax.f32 %v195, 0.0
  %v591 = vmax.f32 %v200, 0.0
  %v592 = vmax.f32 %v205, 0.0
  %v593 = vmax.f32 %v210, 0.0
  %v594 = vmax.f32 %v215, 0.0
  %v595 = vmax.f32 %v220, 0.0
  %v596 = vmax.f32 %v225, 0.0
  %v597 = vmax.f32 %v230, 0.0
  %v598 = vmax.f32 %v235, 0.0
  %v599 = vmax.f32 %v240, 0.0
  %v600 = vmax.f32 %v245, 0.0
  %v601 = vmax.f32 %v250, 0.0
  %v602 = vmax.f32 %v255, 0.0
  %v603 = vmax.f32 %v260, 0.0
  %v604 = vmax.f32 %v265, 0.0
  %v605 = vmax.f32 %v270, 0.0
  %v606 = vmax.f32 %v275, 0.0
  %v607 = vmax.f32 %v280, 0.0
  %v608 = vmax.f32 %v285, 0.0
  %v609 = vmax.f32 %v290, 0.0
  %v610 = vmax.f32 %v295, 0.0
  %v611 = vmax.f32 %v300, 0.0
  %v612 = vmax.f32 %v305, 0.0
  %v613 = vmax.f32 %v310, 0.0
  %v614 = vmax.f32 %v315, 0.0
  %v615 = vmax.f32 %v320, 0.0
  %v616 = vmax.f32 %v325, 0.0
  %v617 = vmax.f32 %v330, 0.0
  %v618 = vmax.f32 %v335, 0.0
  %v619 = vmax.f32 %v340, 0.0
  %v620 = vmax.f32 %v345, 0.0
  %v621 = vmax.f32 %v350, 0.0
  %v622 = vmax.f32 %v355, 0.0
  %v623 = vmax.f32 %v360, 0.0
  %v624 = vmax.f32 %v365, 0.0
  %v625 = vmax.f32 %v370, 0.0
  %v626 = vmax.f32 %v375, 0.0
  %v627 = vmax.f32 %v380, 0.0
  %v628 = vmax.f32 %v385, 0.0
  %v629 = vmax.f32 %v390, 0.0
  %v630 = vmax.f32 %v395, 0.0
  %v631 = vmax.f32 %v400, 0.0
  %v632 = vmax.f32 %v405, 0.0
  %v633 = vmax.f32 %v410, 0.0
  %v634 = vmax.f32 %v415, 0.0
  %v635 = vmax.f32 %v420, 0.0
  %v636 = vmax.f32 %v425, 0.0
  %v637 = vmax.f32 %v430, 0.0
  %v638 = vmax.f32 %v435, 0.0
  %v639 = vmax.f32 %v440, 0.0
  %v640 = vmax.f32 %v445, 0.0
  %v641 = vmax.f32 %v450, 0.0
  %v642 = vmax.f32 %v455, 0.0
  %v643 = vmax.f32 %v460, 0.0
  %v644 = vmax.f32 %v465, 0.0
  %v645 = vmax.f32 %v470, 0.0
  %v646 = vmax.f32 %v475, 0.0
  %v647 = vmax.f32 %v480, 0.0
  %v648 = vmax.f32 %v485, 0.0
  %v649 = vmax.f32 %v490, 0.0
  %v650 = vmax.f32 %v495, 0.0
  %v651 = vmax.f32 %v500, 0.0
  %v652 = vmax.f32 %v505, 0.0
  %v653 = vmax.f32 %v510, 0.0
  %v654 = vmax.f32 %v515, 0.0
  %v655 = vmax.f32 %v520, 0.0
  %v656 = vmax.f32 %v525, 0.0
  %v657 = vmax.f32 %v530, 0.0
  %v658 = vmax.f32 %v535, 0.0
  %v659 = vmax.f32 %v540, 0.0
  %v660 = vmax.f32 %v545, 0.0
  %v661 = vmax.f32 %v550, 0.0
  %v662 = vmax.f32 %v555, 0.0
  %v663 = vmax.f32 %v560, 0.0
  %v664 = vmax.f32 %v565, 0.0
  %v665 = vmax.f32 %v570, 0.0
  %v666 = vmax.f32 %v575, 0.0
  %v667 = vmax.f32 %v580, 0.0
  %v668 = vmax.f32 %v585, 0.0
  %vm669 = vcmask 130048
  %670 = vst.msk [vmem:[%s3] sm:$0xff] %vm669, %v588
  %671 = vst.msk [vmem:[%s3 + $0x8] sm:$0xff] %vm669, %v589
  %672 = vst.msk [vmem:[%s3 + $0x10] sm:$0xff] %vm669, %v590
  %673 = vst.msk [vmem:[%s3 + $0x18] sm:$0xff] %vm669, %v591
  %674 = vst.msk [vmem:[%s3 + $0x20] sm:$0xff] %vm669, %v592
  %675 = vst.msk [vmem:[%s3 + $0x28] sm:$0xff] %vm669, %v593
  %676 = vst.msk [vmem:[%s3 + $0x30] sm:$0xff] %vm669, %v594
  %677 = vst.msk [vmem:[%s3 + $0x38] sm:$0xff] %vm669, %v595
  %678 = vst.msk [vmem:[%s3 + $0x40] sm:$0xff] %vm669, %v596
  %679 = vst.msk [vmem:[%s3 + $0x48] sm:$0xff] %vm669, %v597
  %680 = vst.msk [vmem:[%s3 + $0x50] sm:$0xff] %vm669, %v598
  %681 = vst.msk [vmem:[%s3 + $0x58] sm:$0xff] %vm669, %v599
  %682 = vst.msk [vmem:[%s3 + $0x60] sm:$0xff] %vm669, %v600
  %683 = vst.msk [vmem:[%s3 + $0x68] sm:$0xff] %vm669, %v601
  %684 = vst.msk [vmem:[%s3 + $0x70] sm:$0xff] %vm669, %v602
  %685 = vst.msk [vmem:[%s3 + $0x78] sm:$0xff] %vm669, %v603
  %686 = vst.msk [vmem:[%s3 + $0x80] sm:$0xff] %vm669, %v604
  %687 = vst.msk [vmem:[%s3 + $0x88] sm:$0xff] %vm669, %v605
  %688 = vst.msk [vmem:[%s3 + $0x90] sm:$0xff] %vm669, %v606
  %689 = vst.msk [vmem:[%s3 + $0x98] sm:$0xff] %vm669, %v607
  %690 = vst.msk [vmem:[%s3 + $0xa0] sm:$0xff] %vm669, %v608
  %691 = vst.msk [vmem:[%s3 + $0xa8] sm:$0xff] %vm669, %v609
  %692 = vst.msk [vmem:[%s3 + $0xb0] sm:$0xff] %vm669, %v610
  %693 = vst.msk [vmem:[%s3 + $0xb8] sm:$0xff] %vm669, %v611
  %694 = vst.msk [vmem:[%s3 + $0xc0] sm:$0xff] %vm669, %v612
  %695 = vst.msk [vmem:[%s3 + $0xc8] sm:$0xff] %vm669, %v613
  %696 = vst.msk [vmem:[%s3 + $0xd0] sm:$0xff] %vm669, %v614
  %697 = vst.msk [vmem:[%s3 + $0xd8] sm:$0xff] %vm669, %v615
  %698 = vst.msk [vmem:[%s3 + $0xe0] sm:$0xff] %vm669, %v616
  %699 = vst.msk [vmem:[%s3 + $0xe8] sm:$0xff] %vm669, %v617
  %700 = vst.msk [vmem:[%s3 + $0xf0] sm:$0xff] %vm669, %v618
  %701 = vst.msk [vmem:[%s3 + $0xf8] sm:$0xff] %vm669, %v619
  %702 = vst.msk [vmem:[%s3 + $0x100] sm:$0xff] %vm669, %v620
  %703 = vst.msk [vmem:[%s3 + $0x108] sm:$0xff] %vm669, %v621
  %704 = vst.msk [vmem:[%s3 + $0x110] sm:$0xff] %vm669, %v622
  %705 = vst.msk [vmem:[%s3 + $0x118] sm:$0xff] %vm669, %v623
  %706 = vst.msk [vmem:[%s3 + $0x120] sm:$0xff] %vm669, %v624
  %707 = vst.msk [vmem:[%s3 + $0x128] sm:$0xff] %vm669, %v625
  %708 = vst.msk [vmem:[%s3 + $0x130] sm:$0xff] %vm669, %v626
  %709 = vst.msk [vmem:[%s3 + $0x138] sm:$0xff] %vm669, %v627
  %710 = vst.msk [vmem:[%s3 + $0x140] sm:$0xff] %vm669, %v628
  %711 = vst.msk [vmem:[%s3 + $0x148] sm:$0xff] %vm669, %v629
  %712 = vst.msk [vmem:[%s3 + $0x150] sm:$0xff] %vm669, %v630
  %713 = vst.msk [vmem:[%s3 + $0x158] sm:$0xff] %vm669, %v631
  %714 = vst.msk [vmem:[%s3 + $0x160] sm:$0xff] %vm669, %v632
  %715 = vst.msk [vmem:[%s3 + $0x168] sm:$0xff] %vm669, %v633
  %716 = vst.msk [vmem:[%s3 + $0x170] sm:$0xff] %vm669, %v634
  %717 = vst.msk [vmem:[%s3 + $0x178] sm:$0xff] %vm669, %v635
  %718 = vst.msk [vmem:[%s3 + $0x180] sm:$0xff] %vm669, %v636
  %719 = vst.msk [vmem:[%s3 + $0x188] sm:$0xff] %vm669, %v637
  %720 = vst.msk [vmem:[%s3 + $0x190] sm:$0xff] %vm669, %v638
  %721 = vst.msk [vmem:[%s3 + $0x198] sm:$0xff] %vm669, %v639
  %722 = vst.msk [vmem:[%s3 + $0x1a0] sm:$0xff] %vm669, %v640
  %723 = vst.msk [vmem:[%s3 + $0x1a8] sm:$0xff] %vm669, %v641
  %724 = vst.msk [vmem:[%s3 + $0x1b0] sm:$0xff] %vm669, %v642
  %725 = vst.msk [vmem:[%s3 + $0x1b8] sm:$0xff] %vm669, %v643
  %726 = vst.msk [vmem:[%s3 + $0x1c0] sm:$0xff] %vm669, %v644
  %727 = vst.msk [vmem:[%s3 + $0x1c8] sm:$0xff] %vm669, %v645
  %728 = vst.msk [vmem:[%s3 + $0x1d0] sm:$0xff] %vm669, %v646
  %729 = vst.msk [vmem:[%s3 + $0x1d8] sm:$0xff] %vm669, %v647
  %730 = vst.msk [vmem:[%s3 + $0x1e0] sm:$0xff] %vm669, %v648
  %731 = vst.msk [vmem:[%s3 + $0x1e8] sm:$0xff] %vm669, %v649
  %732 = vst.msk [vmem:[%s3 + $0x1f0] sm:$0xff] %vm669, %v650
  %733 = vst.msk [vmem:[%s3 + $0x1f8] sm:$0xff] %vm669, %v651
  %734 = vst.msk [vmem:[%s3 + $0x200] sm:$0xff] %vm669, %v652
  %735 = vst.msk [vmem:[%s3 + $0x208] sm:$0xff] %vm669, %v653
  %736 = vst.msk [vmem:[%s3 + $0x210] sm:$0xff] %vm669, %v654
  %737 = vst.msk [vmem:[%s3 + $0x218] sm:$0xff] %vm669, %v655
  %738 = vst.msk [vmem:[%s3 + $0x220] sm:$0xff] %vm669, %v656
  %739 = vst.msk [vmem:[%s3 + $0x228] sm:$0xff] %vm669, %v657
  %740 = vst.msk [vmem:[%s3 + $0x230] sm:$0xff] %vm669, %v658
  %741 = vst.msk [vmem:[%s3 + $0x238] sm:$0xff] %vm669, %v659
  %742 = vst.msk [vmem:[%s3 + $0x240] sm:$0xff] %vm669, %v660
  %743 = vst.msk [vmem:[%s3 + $0x248] sm:$0xff] %vm669, %v661
  %744 = vst.msk [vmem:[%s3 + $0x250] sm:$0xff] %vm669, %v662
  %745 = vst.msk [vmem:[%s3 + $0x258] sm:$0xff] %vm669, %v663
  %746 = vst.msk [vmem:[%s3 + $0x260] sm:$0xff] %vm669, %v664
  %747 = vst.msk [vmem:[%s3 + $0x268] sm:$0xff] %vm669, %v665
  %748 = vst.msk [vmem:[%s3 + $0x270] sm:$0xff] %vm669, %v666
  %749 = vst.msk [vmem:[%s3 + $0x278] sm:$0xff] %vm669, %v667
  %750 = vst.msk [vmem:[%s3 + $0x280] sm:$0xff] %vm669, %v668
  // Predicated region
  $region14: #{dqn_forward.3} parent=0 // pred_check
    _
  $region15: #{dqn_forward.3} parent=0 // pred_check_branch
    %752 = sbr.rel (0) target = $region17
  $region16: #{dqn_forward.3} parent=0 // pred_region
    _
  $region17: #{dqn_forward.3} parent=0 // pred_fallthru
    _
  // Predicated region
  $region18: #{dqn_forward.3} parent=0 // pred_check
    _
  $region19: #{dqn_forward.3} parent=0 // pred_check_branch
    %754 = sbr.rel (0) target = $region21
  $region20: #{dqn_forward.3} parent=0 // pred_region
    _
  $region21: #{dqn_forward.3} parent=0 // pred_fallthru
    _

// kernel: dqn_forward.4
$region0: #{dqn_forward.4}
  #allocation0 [shape = 'u32[]', space=smem, size = 0x4, offset = 0x4, fixed_abs, tag = 'smem constant byte address 0x4 - core index']
  #allocation1 [shape = 'u32[144,128]{1,0:T(1,128)}', space=vmem, size = 0x12000, scoped, tag = 'internal scratch']
  %s0 = inlined_call_operand.vmem [shape: f32[98,512], index: 0, kind: input, shape index: {}]
  %s1 = inlined_call_operand.vmem [shape: f32[512,32], index: 1, kind: input, shape index: {}]
  %s2 = inlined_call_operand.vmem [shape: f32[1,32], index: 2, kind: input, shape index: {}]
  %s3 = inlined_call_operand.vmem [shape: f32[98,32], index: 3, kind: output, shape index: {}]
  %s4 = sld [smem:[#allocation0]]
  $region22: #{dqn_forward.4} parent=0
    _
  %s6 = ssub.s32 1, %s4
  %s7 = scalar_select 0, %s6, %s4
  // Predicated region
  $region2: #{dqn_forward.4} parent=0 // pred_check
    _
  $region3: #{dqn_forward.4} parent=0 // pred_check_branch
    %9 = sbr.rel (0) target = $region5
  $region4: #{dqn_forward.4} parent=0 // pred_region
    _
  $region5: #{dqn_forward.4} parent=0 // pred_fallthru
    _
  // Predicated region
  $region6: #{dqn_forward.4} parent=0 // pred_check
    _
  $region7: #{dqn_forward.4} parent=0 // pred_check_branch
    %11 = sbr.rel (0) target = $region9
  $region8: #{dqn_forward.4} parent=0 // pred_region
    _
  $region9: #{dqn_forward.4} parent=0 // pred_fallthru
    _
  // Predicated region
  $region10: #{dqn_forward.4} parent=0 // pred_check
    _
  $region11: #{dqn_forward.4} parent=0 // pred_check_branch
    %13 = sbr.rel (0) target = $region13
  $region12: #{dqn_forward.4} parent=0 // pred_region
    _
  $region13: #{dqn_forward.4} parent=0 // pred_fallthru
    _
  %v14 = vld [vmem:[%s0] sm:$0xff]
  %v15 = vld [vmem:[%s0 + $0x8] sm:$0xff]
  %v16 = vld [vmem:[%s0 + $0x10] sm:$0xff]
  %v17 = vld [vmem:[%s0 + $0x18] sm:$0xff]
  %v18 = vld [vmem:[%s0 + $0x20] sm:$0xff]
  %v19 = vld [vmem:[%s0 + $0x28] sm:$0xff]
  %v20 = vld [vmem:[%s0 + $0x30] sm:$0xff]
  %v21 = vld [vmem:[%s0 + $0x38] sm:$0xff]
  %v22 = vld [vmem:[%s0 + $0x40] sm:$0xff]
  %v23 = vld [vmem:[%s0 + $0x48] sm:$0xff]
  %v24 = vld [vmem:[%s0 + $0x50] sm:$0xff]
  %v25 = vld [vmem:[%s0 + $0x58] sm:$0xff]
  %v26 = vld [vmem:[%s0 + $0x60] sm:$0xff]
  %v27 = vld [vmem:[%s0 + $0x68] sm:$0xff]
  %v28 = vld [vmem:[%s0 + $0x70] sm:$0xff]
  %v29 = vld [vmem:[%s0 + $0x78] sm:$0xff]
  %v30 = vld [vmem:[%s0 + $0x80] sm:$0xff]
  %v31 = vld [vmem:[%s0 + $0x88] sm:$0xff]
  %v32 = vld [vmem:[%s0 + $0x90] sm:$0xff]
  %v33 = vld [vmem:[%s0 + $0x98] sm:$0xff]
  %v34 = vld [vmem:[%s0 + $0xa0] sm:$0xff]
  %v35 = vld [vmem:[%s0 + $0xa8] sm:$0xff]
  %v36 = vld [vmem:[%s0 + $0xb0] sm:$0xff]
  %v37 = vld [vmem:[%s0 + $0xb8] sm:$0xff]
  %v38 = vld [vmem:[%s0 + $0xc0] sm:$0xff]
  %v39 = vld [vmem:[%s0 + $0xc8] sm:$0xff]
  %v40 = vld [vmem:[%s0 + $0xd0] sm:$0xff]
  %v41 = vld [vmem:[%s0 + $0xd8] sm:$0xff]
  %v42 = vld [vmem:[%s0 + $0xe0] sm:$0xff]
  %v43 = vld [vmem:[%s0 + $0xe8] sm:$0xff]
  %v44 = vld [vmem:[%s0 + $0xf0] sm:$0xff]
  %v45 = vld [vmem:[%s0 + $0xf8] sm:$0xff]
  %v46 = vld [vmem:[%s0 + $0x100] sm:$0xff]
  %v47 = vld [vmem:[%s0 + $0x108] sm:$0xff]
  %v48 = vld [vmem:[%s0 + $0x110] sm:$0xff]
  %v49 = vld [vmem:[%s0 + $0x118] sm:$0xff]
  %v50 = vld [vmem:[%s0 + $0x120] sm:$0xff]
  %v51 = vld [vmem:[%s0 + $0x128] sm:$0xff]
  %v52 = vld [vmem:[%s0 + $0x130] sm:$0xff]
  %v53 = vld [vmem:[%s0 + $0x138] sm:$0xff]
  %v54 = vld [vmem:[%s0 + $0x140] sm:$0xff]
  %v55 = vld [vmem:[%s0 + $0x148] sm:$0xff]
  %v56 = vld [vmem:[%s0 + $0x150] sm:$0xff]
  %v57 = vld [vmem:[%s0 + $0x158] sm:$0xff]
  %v58 = vld [vmem:[%s0 + $0x160] sm:$0xff]
  %v59 = vld [vmem:[%s0 + $0x168] sm:$0xff]
  %v60 = vld [vmem:[%s0 + $0x170] sm:$0xff]
  %v61 = vld [vmem:[%s0 + $0x178] sm:$0xff]
  %v62 = vld [vmem:[%s0 + $0x180] sm:$0x3]
  %v63 = vld [vmem:[%s0 + $0x188] sm:$0x3]
  %v64 = vld [vmem:[%s0 + $0x190] sm:$0x3]
  %v65 = vld [vmem:[%s0 + $0x198] sm:$0x3]
  %v66 = vld [vmem:[%s1] sm:$0xff]
  %v67 = vld [vmem:[%s1 + $0x8] sm:$0xff]
  %v68 = vld [vmem:[%s1 + $0x10] sm:$0xff]
  %v69 = vld [vmem:[%s1 + $0x18] sm:$0xff]
  %v70 = vld [vmem:[%s1 + $0x20] sm:$0xff]
  %v71 = vld [vmem:[%s1 + $0x28] sm:$0xff]
  %v72 = vld [vmem:[%s1 + $0x30] sm:$0xff]
  %v73 = vld [vmem:[%s1 + $0x38] sm:$0xff]
  %v74 = vld [vmem:[%s1 + $0x40] sm:$0xff]
  %v75 = vld [vmem:[%s1 + $0x48] sm:$0xff]
  %v76 = vld [vmem:[%s1 + $0x50] sm:$0xff]
  %v77 = vld [vmem:[%s1 + $0x58] sm:$0xff]
  %v78 = vld [vmem:[%s1 + $0x60] sm:$0xff]
  %v79 = vld [vmem:[%s1 + $0x68] sm:$0xff]
  %v80 = vld [vmem:[%s1 + $0x70] sm:$0xff]
  %v81 = vld [vmem:[%s1 + $0x78] sm:$0xff]
  %v82 = vld [vmem:[%s1 + $0x80] sm:$0xff]
  %v83 = vld [vmem:[%s1 + $0x88] sm:$0xff]
  %v84 = vld [vmem:[%s1 + $0x90] sm:$0xff]
  %v85 = vld [vmem:[%s1 + $0x98] sm:$0xff]
  %v86 = vld [vmem:[%s1 + $0xa0] sm:$0xff]
  %v87 = vld [vmem:[%s1 + $0xa8] sm:$0xff]
  %v88 = vld [vmem:[%s1 + $0xb0] sm:$0xff]
  %v89 = vld [vmem:[%s1 + $0xb8] sm:$0xff]
  %v90 = vld [vmem:[%s1 + $0xc0] sm:$0xff]
  %v91 = vld [vmem:[%s1 + $0xc8] sm:$0xff]
  %v92 = vld [vmem:[%s1 + $0xd0] sm:$0xff]
  %v93 = vld [vmem:[%s1 + $0xd8] sm:$0xff]
  %v94 = vld [vmem:[%s1 + $0xe0] sm:$0xff]
  %v95 = vld [vmem:[%s1 + $0xe8] sm:$0xff]
  %v96 = vld [vmem:[%s1 + $0xf0] sm:$0xff]
  %v97 = vld [vmem:[%s1 + $0xf8] sm:$0xff]
  %v98 = vld [vmem:[%s1 + $0x100] sm:$0xff]
  %v99 = vld [vmem:[%s1 + $0x108] sm:$0xff]
  %v100 = vld [vmem:[%s1 + $0x110] sm:$0xff]
  %v101 = vld [vmem:[%s1 + $0x118] sm:$0xff]
  %v102 = vld [vmem:[%s1 + $0x120] sm:$0xff]
  %v103 = vld [vmem:[%s1 + $0x128] sm:$0xff]
  %v104 = vld [vmem:[%s1 + $0x130] sm:$0xff]
  %v105 = vld [vmem:[%s1 + $0x138] sm:$0xff]
  %v106 = vld [vmem:[%s1 + $0x140] sm:$0xff]
  %v107 = vld [vmem:[%s1 + $0x148] sm:$0xff]
  %v108 = vld [vmem:[%s1 + $0x150] sm:$0xff]
  %v109 = vld [vmem:[%s1 + $0x158] sm:$0xff]
  %v110 = vld [vmem:[%s1 + $0x160] sm:$0xff]
  %v111 = vld [vmem:[%s1 + $0x168] sm:$0xff]
  %v112 = vld [vmem:[%s1 + $0x170] sm:$0xff]
  %v113 = vld [vmem:[%s1 + $0x178] sm:$0xff]
  %v114 = vld [vmem:[%s1 + $0x180] sm:$0xff]
  %v115 = vld [vmem:[%s1 + $0x188] sm:$0xff]
  %v116 = vld [vmem:[%s1 + $0x190] sm:$0xff]
  %v117 = vld [vmem:[%s1 + $0x198] sm:$0xff]
  %v118 = vld [vmem:[%s1 + $0x1a0] sm:$0xff]
  %v119 = vld [vmem:[%s1 + $0x1a8] sm:$0xff]
  %v120 = vld [vmem:[%s1 + $0x1b0] sm:$0xff]
  %v121 = vld [vmem:[%s1 + $0x1b8] sm:$0xff]
  %v122 = vld [vmem:[%s1 + $0x1c0] sm:$0xff]
  %v123 = vld [vmem:[%s1 + $0x1c8] sm:$0xff]
  %v124 = vld [vmem:[%s1 + $0x1d0] sm:$0xff]
  %v125 = vld [vmem:[%s1 + $0x1d8] sm:$0xff]
  %v126 = vld [vmem:[%s1 + $0x1e0] sm:$0xff]
  %v127 = vld [vmem:[%s1 + $0x1e8] sm:$0xff]
  %v128 = vld [vmem:[%s1 + $0x1f0] sm:$0xff]
  %v129 = vld [vmem:[%s1 + $0x1f8] sm:$0xff]
  %v130 = vld [vmem:[%s2] sm:$0x1]
  %v132 = vlaneseq
  %v133 = vshrl.u32 %v132, 7
  %v134 = vsub.s32 0, %v133
  %v135 = vrot.slane %v130, %v134
  %137 = vmatprep.subr.mxu0 0.0
  %138 = vmatpush1.msra.mxu0 %v66
  %139 = vmatprep.subr.mxu0 0.0
  %140 = vmatpush1.msra.mxu0 %v67
  %141 = vmatprep.subr.mxu0 0.0
  %142 = vmatpush1.msra.mxu0 %v68
  %143 = vmatprep.subr.mxu0 0.0
  %144 = vmatpush1.msra.mxu0 %v69
  %145 = vmatprep.subr.mxu0 0.0
  %146 = vmatpush1.msra.mxu0 %v70
  %147 = vmatprep.subr.mxu0 0.0
  %148 = vmatpush1.msra.mxu0 %v71
  %149 = vmatprep.subr.mxu0 0.0
  %150 = vmatpush1.msra.mxu0 %v72
  %151 = vmatprep.subr.mxu0 0.0
  %152 = vmatpush1.msra.mxu0 %v73
  %153 = vmatprep.subr.mxu0 0.0
  %154 = vmatpush1.msra.mxu0 %v74
  %155 = vmatprep.subr.mxu0 0.0
  %156 = vmatpush1.msra.mxu0 %v75
  %157 = vmatprep.subr.mxu0 0.0
  %158 = vmatpush1.msra.mxu0 %v76
  %159 = vmatprep.subr.mxu0 0.0
  %160 = vmatpush1.msra.mxu0 %v77
  %161 = vmatprep.subr.mxu0 0.0
  %162 = vmatpush1.msra.mxu0 %v78
  %163 = vmatprep.subr.mxu0 0.0
  %164 = vmatpush1.msra.mxu0 %v79
  %165 = vmatprep.subr.mxu0 0.0
  %166 = vmatpush1.msra.mxu0 %v80
  %167 = vmatprep.subr.mxu0 0.0
  %168 = vmatpush1.msra.mxu0 %v81
  %169 = vmatprep.subr.mxu0 0.0
  %170 = vmatpush1.msra.mxu0 %v82
  %171 = vmatprep.subr.mxu0 0.0
  %172 = vmatpush1.msra.mxu0 %v83
  %173 = vmatprep.subr.mxu0 0.0
  %174 = vmatpush1.msra.mxu0 %v84
  %175 = vmatprep.subr.mxu0 0.0
  %176 = vmatpush1.msra.mxu0 %v85
  %177 = vmatprep.subr.mxu0 0.0
  %178 = vmatpush1.msra.mxu0 %v86
  %179 = vmatprep.subr.mxu0 0.0
  %180 = vmatpush1.msra.mxu0 %v87
  %181 = vmatprep.subr.mxu0 0.0
  %182 = vmatpush1.msra.mxu0 %v88
  %183 = vmatprep.subr.mxu0 0.0
  %184 = vmatpush1.msra.mxu0 %v89
  %185 = vmatprep.subr.mxu0 0.0
  %186 = vmatpush1.msra.mxu0 %v90
  %187 = vmatprep.subr.mxu0 0.0
  %188 = vmatpush1.msra.mxu0 %v91
  %189 = vmatprep.subr.mxu0 0.0
  %190 = vmatpush1.msra.mxu0 %v92
  %191 = vmatprep.subr.mxu0 0.0
  %192 = vmatpush1.msra.mxu0 %v93
  %193 = vmatprep.subr.mxu0 0.0
  %194 = vmatpush1.msra.mxu0 %v94
  %195 = vmatprep.subr.mxu0 0.0
  %196 = vmatpush1.msra.mxu0 %v95
  %197 = vmatprep.subr.mxu0 0.0
  %198 = vmatpush1.msra.mxu0 %v96
  %199 = vmatprep.subr.mxu0 0.0
  %200 = vmatpush1.msra.mxu0 %v97
  %201 = vmatprep.mubr.f32.mxu0 %v15
  %202 = vmatmul.mubr.f32.gmra.mrb[0].mxu0 %v14
  %v203 = vpop.f32.mrb[0].mxu0
  %v204 = vadd.f32 %v135, %v203
  %v205 = vpop.f32.mrb[0].mxu0
  %206 = vmatprep.mubr.f32.mxu0 %v19
  %207 = vmatmul.mubr.f32.gmra.mrb[0].mxu0 %v18
  %v208 = vpop.f32.mrb[0].mxu0
  %v209 = vadd.f32 %v135, %v208
  %v210 = vpop.f32.mrb[0].mxu0
  %211 = vmatprep.mubr.f32.mxu0 %v23
  %212 = vmatmul.mubr.f32.gmra.mrb[0].mxu0 %v22
  %v213 = vpop.f32.mrb[0].mxu0
  %v214 = vadd.f32 %v135, %v213
  %v215 = vpop.f32.mrb[0].mxu0
  %216 = vmatprep.mubr.f32.mxu0 %v27
  %217 = vmatmul.mubr.f32.gmra.mrb[0].mxu0 %v26
  %v218 = vpop.f32.mrb[0].mxu0
  %v219 = vadd.f32 %v135, %v218
  %v220 = vpop.f32.mrb[0].mxu0
  %221 = vmatprep.mubr.f32.mxu0 %v31
  %222 = vmatmul.mubr.f32.gmra.mrb[0].mxu0 %v30
  %v223 = vpop.f32.mrb[0].mxu0
  %v224 = vadd.f32 %v135, %v223
  %v225 = vpop.f32.mrb[0].mxu0
  %226 = vmatprep.mubr.f32.mxu0 %v35
  %227 = vmatmul.mubr.f32.gmra.mrb[0].mxu0 %v34
  %v228 = vpop.f32.mrb[0].mxu0
  %v229 = vadd.f32 %v135, %v228
  %v230 = vpop.f32.mrb[0].mxu0
  %231 = vmatprep.mubr.f32.mxu0 %v39
  %232 = vmatmul.mubr.f32.gmra.mrb[0].mxu0 %v38
  %v233 = vpop.f32.mrb[0].mxu0
  %v234 = vadd.f32 %v135, %v233
  %v235 = vpop.f32.mrb[0].mxu0
  %236 = vmatprep.mubr.f32.mxu0 %v43
  %237 = vmatmul.mubr.f32.gmra.mrb[0].mxu0 %v42
  %v238 = vpop.f32.mrb[0].mxu0
  %v239 = vadd.f32 %v135, %v238
  %v240 = vpop.f32.mrb[0].mxu0
  %241 = vmatprep.mubr.f32.mxu0 %v47
  %242 = vmatmul.mubr.f32.gmra.mrb[0].mxu0 %v46
  %v243 = vpop.f32.mrb[0].mxu0
  %v244 = vadd.f32 %v135, %v243
  %v245 = vpop.f32.mrb[0].mxu0
  %246 = vmatprep.mubr.f32.mxu0 %v51
  %247 = vmatmul.mubr.f32.gmra.mrb[0].mxu0 %v50
  %v248 = vpop.f32.mrb[0].mxu0
  %v249 = vadd.f32 %v135, %v248
  %v250 = vpop.f32.mrb[0].mxu0
  %251 = vmatprep.mubr.f32.mxu0 %v55
  %252 = vmatmul.mubr.f32.gmra.mrb[0].mxu0 %v54
  %v253 = vpop.f32.mrb[0].mxu0
  %v254 = vadd.f32 %v135, %v253
  %v255 = vpop.f32.mrb[0].mxu0
  %256 = vmatprep.mubr.f32.mxu0 %v59
  %257 = vmatmul.mubr.f32.gmra.mrb[0].mxu0 %v58
  %v258 = vpop.f32.mrb[0].mxu0
  %v259 = vadd.f32 %v135, %v258
  %v260 = vpop.f32.mrb[0].mxu0
  %261 = vmatprep.mubr.f32.mxu0 %v63
  %262 = vmatmul.mubr.f32.gmra.mrb[0].mxu0 %v62
  %v263 = vpop.f32.mrb[0].mxu0
  %v264 = vadd.f32 %v135, %v263
  %v265 = vpop.f32.mrb[0].mxu0
  %266 = vdwg.mxu0
  %267 = vmatprep.subr.mxu0 0.0
  %268 = vmatpush1.msra.mxu0 %v98
  %269 = vmatprep.subr.mxu0 0.0
  %270 = vmatpush1.msra.mxu0 %v99
  %271 = vmatprep.subr.mxu0 0.0
  %272 = vmatpush1.msra.mxu0 %v100
  %273 = vmatprep.subr.mxu0 0.0
  %274 = vmatpush1.msra.mxu0 %v101
  %275 = vmatprep.subr.mxu0 0.0
  %276 = vmatpush1.msra.mxu0 %v102
  %277 = vmatprep.subr.mxu0 0.0
  %278 = vmatpush1.msra.mxu0 %v103
  %279 = vmatprep.subr.mxu0 0.0
  %280 = vmatpush1.msra.mxu0 %v104
  %281 = vmatprep.subr.mxu0 0.0
  %282 = vmatpush1.msra.mxu0 %v105
  %283 = vmatprep.subr.mxu0 0.0
  %284 = vmatpush1.msra.mxu0 %v106
  %285 = vmatprep.subr.mxu0 0.0
  %286 = vmatpush1.msra.mxu0 %v107
  %287 = vmatprep.subr.mxu0 0.0
  %288 = vmatpush1.msra.mxu0 %v108
  %289 = vmatprep.subr.mxu0 0.0
  %290 = vmatpush1.msra.mxu0 %v109
  %291 = vmatprep.subr.mxu0 0.0
  %292 = vmatpush1.msra.mxu0 %v110
  %293 = vmatprep.subr.mxu0 0.0
  %294 = vmatpush1.msra.mxu0 %v111
  %295 = vmatprep.subr.mxu0 0.0
  %296 = vmatpush1.msra.mxu0 %v112
  %297 = vmatprep.subr.mxu0 0.0
  %298 = vmatpush1.msra.mxu0 %v113
  %299 = vmatprep.subr.mxu0 0.0
  %300 = vmatpush1.msra.mxu0 %v114
  %301 = vmatprep.subr.mxu0 0.0
  %302 = vmatpush1.msra.mxu0 %v115
  %303 = vmatprep.subr.mxu0 0.0
  %304 = vmatpush1.msra.mxu0 %v116
  %305 = vmatprep.subr.mxu0 0.0
  %306 = vmatpush1.msra.mxu0 %v117
  %307 = vmatprep.subr.mxu0 0.0
  %308 = vmatpush1.msra.mxu0 %v118
  %309 = vmatprep.subr.mxu0 0.0
  %310 = vmatpush1.msra.mxu0 %v119
  %311 = vmatprep.subr.mxu0 0.0
  %312 = vmatpush1.msra.mxu0 %v120
  %313 = vmatprep.subr.mxu0 0.0
  %314 = vmatpush1.msra.mxu0 %v121
  %315 = vmatprep.subr.mxu0 0.0
  %316 = vmatpush1.msra.mxu0 %v122
  %317 = vmatprep.subr.mxu0 0.0
  %318 = vmatpush1.msra.mxu0 %v123
  %319 = vmatprep.subr.mxu0 0.0
  %320 = vmatpush1.msra.mxu0 %v124
  %321 = vmatprep.subr.mxu0 0.0
  %322 = vmatpush1.msra.mxu0 %v125
  %323 = vmatprep.subr.mxu0 0.0
  %324 = vmatpush1.msra.mxu0 %v126
  %325 = vmatprep.subr.mxu0 0.0
  %326 = vmatpush1.msra.mxu0 %v127
  %327 = vmatprep.subr.mxu0 0.0
  %328 = vmatpush1.msra.mxu0 %v128
  %329 = vmatprep.subr.mxu0 0.0
  %330 = vmatpush1.msra.mxu0 %v129
  %331 = vmatprep.mubr.f32.mxu0 %v17
  %332 = vmatmul.mubr.f32.gmra.mrb[0].mxu0 %v16
  %v333 = vpop.f32.mrb[0].mxu0
  %v334 = vadd.f32 %v204, %v333
  %v335 = vpop.f32.mrb[0].mxu0
  %336 = vmatprep.mubr.f32.mxu0 %v21
  %337 = vmatmul.mubr.f32.gmra.mrb[0].mxu0 %v20
  %v338 = vpop.f32.mrb[0].mxu0
  %v339 = vadd.f32 %v209, %v338
  %v340 = vpop.f32.mrb[0].mxu0
  %341 = vmatprep.mubr.f32.mxu0 %v25
  %342 = vmatmul.mubr.f32.gmra.mrb[0].mxu0 %v24
  %v343 = vpop.f32.mrb[0].mxu0
  %v344 = vadd.f32 %v214, %v343
  %v345 = vpop.f32.mrb[0].mxu0
  %346 = vmatprep.mubr.f32.mxu0 %v29
  %347 = vmatmul.mubr.f32.gmra.mrb[0].mxu0 %v28
  %v348 = vpop.f32.mrb[0].mxu0
  %v349 = vadd.f32 %v219, %v348
  %v350 = vpop.f32.mrb[0].mxu0
  %351 = vmatprep.mubr.f32.mxu0 %v33
  %352 = vmatmul.mubr.f32.gmra.mrb[0].mxu0 %v32
  %v353 = vpop.f32.mrb[0].mxu0
  %v354 = vadd.f32 %v224, %v353
  %v355 = vpop.f32.mrb[0].mxu0
  %356 = vmatprep.mubr.f32.mxu0 %v37
  %357 = vmatmul.mubr.f32.gmra.mrb[0].mxu0 %v36
  %v358 = vpop.f32.mrb[0].mxu0
  %v359 = vadd.f32 %v229, %v358
  %v360 = vpop.f32.mrb[0].mxu0
  %361 = vmatprep.mubr.f32.mxu0 %v41
  %362 = vmatmul.mubr.f32.gmra.mrb[0].mxu0 %v40
  %v363 = vpop.f32.mrb[0].mxu0
  %v364 = vadd.f32 %v234, %v363
  %v365 = vpop.f32.mrb[0].mxu0
  %366 = vmatprep.mubr.f32.mxu0 %v45
  %367 = vmatmul.mubr.f32.gmra.mrb[0].mxu0 %v44
  %v368 = vpop.f32.mrb[0].mxu0
  %v369 = vadd.f32 %v239, %v368
  %v370 = vpop.f32.mrb[0].mxu0
  %371 = vmatprep.mubr.f32.mxu0 %v49
  %372 = vmatmul.mubr.f32.gmra.mrb[0].mxu0 %v48
  %v373 = vpop.f32.mrb[0].mxu0
  %v374 = vadd.f32 %v244, %v373
  %v375 = vpop.f32.mrb[0].mxu0
  %376 = vmatprep.mubr.f32.mxu0 %v53
  %377 = vmatmul.mubr.f32.gmra.mrb[0].mxu0 %v52
  %v378 = vpop.f32.mrb[0].mxu0
  %v379 = vadd.f32 %v249, %v378
  %v380 = vpop.f32.mrb[0].mxu0
  %381 = vmatprep.mubr.f32.mxu0 %v57
  %382 = vmatmul.mubr.f32.gmra.mrb[0].mxu0 %v56
  %v383 = vpop.f32.mrb[0].mxu0
  %v384 = vadd.f32 %v254, %v383
  %v385 = vpop.f32.mrb[0].mxu0
  %386 = vmatprep.mubr.f32.mxu0 %v61
  %387 = vmatmul.mubr.f32.gmra.mrb[0].mxu0 %v60
  %v388 = vpop.f32.mrb[0].mxu0
  %v389 = vadd.f32 %v259, %v388
  %v390 = vpop.f32.mrb[0].mxu0
  %391 = vmatprep.mubr.f32.mxu0 %v65
  %392 = vmatmul.mubr.f32.gmra.mrb[0].mxu0 %v64
  %v393 = vpop.f32.mrb[0].mxu0
  %v394 = vadd.f32 %v264, %v393
  %v395 = vpop.f32.mrb[0].mxu0
  %396 = vdwg.mxu0
  %v397 = vmax.f32 %v334, 0.0
  %v398 = vmax.f32 %v339, 0.0
  %v399 = vmax.f32 %v344, 0.0
  %v400 = vmax.f32 %v349, 0.0
  %v401 = vmax.f32 %v354, 0.0
  %v402 = vmax.f32 %v359, 0.0
  %v403 = vmax.f32 %v364, 0.0
  %v404 = vmax.f32 %v369, 0.0
  %v405 = vmax.f32 %v374, 0.0
  %v406 = vmax.f32 %v379, 0.0
  %v407 = vmax.f32 %v384, 0.0
  %v408 = vmax.f32 %v389, 0.0
  %v409 = vmax.f32 %v394, 0.0
  %vm410 = vcmask 261120
  %411 = vst.msk [vmem:[%s3] sm:$0xff] %vm410, %v397
  %412 = vst.msk [vmem:[%s3 + $0x8] sm:$0xff] %vm410, %v398
  %413 = vst.msk [vmem:[%s3 + $0x10] sm:$0xff] %vm410, %v399
  %414 = vst.msk [vmem:[%s3 + $0x18] sm:$0xff] %vm410, %v400
  %415 = vst.msk [vmem:[%s3 + $0x20] sm:$0xff] %vm410, %v401
  %416 = vst.msk [vmem:[%s3 + $0x28] sm:$0xff] %vm410, %v402
  %417 = vst.msk [vmem:[%s3 + $0x30] sm:$0xff] %vm410, %v403
  %418 = vst.msk [vmem:[%s3 + $0x38] sm:$0xff] %vm410, %v404
  %419 = vst.msk [vmem:[%s3 + $0x40] sm:$0xff] %vm410, %v405
  %420 = vst.msk [vmem:[%s3 + $0x48] sm:$0xff] %vm410, %v406
  %421 = vst.msk [vmem:[%s3 + $0x50] sm:$0xff] %vm410, %v407
  %422 = vst.msk [vmem:[%s3 + $0x58] sm:$0xff] %vm410, %v408
  %vm423 = vcmask 254976
  %424 = vst.msk [vmem:[%s3 + $0x60] sm:$0x3] %vm423, %v409
  // Predicated region
  $region14: #{dqn_forward.4} parent=0 // pred_check
    _
  $region15: #{dqn_forward.4} parent=0 // pred_check_branch
    %426 = sbr.rel (0) target = $region17
  $region16: #{dqn_forward.4} parent=0 // pred_region
    _
  $region17: #{dqn_forward.4} parent=0 // pred_fallthru
    _
  // Predicated region
  $region18: #{dqn_forward.4} parent=0 // pred_check
    _
  $region19: #{dqn_forward.4} parent=0 // pred_check_branch
    %428 = sbr.rel (0) target = $region21
  $region20: #{dqn_forward.4} parent=0 // pred_region
    _
  $region21: #{dqn_forward.4} parent=0 // pred_fallthru
    _

// kernel: dqn_forward.5
$region0: #{dqn_forward.5}
  #allocation0 [shape = 'u32[]', space=smem, size = 0x4, offset = 0x4, fixed_abs, tag = 'smem constant byte address 0x4 - core index']
  #allocation1 [shape = 'u32[144,128]{1,0:T(1,128)}', space=vmem, size = 0x12000, scoped, tag = 'internal scratch']
  %s0 = inlined_call_operand.vmem [shape: f32[4,2,896], index: 0, kind: input, shape index: {}]
  %s1 = inlined_call_operand.vmem [shape: f32[896,32], index: 1, kind: input, shape index: {}]
  %s2 = inlined_call_operand.vmem [shape: f32[1,32], index: 2, kind: input, shape index: {}]
  %s3 = inlined_call_operand.vmem [shape: f32[4,32,2], index: 3, kind: input, shape index: {}]
  %s4 = inlined_call_operand.vmem [shape: f32[1,2], index: 4, kind: input, shape index: {}]
  %s5 = inlined_call_operand.hbm [shape: f32[2,2], index: 5, kind: output, shape index: {}]
  %s6 = sld [smem:[#allocation0]]
  $region30: #{dqn_forward.5} parent=0
    _
  %s8 = ssub.s32 1, %s6
  %s9 = scalar_select 0, %s8, %s6
  $region1: #{dqn_forward.5} parent=0
    #allocation2 [shape = 'u8[1024]{0}', space=vmem, size = 0x400, scoped, tag = 'output window, operand 0, single buffered']
    #allocation3 [shape = 's32[1]{0}', space=sflag, size = 0x4, scoped, tag = 'scoped memory for dqn_forward.5']
    %10 = vsyncpa [#allocation3], 0
    // Predicated region
    $region2: #{dqn_forward.5} parent=1 // pred_check
      _
    $region3: #{dqn_forward.5} parent=1 // pred_check_branch
      %12 = sbr.rel (0) target = $region5
    $region4: #{dqn_forward.5} parent=1 // pred_region
      _
    $region5: #{dqn_forward.5} parent=1 // pred_fallthru
      _
    // Predicated region
    $region6: #{dqn_forward.5} parent=1 // pred_check
      _
    $region7: #{dqn_forward.5} parent=1 // pred_check_branch
      %14 = sbr.rel (0) target = $region9
    $region8: #{dqn_forward.5} parent=1 // pred_region
      _
    $region9: #{dqn_forward.5} parent=1 // pred_fallthru
      _
    // Predicated region
    $region10: #{dqn_forward.5} parent=1 // pred_check
      _
    $region11: #{dqn_forward.5} parent=1 // pred_check_branch
      %16 = sbr.rel (0) target = $region13
    $region12: #{dqn_forward.5} parent=1 // pred_region
      _
    $region13: #{dqn_forward.5} parent=1 // pred_fallthru
      _
    // Predicated region
    $region14: #{dqn_forward.5} parent=1 // pred_check
      _
    $region15: #{dqn_forward.5} parent=1 // pred_check_branch
      %18 = sbr.rel (0) target = $region17
    $region16: #{dqn_forward.5} parent=1 // pred_region
      _
    $region17: #{dqn_forward.5} parent=1 // pred_fallthru
      _
    // Predicated region
    $region18: #{dqn_forward.5} parent=1 // pred_check
      _
    $region19: #{dqn_forward.5} parent=1 // pred_check_branch
      %20 = sbr.rel (0) target = $region21
    $region20: #{dqn_forward.5} parent=1 // pred_region
      _
    $region21: #{dqn_forward.5} parent=1 // pred_fallthru
      _
    %v21 = vld [vmem:[%s0] sm:$0xff]
    %v22 = vld [vmem:[%s0 + $0x8] sm:$0x3f]
    %v23 = vld [vmem:[%s1] sm:$0xff]
    %v24 = vld [vmem:[%s1 + $0x8] sm:$0xff]
    %v25 = vld [vmem:[%s1 + $0x10] sm:$0xff]
    %v26 = vld [vmem:[%s1 + $0x18] sm:$0xff]
    %v27 = vld [vmem:[%s1 + $0x20] sm:$0xff]
    %v28 = vld [vmem:[%s1 + $0x28] sm:$0xff]
    %v29 = vld [vmem:[%s1 + $0x30] sm:$0xff]
    %v30 = vld [vmem:[%s1 + $0x38] sm:$0xff]
    %v31 = vld [vmem:[%s1 + $0x40] sm:$0xff]
    %v32 = vld [vmem:[%s1 + $0x48] sm:$0xff]
    %v33 = vld [vmem:[%s1 + $0x50] sm:$0xff]
    %v34 = vld [vmem:[%s1 + $0x58] sm:$0xff]
    %v35 = vld [vmem:[%s1 + $0x60] sm:$0xff]
    %v36 = vld [vmem:[%s1 + $0x68] sm:$0xff]
    %v37 = vld [vmem:[%s1 + $0x70] sm:$0xff]
    %v38 = vld [vmem:[%s1 + $0x78] sm:$0xff]
    %v39 = vld [vmem:[%s1 + $0x80] sm:$0xff]
    %v40 = vld [vmem:[%s1 + $0x88] sm:$0xff]
    %v41 = vld [vmem:[%s1 + $0x90] sm:$0xff]
    %v42 = vld [vmem:[%s1 + $0x98] sm:$0xff]
    %v43 = vld [vmem:[%s1 + $0xa0] sm:$0xff]
    %v44 = vld [vmem:[%s1 + $0xa8] sm:$0xff]
    %v45 = vld [vmem:[%s1 + $0xb0] sm:$0xff]
    %v46 = vld [vmem:[%s1 + $0xb8] sm:$0xff]
    %v47 = vld [vmem:[%s1 + $0xc0] sm:$0xff]
    %v48 = vld [vmem:[%s1 + $0xc8] sm:$0xff]
    %v49 = vld [vmem:[%s1 + $0xd0] sm:$0xff]
    %v50 = vld [vmem:[%s1 + $0xd8] sm:$0xff]
    %v51 = vld [vmem:[%s1 + $0xe0] sm:$0xff]
    %v52 = vld [vmem:[%s1 + $0xe8] sm:$0xff]
    %v53 = vld [vmem:[%s1 + $0xf0] sm:$0xff]
    %v54 = vld [vmem:[%s1 + $0xf8] sm:$0xff]
    %v55 = vld [vmem:[%s1 + $0x100] sm:$0xff]
    %v56 = vld [vmem:[%s1 + $0x108] sm:$0xff]
    %v57 = vld [vmem:[%s1 + $0x110] sm:$0xff]
    %v58 = vld [vmem:[%s1 + $0x118] sm:$0xff]
    %v59 = vld [vmem:[%s1 + $0x120] sm:$0xff]
    %v60 = vld [vmem:[%s1 + $0x128] sm:$0xff]
    %v61 = vld [vmem:[%s1 + $0x130] sm:$0xff]
    %v62 = vld [vmem:[%s1 + $0x138] sm:$0xff]
    %v63 = vld [vmem:[%s1 + $0x140] sm:$0xff]
    %v64 = vld [vmem:[%s1 + $0x148] sm:$0xff]
    %v65 = vld [vmem:[%s1 + $0x150] sm:$0xff]
    %v66 = vld [vmem:[%s1 + $0x158] sm:$0xff]
    %v67 = vld [vmem:[%s1 + $0x160] sm:$0xff]
    %v68 = vld [vmem:[%s1 + $0x168] sm:$0xff]
    %v69 = vld [vmem:[%s1 + $0x170] sm:$0xff]
    %v70 = vld [vmem:[%s1 + $0x178] sm:$0xff]
    %v71 = vld [vmem:[%s1 + $0x180] sm:$0xff]
    %v72 = vld [vmem:[%s1 + $0x188] sm:$0xff]
    %v73 = vld [vmem:[%s1 + $0x190] sm:$0xff]
    %v74 = vld [vmem:[%s1 + $0x198] sm:$0xff]
    %v75 = vld [vmem:[%s1 + $0x1a0] sm:$0xff]
    %v76 = vld [vmem:[%s1 + $0x1a8] sm:$0xff]
    %v77 = vld [vmem:[%s1 + $0x1b0] sm:$0xff]
    %v78 = vld [vmem:[%s1 + $0x1b8] sm:$0xff]
    %v79 = vld [vmem:[%s1 + $0x1c0] sm:$0xff]
    %v80 = vld [vmem:[%s1 + $0x1c8] sm:$0xff]
    %v81 = vld [vmem:[%s1 + $0x1d0] sm:$0xff]
    %v82 = vld [vmem:[%s1 + $0x1d8] sm:$0xff]
    %v83 = vld [vmem:[%s1 + $0x1e0] sm:$0xff]
    %v84 = vld [vmem:[%s1 + $0x1e8] sm:$0xff]
    %v85 = vld [vmem:[%s1 + $0x1f0] sm:$0xff]
    %v86 = vld [vmem:[%s1 + $0x1f8] sm:$0xff]
    %v87 = vld [vmem:[%s1 + $0x200] sm:$0xff]
    %v88 = vld [vmem:[%s1 + $0x208] sm:$0xff]
    %v89 = vld [vmem:[%s1 + $0x210] sm:$0xff]
    %v90 = vld [vmem:[%s1 + $0x218] sm:$0xff]
    %v91 = vld [vmem:[%s1 + $0x220] sm:$0xff]
    %v92 = vld [vmem:[%s1 + $0x228] sm:$0xff]
    %v93 = vld [vmem:[%s1 + $0x230] sm:$0xff]
    %v94 = vld [vmem:[%s1 + $0x238] sm:$0xff]
    %v95 = vld [vmem:[%s1 + $0x240] sm:$0xff]
    %v96 = vld [vmem:[%s1 + $0x248] sm:$0xff]
    %v97 = vld [vmem:[%s1 + $0x250] sm:$0xff]
    %v98 = vld [vmem:[%s1 + $0x258] sm:$0xff]
    %v99 = vld [vmem:[%s1 + $0x260] sm:$0xff]
    %v100 = vld [vmem:[%s1 + $0x268] sm:$0xff]
    %v101 = vld [vmem:[%s1 + $0x270] sm:$0xff]
    %v102 = vld [vmem:[%s1 + $0x278] sm:$0xff]
    %v103 = vld [vmem:[%s1 + $0x280] sm:$0xff]
    %v104 = vld [vmem:[%s1 + $0x288] sm:$0xff]
    %v105 = vld [vmem:[%s1 + $0x290] sm:$0xff]
    %v106 = vld [vmem:[%s1 + $0x298] sm:$0xff]
    %v107 = vld [vmem:[%s1 + $0x2a0] sm:$0xff]
    %v108 = vld [vmem:[%s1 + $0x2a8] sm:$0xff]
    %v109 = vld [vmem:[%s1 + $0x2b0] sm:$0xff]
    %v110 = vld [vmem:[%s1 + $0x2b8] sm:$0xff]
    %v111 = vld [vmem:[%s1 + $0x2c0] sm:$0xff]
    %v112 = vld [vmem:[%s1 + $0x2c8] sm:$0xff]
    %v113 = vld [vmem:[%s1 + $0x2d0] sm:$0xff]
    %v114 = vld [vmem:[%s1 + $0x2d8] sm:$0xff]
    %v115 = vld [vmem:[%s1 + $0x2e0] sm:$0xff]
    %v116 = vld [vmem:[%s1 + $0x2e8] sm:$0xff]
    %v117 = vld [vmem:[%s1 + $0x2f0] sm:$0xff]
    %v118 = vld [vmem:[%s1 + $0x2f8] sm:$0xff]
    %v119 = vld [vmem:[%s1 + $0x300] sm:$0xff]
    %v120 = vld [vmem:[%s1 + $0x308] sm:$0xff]
    %v121 = vld [vmem:[%s1 + $0x310] sm:$0xff]
    %v122 = vld [vmem:[%s1 + $0x318] sm:$0xff]
    %v123 = vld [vmem:[%s1 + $0x320] sm:$0xff]
    %v124 = vld [vmem:[%s1 + $0x328] sm:$0xff]
    %v125 = vld [vmem:[%s1 + $0x330] sm:$0xff]
    %v126 = vld [vmem:[%s1 + $0x338] sm:$0xff]
    %v127 = vld [vmem:[%s1 + $0x340] sm:$0xff]
    %v128 = vld [vmem:[%s1 + $0x348] sm:$0xff]
    %v129 = vld [vmem:[%s1 + $0x350] sm:$0xff]
    %v130 = vld [vmem:[%s1 + $0x358] sm:$0xff]
    %v131 = vld [vmem:[%s1 + $0x360] sm:$0xff]
    %v132 = vld [vmem:[%s1 + $0x368] sm:$0xff]
    %v133 = vld [vmem:[%s1 + $0x370] sm:$0xff]
    %v134 = vld [vmem:[%s1 + $0x378] sm:$0xff]
    %v135 = vld [vmem:[%s2] sm:$0x1]
    %v137 = vlaneseq
    %v138 = vshrl.u32 %v137, 7
    %v139 = vsub.s32 0, %v138
    %v140 = vrot.slane %v135, %v139
    %v144 = vcombine.high %v21, %v21
    %v146 = vunpack.c.l.s4 1983009808
    %v147 = vunpack.c.0.s8 %v146
    %v148 = vlaneseq
    %v149 = vshrl.u32 %v148, 7
    %v150 = vsub.s32 %v147, %v149
    %v151 = vrot.slane %v21, %v150
    %v153 = vunpack.c.l.s4 1983009808
    %v154 = vunpack.c.0.s8 %v153
    %v155 = vlaneseq
    %v156 = vshrl.u32 %v155, 7
    %v157 = vsub.s32 %v154, %v156
    %v158 = vrot.slane %v144, %v157
    %v159 = vcombine.high %v151, %v151
    %v160 = vcombine.high %v158, %v158
    %v161 = vcombine.high %v22, %v22
    %v163 = vunpack.c.l.s4 1983009808
    %v164 = vunpack.c.0.s8 %v163
    %v165 = vlaneseq
    %v166 = vshrl.u32 %v165, 7
    %v167 = vsub.s32 %v164, %v166
    %v168 = vrot.slane %v22, %v167
    %v170 = vunpack.c.l.s4 1983009808
    %v171 = vunpack.c.0.s8 %v170
    %v172 = vlaneseq
    %v173 = vshrl.u32 %v172, 7
    %v174 = vsub.s32 %v171, %v173
    %v175 = vrot.slane %v161, %v174
    %v176 = vcombine.high %v168, %v168
    %184 = vmatprep.subr.mxu0 0.0
    %185 = vmatpush1.msra.mxu0 %v23
    %186 = vmatprep.subr.mxu0 0.0
    %187 = vmatpush1.msra.mxu0 %v24
    %188 = vmatprep.subr.mxu0 0.0
    %189 = vmatpush1.msra.mxu0 %v25
    %190 = vmatprep.subr.mxu0 0.0
    %191 = vmatpush1.msra.mxu0 %v26
    %192 = vmatprep.subr.mxu0 0.0
    %193 = vmatpush1.msra.mxu0 %v27
    %194 = vmatprep.subr.mxu0 0.0
    %195 = vmatpush1.msra.mxu0 %v28
    %196 = vmatprep.subr.mxu0 0.0
    %197 = vmatpush1.msra.mxu0 %v29
    %198 = vmatprep.subr.mxu0 0.0
    %199 = vmatpush1.msra.mxu0 %v30
    %200 = vmatprep.subr.mxu0 0.0
    %201 = vmatpush1.msra.mxu0 %v31
    %202 = vmatprep.subr.mxu0 0.0
    %203 = vmatpush1.msra.mxu0 %v32
    %204 = vmatprep.subr.mxu0 0.0
    %205 = vmatpush1.msra.mxu0 %v33
    %206 = vmatprep.subr.mxu0 0.0
    %207 = vmatpush1.msra.mxu0 %v34
    %208 = vmatprep.subr.mxu0 0.0
    %209 = vmatpush1.msra.mxu0 %v35
    %210 = vmatprep.subr.mxu0 0.0
    %211 = vmatpush1.msra.mxu0 %v36
    %212 = vmatprep.subr.mxu0 0.0
    %213 = vmatpush1.msra.mxu0 %v37
    %214 = vmatprep.subr.mxu0 0.0
    %215 = vmatpush1.msra.mxu0 %v38
    %216 = vmatprep.subr.mxu0 0.0
    %217 = vmatpush1.msra.mxu0 %v39
    %218 = vmatprep.subr.mxu0 0.0
    %219 = vmatpush1.msra.mxu0 %v40
    %220 = vmatprep.subr.mxu0 0.0
    %221 = vmatpush1.msra.mxu0 %v41
    %222 = vmatprep.subr.mxu0 0.0
    %223 = vmatpush1.msra.mxu0 %v42
    %224 = vmatprep.subr.mxu0 0.0
    %225 = vmatpush1.msra.mxu0 %v43
    %226 = vmatprep.subr.mxu0 0.0
    %227 = vmatpush1.msra.mxu0 %v44
    %228 = vmatprep.subr.mxu0 0.0
    %229 = vmatpush1.msra.mxu0 %v45
    %230 = vmatprep.subr.mxu0 0.0
    %231 = vmatpush1.msra.mxu0 %v46
    %232 = vmatprep.subr.mxu0 0.0
    %233 = vmatpush1.msra.mxu0 %v47
    %234 = vmatprep.subr.mxu0 0.0
    %235 = vmatpush1.msra.mxu0 %v48
    %236 = vmatprep.subr.mxu0 0.0
    %237 = vmatpush1.msra.mxu0 %v49
    %238 = vmatprep.subr.mxu0 0.0
    %239 = vmatpush1.msra.mxu0 %v50
    %240 = vmatprep.subr.mxu0 0.0
    %241 = vmatpush1.msra.mxu0 %v51
    %242 = vmatprep.subr.mxu0 0.0
    %243 = vmatpush1.msra.mxu0 %v52
    %244 = vmatprep.subr.mxu0 0.0
    %245 = vmatpush1.msra.mxu0 %v53
    %246 = vmatprep.subr.mxu0 0.0
    %247 = vmatpush1.msra.mxu0 %v54
    %248 = vmatprep.mubr.f32.mxu0 %v159
    %249 = vmatmul.mubr.f32.gmra.mrb[0].mxu0 %v151
    %v250 = vpop.f32.mrb[0].mxu0
    %v251 = vadd.f32 %v140, %v250
    %v252 = vpop.f32.mrb[0].mxu0
    %253 = vdwg.mxu0
    %254 = vmatprep.subr.mxu0 0.0
    %255 = vmatpush1.msra.mxu0 %v55
    %256 = vmatprep.subr.mxu0 0.0
    %257 = vmatpush1.msra.mxu0 %v56
    %258 = vmatprep.subr.mxu0 0.0
    %259 = vmatpush1.msra.mxu0 %v57
    %260 = vmatprep.subr.mxu0 0.0
    %261 = vmatpush1.msra.mxu0 %v58
    %262 = vmatprep.subr.mxu0 0.0
    %263 = vmatpush1.msra.mxu0 %v59
    %264 = vmatprep.subr.mxu0 0.0
    %265 = vmatpush1.msra.mxu0 %v60
    %266 = vmatprep.subr.mxu0 0.0
    %267 = vmatpush1.msra.mxu0 %v61
    %268 = vmatprep.subr.mxu0 0.0
    %269 = vmatpush1.msra.mxu0 %v62
    %270 = vmatprep.subr.mxu0 0.0
    %271 = vmatpush1.msra.mxu0 %v63
    %272 = vmatprep.subr.mxu0 0.0
    %273 = vmatpush1.msra.mxu0 %v64
    %274 = vmatprep.subr.mxu0 0.0
    %275 = vmatpush1.msra.mxu0 %v65
    %276 = vmatprep.subr.mxu0 0.0
    %277 = vmatpush1.msra.mxu0 %v66
    %278 = vmatprep.subr.mxu0 0.0
    %279 = vmatpush1.msra.mxu0 %v67
    %280 = vmatprep.subr.mxu0 0.0
    %281 = vmatpush1.msra.mxu0 %v68
    %282 = vmatprep.subr.mxu0 0.0
    %283 = vmatpush1.msra.mxu0 %v69
    %284 = vmatprep.subr.mxu0 0.0
    %285 = vmatpush1.msra.mxu0 %v70
    %286 = vmatprep.subr.mxu0 0.0
    %287 = vmatpush1.msra.mxu0 %v71
    %288 = vmatprep.subr.mxu0 0.0
    %289 = vmatpush1.msra.mxu0 %v72
    %290 = vmatprep.subr.mxu0 0.0
    %291 = vmatpush1.msra.mxu0 %v73
    %292 = vmatprep.subr.mxu0 0.0
    %293 = vmatpush1.msra.mxu0 %v74
    %294 = vmatprep.subr.mxu0 0.0
    %295 = vmatpush1.msra.mxu0 %v75
    %296 = vmatprep.subr.mxu0 0.0
    %297 = vmatpush1.msra.mxu0 %v76
    %298 = vmatprep.subr.mxu0 0.0
    %299 = vmatpush1.msra.mxu0 %v77
    %300 = vmatprep.subr.mxu0 0.0
    %301 = vmatpush1.msra.mxu0 %v78
    %302 = vmatprep.subr.mxu0 0.0
    %303 = vmatpush1.msra.mxu0 %v79
    %304 = vmatprep.subr.mxu0 0.0
    %305 = vmatpush1.msra.mxu0 %v80
    %306 = vmatprep.subr.mxu0 0.0
    %307 = vmatpush1.msra.mxu0 %v81
    %308 = vmatprep.subr.mxu0 0.0
    %309 = vmatpush1.msra.mxu0 %v82
    %310 = vmatprep.subr.mxu0 0.0
    %311 = vmatpush1.msra.mxu0 %v83
    %312 = vmatprep.subr.mxu0 0.0
    %313 = vmatpush1.msra.mxu0 %v84
    %314 = vmatprep.subr.mxu0 0.0
    %315 = vmatpush1.msra.mxu0 %v85
    %316 = vmatprep.subr.mxu0 0.0
    %317 = vmatpush1.msra.mxu0 %v86
    %318 = vmatprep.mubr.f32.mxu0 %v160
    %319 = vmatmul.mubr.f32.gmra.mrb[0].mxu0 %v158
    %v320 = vpop.f32.mrb[0].mxu0
    %v321 = vadd.f32 %v251, %v320
    %v322 = vpop.f32.mrb[0].mxu0
    %323 = vdwg.mxu0
    %324 = vmatprep.subr.mxu0 0.0
    %325 = vmatpush1.msra.mxu0 %v87
    %326 = vmatprep.subr.mxu0 0.0
    %327 = vmatpush1.msra.mxu0 %v88
    %328 = vmatprep.subr.mxu0 0.0
    %329 = vmatpush1.msra.mxu0 %v89
    %330 = vmatprep.subr.mxu0 0.0
    %331 = vmatpush1.msra.mxu0 %v90
    %332 = vmatprep.subr.mxu0 0.0
    %333 = vmatpush1.msra.mxu0 %v91
    %334 = vmatprep.subr.mxu0 0.0
    %335 = vmatpush1.msra.mxu0 %v92
    %336 = vmatprep.subr.mxu0 0.0
    %337 = vmatpush1.msra.mxu0 %v93
    %338 = vmatprep.subr.mxu0 0.0
    %339 = vmatpush1.msra.mxu0 %v94
    %340 = vmatprep.subr.mxu0 0.0
    %341 = vmatpush1.msra.mxu0 %v95
    %342 = vmatprep.subr.mxu0 0.0
    %343 = vmatpush1.msra.mxu0 %v96
    %344 = vmatprep.subr.mxu0 0.0
    %345 = vmatpush1.msra.mxu0 %v97
    %346 = vmatprep.subr.mxu0 0.0
    %347 = vmatpush1.msra.mxu0 %v98
    %348 = vmatprep.subr.mxu0 0.0
    %349 = vmatpush1.msra.mxu0 %v99
    %350 = vmatprep.subr.mxu0 0.0
    %351 = vmatpush1.msra.mxu0 %v100
    %352 = vmatprep.subr.mxu0 0.0
    %353 = vmatpush1.msra.mxu0 %v101
    %354 = vmatprep.subr.mxu0 0.0
    %355 = vmatpush1.msra.mxu0 %v102
    %356 = vmatprep.subr.mxu0 0.0
    %357 = vmatpush1.msra.mxu0 %v103
    %358 = vmatprep.subr.mxu0 0.0
    %359 = vmatpush1.msra.mxu0 %v104
    %360 = vmatprep.subr.mxu0 0.0
    %361 = vmatpush1.msra.mxu0 %v105
    %362 = vmatprep.subr.mxu0 0.0
    %363 = vmatpush1.msra.mxu0 %v106
    %364 = vmatprep.subr.mxu0 0.0
    %365 = vmatpush1.msra.mxu0 %v107
    %366 = vmatprep.subr.mxu0 0.0
    %367 = vmatpush1.msra.mxu0 %v108
    %368 = vmatprep.subr.mxu0 0.0
    %369 = vmatpush1.msra.mxu0 %v109
    %370 = vmatprep.subr.mxu0 0.0
    %371 = vmatpush1.msra.mxu0 %v110
    %372 = vmatprep.subr.mxu0 0.0
    %373 = vmatpush1.msra.mxu0 %v111
    %374 = vmatprep.subr.mxu0 0.0
    %375 = vmatpush1.msra.mxu0 %v112
    %376 = vmatprep.subr.mxu0 0.0
    %377 = vmatpush1.msra.mxu0 %v113
    %378 = vmatprep.subr.mxu0 0.0
    %379 = vmatpush1.msra.mxu0 %v114
    %380 = vmatprep.subr.mxu0 0.0
    %381 = vmatpush1.msra.mxu0 %v115
    %382 = vmatprep.subr.mxu0 0.0
    %383 = vmatpush1.msra.mxu0 %v116
    %384 = vmatprep.subr.mxu0 0.0
    %385 = vmatpush1.msra.mxu0 %v117
    %386 = vmatprep.subr.mxu0 0.0
    %387 = vmatpush1.msra.mxu0 %v118
    %388 = vmatprep.mubr.f32.mxu0 %v176
    %389 = vmatmul.mubr.f32.gmra.mrb[0].mxu0 %v168
    %v390 = vpop.f32.mrb[0].mxu0
    %v391 = vadd.f32 %v321, %v390
    %v392 = vpop.f32.mrb[0].mxu0
    %393 = vdwg.mxu0
    %394 = vmatprep.subr.mxu0 0.0
    %395 = vmatpush1.msra.mxu0 %v119
    %396 = vmatprep.subr.mxu0 0.0
    %397 = vmatpush1.msra.mxu0 %v120
    %398 = vmatprep.subr.mxu0 0.0
    %399 = vmatpush1.msra.mxu0 %v121
    %400 = vmatprep.subr.mxu0 0.0
    %401 = vmatpush1.msra.mxu0 %v122
    %402 = vmatprep.subr.mxu0 0.0
    %403 = vmatpush1.msra.mxu0 %v123
    %404 = vmatprep.subr.mxu0 0.0
    %405 = vmatpush1.msra.mxu0 %v124
    %406 = vmatprep.subr.mxu0 0.0
    %407 = vmatpush1.msra.mxu0 %v125
    %408 = vmatprep.subr.mxu0 0.0
    %409 = vmatpush1.msra.mxu0 %v126
    %410 = vmatprep.subr.mxu0 0.0
    %411 = vmatpush1.msra.mxu0 %v127
    %412 = vmatprep.subr.mxu0 0.0
    %413 = vmatpush1.msra.mxu0 %v128
    %414 = vmatprep.subr.mxu0 0.0
    %415 = vmatpush1.msra.mxu0 %v129
    %416 = vmatprep.subr.mxu0 0.0
    %417 = vmatpush1.msra.mxu0 %v130
    %418 = vmatprep.subr.mxu0 0.0
    %419 = vmatpush1.msra.mxu0 %v131
    %420 = vmatprep.subr.mxu0 0.0
    %421 = vmatpush1.msra.mxu0 %v132
    %422 = vmatprep.subr.mxu0 0.0
    %423 = vmatpush1.msra.mxu0 %v133
    %424 = vmatprep.subr.mxu0 0.0
    %425 = vmatpush1.msra.mxu0 %v134
    %426 = vmatprep.subr.mxu0 0.0
    %427 = vmatpush1.msra.mxu0 0.0
    %428 = vmatprep.subr.mxu0 0.0
    %429 = vmatpush1.msra.mxu0 0.0
    %430 = vmatprep.subr.mxu0 0.0
    %431 = vmatpush1.msra.mxu0 0.0
    %432 = vmatprep.subr.mxu0 0.0
    %433 = vmatpush1.msra.mxu0 0.0
    %434 = vmatprep.subr.mxu0 0.0
    %435 = vmatpush1.msra.mxu0 0.0
    %436 = vmatprep.subr.mxu0 0.0
    %437 = vmatpush1.msra.mxu0 0.0
    %438 = vmatprep.subr.mxu0 0.0
    %439 = vmatpush1.msra.mxu0 0.0
    %440 = vmatprep.subr.mxu0 0.0
    %441 = vmatpush1.msra.mxu0 0.0
    %442 = vmatprep.subr.mxu0 0.0
    %443 = vmatpush1.msra.mxu0 0.0
    %444 = vmatprep.subr.mxu0 0.0
    %445 = vmatpush1.msra.mxu0 0.0
    %446 = vmatprep.subr.mxu0 0.0
    %447 = vmatpush1.msra.mxu0 0.0
    %448 = vmatprep.subr.mxu0 0.0
    %449 = vmatpush1.msra.mxu0 0.0
    %450 = vmatprep.subr.mxu0 0.0
    %451 = vmatpush1.msra.mxu0 0.0
    %452 = vmatprep.subr.mxu0 0.0
    %453 = vmatpush1.msra.mxu0 0.0
    %454 = vmatprep.subr.mxu0 0.0
    %455 = vmatpush1.msra.mxu0 0.0
    %456 = vmatprep.subr.mxu0 0.0
    %457 = vmatpush1.msra.mxu0 0.0
    %458 = vmatprep.mubr.f32.mxu0 0.0
    %459 = vmatmul.mubr.f32.gmra.mrb[0].mxu0 %v175
    %v460 = vpop.f32.mrb[0].mxu0
    %v461 = vadd.f32 %v391, %v460
    %v462 = vpop.f32.mrb[0].mxu0
    %463 = vdwg.mxu0
    %v464 = vmax.f32 %v461, 0.0
    %v465 = vld [vmem:[%s3] sm:$0xff]
    %v466 = vld [vmem:[%s3 + $0x8] sm:$0xff]
    %v467 = vld [vmem:[%s3 + $0x10] sm:$0xff]
    %v468 = vld [vmem:[%s3 + $0x18] sm:$0xff]
    %s469 = scalar_lea.vmem %s0, 14
    %v470 = vld [vmem:[%s469] sm:$0xff]
    %v471 = vld [vmem:[%s469 + $0x8] sm:$0x3f]
    %v474 = vcombine.high %v470, %v470
    %v476 = vunpack.c.l.s4 1983009808
    %v477 = vunpack.c.0.s8 %v476
    %v478 = vlaneseq
    %v479 = vshrl.u32 %v478, 7
    %v480 = vsub.s32 %v477, %v479
    %v481 = vrot.slane %v470, %v480
    %v483 = vunpack.c.l.s4 1983009808
    %v484 = vunpack.c.0.s8 %v483
    %v485 = vlaneseq
    %v486 = vshrl.u32 %v485, 7
    %v487 = vsub.s32 %v484, %v486
    %v488 = vrot.slane %v474, %v487
    %v489 = vcombine.high %v481, %v481
    %v490 = vcombine.high %v488, %v488
    %v491 = vcombine.high %v471, %v471
    %v493 = vunpack.c.l.s4 1983009808
    %v494 = vunpack.c.0.s8 %v493
    %v495 = vlaneseq
    %v496 = vshrl.u32 %v495, 7
    %v497 = vsub.s32 %v494, %v496
    %v498 = vrot.slane %v471, %v497
    %v500 = vunpack.c.l.s4 1983009808
    %v501 = vunpack.c.0.s8 %v500
    %v502 = vlaneseq
    %v503 = vshrl.u32 %v502, 7
    %v504 = vsub.s32 %v501, %v503
    %v505 = vrot.slane %v491, %v504
    %v506 = vcombine.high %v498, %v498
    %514 = vmatprep.subr.mxu0 0.0
    %515 = vmatpush1.msra.mxu0 %v23
    %516 = vmatprep.subr.mxu0 0.0
    %517 = vmatpush1.msra.mxu0 %v24
    %518 = vmatprep.subr.mxu0 0.0
    %519 = vmatpush1.msra.mxu0 %v25
    %520 = vmatprep.subr.mxu0 0.0
    %521 = vmatpush1.msra.mxu0 %v26
    %522 = vmatprep.subr.mxu0 0.0
    %523 = vmatpush1.msra.mxu0 %v27
    %524 = vmatprep.subr.mxu0 0.0
    %525 = vmatpush1.msra.mxu0 %v28
    %526 = vmatprep.subr.mxu0 0.0
    %527 = vmatpush1.msra.mxu0 %v29
    %528 = vmatprep.subr.mxu0 0.0
    %529 = vmatpush1.msra.mxu0 %v30
    %530 = vmatprep.subr.mxu0 0.0
    %531 = vmatpush1.msra.mxu0 %v31
    %532 = vmatprep.subr.mxu0 0.0
    %533 = vmatpush1.msra.mxu0 %v32
    %534 = vmatprep.subr.mxu0 0.0
    %535 = vmatpush1.msra.mxu0 %v33
    %536 = vmatprep.subr.mxu0 0.0
    %537 = vmatpush1.msra.mxu0 %v34
    %538 = vmatprep.subr.mxu0 0.0
    %539 = vmatpush1.msra.mxu0 %v35
    %540 = vmatprep.subr.mxu0 0.0
    %541 = vmatpush1.msra.mxu0 %v36
    %542 = vmatprep.subr.mxu0 0.0
    %543 = vmatpush1.msra.mxu0 %v37
    %544 = vmatprep.subr.mxu0 0.0
    %545 = vmatpush1.msra.mxu0 %v38
    %546 = vmatprep.subr.mxu0 0.0
    %547 = vmatpush1.msra.mxu0 %v39
    %548 = vmatprep.subr.mxu0 0.0
    %549 = vmatpush1.msra.mxu0 %v40
    %550 = vmatprep.subr.mxu0 0.0
    %551 = vmatpush1.msra.mxu0 %v41
    %552 = vmatprep.subr.mxu0 0.0
    %553 = vmatpush1.msra.mxu0 %v42
    %554 = vmatprep.subr.mxu0 0.0
    %555 = vmatpush1.msra.mxu0 %v43
    %556 = vmatprep.subr.mxu0 0.0
    %557 = vmatpush1.msra.mxu0 %v44
    %558 = vmatprep.subr.mxu0 0.0
    %559 = vmatpush1.msra.mxu0 %v45
    %560 = vmatprep.subr.mxu0 0.0
    %561 = vmatpush1.msra.mxu0 %v46
    %562 = vmatprep.subr.mxu0 0.0
    %563 = vmatpush1.msra.mxu0 %v47
    %564 = vmatprep.subr.mxu0 0.0
    %565 = vmatpush1.msra.mxu0 %v48
    %566 = vmatprep.subr.mxu0 0.0
    %567 = vmatpush1.msra.mxu0 %v49
    %568 = vmatprep.subr.mxu0 0.0
    %569 = vmatpush1.msra.mxu0 %v50
    %570 = vmatprep.subr.mxu0 0.0
    %571 = vmatpush1.msra.mxu0 %v51
    %572 = vmatprep.subr.mxu0 0.0
    %573 = vmatpush1.msra.mxu0 %v52
    %574 = vmatprep.subr.mxu0 0.0
    %575 = vmatpush1.msra.mxu0 %v53
    %576 = vmatprep.subr.mxu0 0.0
    %577 = vmatpush1.msra.mxu0 %v54
    %578 = vmatprep.mubr.f32.mxu0 %v489
    %579 = vmatmul.mubr.f32.gmra.mrb[0].mxu0 %v481
    %v580 = vpop.f32.mrb[0].mxu0
    %v581 = vadd.f32 %v140, %v580
    %v582 = vpop.f32.mrb[0].mxu0
    %583 = vdwg.mxu0
    %584 = vmatprep.subr.mxu0 0.0
    %585 = vmatpush1.msra.mxu0 %v55
    %586 = vmatprep.subr.mxu0 0.0
    %587 = vmatpush1.msra.mxu0 %v56
    %588 = vmatprep.subr.mxu0 0.0
    %589 = vmatpush1.msra.mxu0 %v57
    %590 = vmatprep.subr.mxu0 0.0
    %591 = vmatpush1.msra.mxu0 %v58
    %592 = vmatprep.subr.mxu0 0.0
    %593 = vmatpush1.msra.mxu0 %v59
    %594 = vmatprep.subr.mxu0 0.0
    %595 = vmatpush1.msra.mxu0 %v60
    %596 = vmatprep.subr.mxu0 0.0
    %597 = vmatpush1.msra.mxu0 %v61
    %598 = vmatprep.subr.mxu0 0.0
    %599 = vmatpush1.msra.mxu0 %v62
    %600 = vmatprep.subr.mxu0 0.0
    %601 = vmatpush1.msra.mxu0 %v63
    %602 = vmatprep.subr.mxu0 0.0
    %603 = vmatpush1.msra.mxu0 %v64
    %604 = vmatprep.subr.mxu0 0.0
    %605 = vmatpush1.msra.mxu0 %v65
    %606 = vmatprep.subr.mxu0 0.0
    %607 = vmatpush1.msra.mxu0 %v66
    %608 = vmatprep.subr.mxu0 0.0
    %609 = vmatpush1.msra.mxu0 %v67
    %610 = vmatprep.subr.mxu0 0.0
    %611 = vmatpush1.msra.mxu0 %v68
    %612 = vmatprep.subr.mxu0 0.0
    %613 = vmatpush1.msra.mxu0 %v69
    %614 = vmatprep.subr.mxu0 0.0
    %615 = vmatpush1.msra.mxu0 %v70
    %616 = vmatprep.subr.mxu0 0.0
    %617 = vmatpush1.msra.mxu0 %v71
    %618 = vmatprep.subr.mxu0 0.0
    %619 = vmatpush1.msra.mxu0 %v72
    %620 = vmatprep.subr.mxu0 0.0
    %621 = vmatpush1.msra.mxu0 %v73
    %622 = vmatprep.subr.mxu0 0.0
    %623 = vmatpush1.msra.mxu0 %v74
    %624 = vmatprep.subr.mxu0 0.0
    %625 = vmatpush1.msra.mxu0 %v75
    %626 = vmatprep.subr.mxu0 0.0
    %627 = vmatpush1.msra.mxu0 %v76
    %628 = vmatprep.subr.mxu0 0.0
    %629 = vmatpush1.msra.mxu0 %v77
    %630 = vmatprep.subr.mxu0 0.0
    %631 = vmatpush1.msra.mxu0 %v78
    %632 = vmatprep.subr.mxu0 0.0
    %633 = vmatpush1.msra.mxu0 %v79
    %634 = vmatprep.subr.mxu0 0.0
    %635 = vmatpush1.msra.mxu0 %v80
    %636 = vmatprep.subr.mxu0 0.0
    %637 = vmatpush1.msra.mxu0 %v81
    %638 = vmatprep.subr.mxu0 0.0
    %639 = vmatpush1.msra.mxu0 %v82
    %640 = vmatprep.subr.mxu0 0.0
    %641 = vmatpush1.msra.mxu0 %v83
    %642 = vmatprep.subr.mxu0 0.0
    %643 = vmatpush1.msra.mxu0 %v84
    %644 = vmatprep.subr.mxu0 0.0
    %645 = vmatpush1.msra.mxu0 %v85
    %646 = vmatprep.subr.mxu0 0.0
    %647 = vmatpush1.msra.mxu0 %v86
    %648 = vmatprep.mubr.f32.mxu0 %v490
    %649 = vmatmul.mubr.f32.gmra.mrb[0].mxu0 %v488
    %v650 = vpop.f32.mrb[0].mxu0
    %v651 = vadd.f32 %v581, %v650
    %v652 = vpop.f32.mrb[0].mxu0
    %653 = vdwg.mxu0
    %654 = vmatprep.subr.mxu0 0.0
    %655 = vmatpush1.msra.mxu0 %v87
    %656 = vmatprep.subr.mxu0 0.0
    %657 = vmatpush1.msra.mxu0 %v88
    %658 = vmatprep.subr.mxu0 0.0
    %659 = vmatpush1.msra.mxu0 %v89
    %660 = vmatprep.subr.mxu0 0.0
    %661 = vmatpush1.msra.mxu0 %v90
    %662 = vmatprep.subr.mxu0 0.0
    %663 = vmatpush1.msra.mxu0 %v91
    %664 = vmatprep.subr.mxu0 0.0
    %665 = vmatpush1.msra.mxu0 %v92
    %666 = vmatprep.subr.mxu0 0.0
    %667 = vmatpush1.msra.mxu0 %v93
    %668 = vmatprep.subr.mxu0 0.0
    %669 = vmatpush1.msra.mxu0 %v94
    %670 = vmatprep.subr.mxu0 0.0
    %671 = vmatpush1.msra.mxu0 %v95
    %672 = vmatprep.subr.mxu0 0.0
    %673 = vmatpush1.msra.mxu0 %v96
    %674 = vmatprep.subr.mxu0 0.0
    %675 = vmatpush1.msra.mxu0 %v97
    %676 = vmatprep.subr.mxu0 0.0
    %677 = vmatpush1.msra.mxu0 %v98
    %678 = vmatprep.subr.mxu0 0.0
    %679 = vmatpush1.msra.mxu0 %v99
    %680 = vmatprep.subr.mxu0 0.0
    %681 = vmatpush1.msra.mxu0 %v100
    %682 = vmatprep.subr.mxu0 0.0
    %683 = vmatpush1.msra.mxu0 %v101
    %684 = vmatprep.subr.mxu0 0.0
    %685 = vmatpush1.msra.mxu0 %v102
    %686 = vmatprep.subr.mxu0 0.0
    %687 = vmatpush1.msra.mxu0 %v103
    %688 = vmatprep.subr.mxu0 0.0
    %689 = vmatpush1.msra.mxu0 %v104
    %690 = vmatprep.subr.mxu0 0.0
    %691 = vmatpush1.msra.mxu0 %v105
    %692 = vmatprep.subr.mxu0 0.0
    %693 = vmatpush1.msra.mxu0 %v106
    %694 = vmatprep.subr.mxu0 0.0
    %695 = vmatpush1.msra.mxu0 %v107
    %696 = vmatprep.subr.mxu0 0.0
    %697 = vmatpush1.msra.mxu0 %v108
    %698 = vmatprep.subr.mxu0 0.0
    %699 = vmatpush1.msra.mxu0 %v109
    %700 = vmatprep.subr.mxu0 0.0
    %701 = vmatpush1.msra.mxu0 %v110
    %702 = vmatprep.subr.mxu0 0.0
    %703 = vmatpush1.msra.mxu0 %v111
    %704 = vmatprep.subr.mxu0 0.0
    %705 = vmatpush1.msra.mxu0 %v112
    %706 = vmatprep.subr.mxu0 0.0
    %707 = vmatpush1.msra.mxu0 %v113
    %708 = vmatprep.subr.mxu0 0.0
    %709 = vmatpush1.msra.mxu0 %v114
    %710 = vmatprep.subr.mxu0 0.0
    %711 = vmatpush1.msra.mxu0 %v115
    %712 = vmatprep.subr.mxu0 0.0
    %713 = vmatpush1.msra.mxu0 %v116
    %714 = vmatprep.subr.mxu0 0.0
    %715 = vmatpush1.msra.mxu0 %v117
    %716 = vmatprep.subr.mxu0 0.0
    %717 = vmatpush1.msra.mxu0 %v118
    %718 = vmatprep.mubr.f32.mxu0 %v506
    %719 = vmatmul.mubr.f32.gmra.mrb[0].mxu0 %v498
    %v720 = vpop.f32.mrb[0].mxu0
    %v721 = vadd.f32 %v651, %v720
    %v722 = vpop.f32.mrb[0].mxu0
    %723 = vdwg.mxu0
    %724 = vmatprep.subr.mxu0 0.0
    %725 = vmatpush1.msra.mxu0 %v119
    %726 = vmatprep.subr.mxu0 0.0
    %727 = vmatpush1.msra.mxu0 %v120
    %728 = vmatprep.subr.mxu0 0.0
    %729 = vmatpush1.msra.mxu0 %v121
    %730 = vmatprep.subr.mxu0 0.0
    %731 = vmatpush1.msra.mxu0 %v122
    %732 = vmatprep.subr.mxu0 0.0
    %733 = vmatpush1.msra.mxu0 %v123
    %734 = vmatprep.subr.mxu0 0.0
    %735 = vmatpush1.msra.mxu0 %v124
    %736 = vmatprep.subr.mxu0 0.0
    %737 = vmatpush1.msra.mxu0 %v125
    %738 = vmatprep.subr.mxu0 0.0
    %739 = vmatpush1.msra.mxu0 %v126
    %740 = vmatprep.subr.mxu0 0.0
    %741 = vmatpush1.msra.mxu0 %v127
    %742 = vmatprep.subr.mxu0 0.0
    %743 = vmatpush1.msra.mxu0 %v128
    %744 = vmatprep.subr.mxu0 0.0
    %745 = vmatpush1.msra.mxu0 %v129
    %746 = vmatprep.subr.mxu0 0.0
    %747 = vmatpush1.msra.mxu0 %v130
    %748 = vmatprep.subr.mxu0 0.0
    %749 = vmatpush1.msra.mxu0 %v131
    %750 = vmatprep.subr.mxu0 0.0
    %751 = vmatpush1.msra.mxu0 %v132
    %752 = vmatprep.subr.mxu0 0.0
    %753 = vmatpush1.msra.mxu0 %v133
    %754 = vmatprep.subr.mxu0 0.0
    %755 = vmatpush1.msra.mxu0 %v134
    %756 = vmatprep.subr.mxu0 0.0
    %757 = vmatpush1.msra.mxu0 0.0
    %758 = vmatprep.subr.mxu0 0.0
    %759 = vmatpush1.msra.mxu0 0.0
    %760 = vmatprep.subr.mxu0 0.0
    %761 = vmatpush1.msra.mxu0 0.0
    %762 = vmatprep.subr.mxu0 0.0
    %763 = vmatpush1.msra.mxu0 0.0
    %764 = vmatprep.subr.mxu0 0.0
    %765 = vmatpush1.msra.mxu0 0.0
    %766 = vmatprep.subr.mxu0 0.0
    %767 = vmatpush1.msra.mxu0 0.0
    %768 = vmatprep.subr.mxu0 0.0
    %769 = vmatpush1.msra.mxu0 0.0
    %770 = vmatprep.subr.mxu0 0.0
    %771 = vmatpush1.msra.mxu0 0.0
    %772 = vmatprep.subr.mxu0 0.0
    %773 = vmatpush1.msra.mxu0 0.0
    %774 = vmatprep.subr.mxu0 0.0
    %775 = vmatpush1.msra.mxu0 0.0
    %776 = vmatprep.subr.mxu0 0.0
    %777 = vmatpush1.msra.mxu0 0.0
    %778 = vmatprep.subr.mxu0 0.0
    %779 = vmatpush1.msra.mxu0 0.0
    %780 = vmatprep.subr.mxu0 0.0
    %781 = vmatpush1.msra.mxu0 0.0
    %782 = vmatprep.subr.mxu0 0.0
    %783 = vmatpush1.msra.mxu0 0.0
    %784 = vmatprep.subr.mxu0 0.0
    %785 = vmatpush1.msra.mxu0 0.0
    %786 = vmatprep.subr.mxu0 0.0
    %787 = vmatpush1.msra.mxu0 0.0
    %788 = vmatprep.mubr.f32.mxu0 0.0
    %789 = vmatmul.mubr.f32.gmra.mrb[0].mxu0 %v505
    %v790 = vpop.f32.mrb[0].mxu0
    %v791 = vadd.f32 %v721, %v790
    %v792 = vpop.f32.mrb[0].mxu0
    %793 = vdwg.mxu0
    %v794 = vmax.f32 %v791, 0.0
    %s795 = scalar_lea.vmem %s3, 32
    %v796 = vld [vmem:[%s795] sm:$0xff]
    %v797 = vld [vmem:[%s795 + $0x8] sm:$0xff]
    %v798 = vld [vmem:[%s795 + $0x10] sm:$0xff]
    %v799 = vld [vmem:[%s795 + $0x18] sm:$0xff]
    %vm800 = vcmask 261120
    %v802 = vsel %vm800, %v794, 0
    %804 = vmatprep.subr.mxu0 0.0
    %805 = vmatpush1.msra.mxu0 %v796
    %806 = vmatprep.subr.mxu0 0.0
    %807 = vmatpush1.msra.mxu0 %v797
    %808 = vmatprep.subr.mxu0 0.0
    %809 = vmatpush1.msra.mxu0 %v798
    %810 = vmatprep.subr.mxu0 0.0
    %811 = vmatpush1.msra.mxu0 %v799
    %812 = vmatprep.subr.mxu0 0.0
    %813 = vmatpush1.msra.mxu0 0.0
    %814 = vmatprep.subr.mxu0 0.0
    %815 = vmatpush1.msra.mxu0 0.0
    %816 = vmatprep.subr.mxu0 0.0
    %817 = vmatpush1.msra.mxu0 0.0
    %818 = vmatprep.subr.mxu0 0.0
    %819 = vmatpush1.msra.mxu0 0.0
    %820 = vmatprep.subr.mxu0 0.0
    %821 = vmatpush1.msra.mxu0 0.0
    %822 = vmatprep.subr.mxu0 0.0
    %823 = vmatpush1.msra.mxu0 0.0
    %824 = vmatprep.subr.mxu0 0.0
    %825 = vmatpush1.msra.mxu0 0.0
    %826 = vmatprep.subr.mxu0 0.0
    %827 = vmatpush1.msra.mxu0 0.0
    %828 = vmatprep.subr.mxu0 0.0
    %829 = vmatpush1.msra.mxu0 0.0
    %830 = vmatprep.subr.mxu0 0.0
    %831 = vmatpush1.msra.mxu0 0.0
    %832 = vmatprep.subr.mxu0 0.0
    %833 = vmatpush1.msra.mxu0 0.0
    %834 = vmatprep.subr.mxu0 0.0
    %835 = vmatpush1.msra.mxu0 0.0
    %836 = vmatprep.subr.mxu0 0.0
    %837 = vmatpush1.msra.mxu0 0.0
    %838 = vmatprep.subr.mxu0 0.0
    %839 = vmatpush1.msra.mxu0 0.0
    %840 = vmatprep.subr.mxu0 0.0
    %841 = vmatpush1.msra.mxu0 0.0
    %842 = vmatprep.subr.mxu0 0.0
    %843 = vmatpush1.msra.mxu0 0.0
    %844 = vmatprep.subr.mxu0 0.0
    %845 = vmatpush1.msra.mxu0 0.0
    %846 = vmatprep.subr.mxu0 0.0
    %847 = vmatpush1.msra.mxu0 0.0
    %848 = vmatprep.subr.mxu0 0.0
    %849 = vmatpush1.msra.mxu0 0.0
    %850 = vmatprep.subr.mxu0 0.0
    %851 = vmatpush1.msra.mxu0 0.0
    %852 = vmatprep.subr.mxu0 0.0
    %853 = vmatpush1.msra.mxu0 0.0
    %854 = vmatprep.subr.mxu0 0.0
    %855 = vmatpush1.msra.mxu0 0.0
    %856 = vmatprep.subr.mxu0 0.0
    %857 = vmatpush1.msra.mxu0 0.0
    %858 = vmatprep.subr.mxu0 0.0
    %859 = vmatpush1.msra.mxu0 0.0
    %860 = vmatprep.subr.mxu0 0.0
    %861 = vmatpush1.msra.mxu0 0.0
    %862 = vmatprep.subr.mxu0 0.0
    %863 = vmatpush1.msra.mxu0 0.0
    %864 = vmatprep.subr.mxu0 0.0
    %865 = vmatpush1.msra.mxu0 0.0
    %866 = vmatprep.subr.mxu0 0.0
    %867 = vmatpush1.msra.mxu0 0.0
    %868 = vmatprep.mubr.f32.mxu0 0.0
    %869 = vmatmul.mubr.f32.gmra.mrb[0].mxu0 %v802
    %v870 = vpop.f32.mrb[0].mxu0
    %v871 = vadd.f32 0.0, %v870
    %v872 = vpop.f32.mrb[0].mxu0
    %873 = vdwg.mxu0
    %v875 = vsel %vm800, %v464, 0
    %877 = vmatprep.subr.mxu0 0.0
    %878 = vmatpush1.msra.mxu0 %v465
    %879 = vmatprep.subr.mxu0 0.0
    %880 = vmatpush1.msra.mxu0 %v466
    %881 = vmatprep.subr.mxu0 0.0
    %882 = vmatpush1.msra.mxu0 %v467
    %883 = vmatprep.subr.mxu0 0.0
    %884 = vmatpush1.msra.mxu0 %v468
    %885 = vmatprep.subr.mxu0 0.0
    %886 = vmatpush1.msra.mxu0 0.0
    %887 = vmatprep.subr.mxu0 0.0
    %888 = vmatpush1.msra.mxu0 0.0
    %889 = vmatprep.subr.mxu0 0.0
    %890 = vmatpush1.msra.mxu0 0.0
    %891 = vmatprep.subr.mxu0 0.0
    %892 = vmatpush1.msra.mxu0 0.0
    %893 = vmatprep.subr.mxu0 0.0
    %894 = vmatpush1.msra.mxu0 0.0
    %895 = vmatprep.subr.mxu0 0.0
    %896 = vmatpush1.msra.mxu0 0.0
    %897 = vmatprep.subr.mxu0 0.0
    %898 = vmatpush1.msra.mxu0 0.0
    %899 = vmatprep.subr.mxu0 0.0
    %900 = vmatpush1.msra.mxu0 0.0
    %901 = vmatprep.subr.mxu0 0.0
    %902 = vmatpush1.msra.mxu0 0.0
    %903 = vmatprep.subr.mxu0 0.0
    %904 = vmatpush1.msra.mxu0 0.0
    %905 = vmatprep.subr.mxu0 0.0
    %906 = vmatpush1.msra.mxu0 0.0
    %907 = vmatprep.subr.mxu0 0.0
    %908 = vmatpush1.msra.mxu0 0.0
    %909 = vmatprep.subr.mxu0 0.0
    %910 = vmatpush1.msra.mxu0 0.0
    %911 = vmatprep.subr.mxu0 0.0
    %912 = vmatpush1.msra.mxu0 0.0
    %913 = vmatprep.subr.mxu0 0.0
    %914 = vmatpush1.msra.mxu0 0.0
    %915 = vmatprep.subr.mxu0 0.0
    %916 = vmatpush1.msra.mxu0 0.0
    %917 = vmatprep.subr.mxu0 0.0
    %918 = vmatpush1.msra.mxu0 0.0
    %919 = vmatprep.subr.mxu0 0.0
    %920 = vmatpush1.msra.mxu0 0.0
    %921 = vmatprep.subr.mxu0 0.0
    %922 = vmatpush1.msra.mxu0 0.0
    %923 = vmatprep.subr.mxu0 0.0
    %924 = vmatpush1.msra.mxu0 0.0
    %925 = vmatprep.subr.mxu0 0.0
    %926 = vmatpush1.msra.mxu0 0.0
    %927 = vmatprep.subr.mxu0 0.0
    %928 = vmatpush1.msra.mxu0 0.0
    %929 = vmatprep.subr.mxu0 0.0
    %930 = vmatpush1.msra.mxu0 0.0
    %931 = vmatprep.subr.mxu0 0.0
    %932 = vmatpush1.msra.mxu0 0.0
    %933 = vmatprep.subr.mxu0 0.0
    %934 = vmatpush1.msra.mxu0 0.0
    %935 = vmatprep.subr.mxu0 0.0
    %936 = vmatpush1.msra.mxu0 0.0
    %937 = vmatprep.subr.mxu0 0.0
    %938 = vmatpush1.msra.mxu0 0.0
    %939 = vmatprep.subr.mxu0 0.0
    %940 = vmatpush1.msra.mxu0 0.0
    %941 = vmatprep.mubr.f32.mxu0 0.0
    %942 = vmatmul.mubr.f32.gmra.mrb[0].mxu0 %v875
    %v943 = vpop.f32.mrb[0].mxu0
    %v944 = vadd.f32 %v871, %v943
    %v945 = vpop.f32.mrb[0].mxu0
    %946 = vdwg.mxu0
    %s947 = scalar_lea.vmem %s0, 28
    %v948 = vld [vmem:[%s947] sm:$0xff]
    %v949 = vld [vmem:[%s947 + $0x8] sm:$0x3f]
    %v952 = vcombine.high %v948, %v948
    %v954 = vunpack.c.l.s4 1983009808
    %v955 = vunpack.c.0.s8 %v954
    %v956 = vlaneseq
    %v957 = vshrl.u32 %v956, 7
    %v958 = vsub.s32 %v955, %v957
    %v959 = vrot.slane %v948, %v958
    %v961 = vunpack.c.l.s4 1983009808
    %v962 = vunpack.c.0.s8 %v961
    %v963 = vlaneseq
    %v964 = vshrl.u32 %v963, 7
    %v965 = vsub.s32 %v962, %v964
    %v966 = vrot.slane %v952, %v965
    %v967 = vcombine.high %v959, %v959
    %v968 = vcombine.high %v966, %v966
    %v969 = vcombine.high %v949, %v949
    %v971 = vunpack.c.l.s4 1983009808
    %v972 = vunpack.c.0.s8 %v971
    %v973 = vlaneseq
    %v974 = vshrl.u32 %v973, 7
    %v975 = vsub.s32 %v972, %v974
    %v976 = vrot.slane %v949, %v975
    %v978 = vunpack.c.l.s4 1983009808
    %v979 = vunpack.c.0.s8 %v978
    %v980 = vlaneseq
    %v981 = vshrl.u32 %v980, 7
    %v982 = vsub.s32 %v979, %v981
    %v983 = vrot.slane %v969, %v982
    %v984 = vcombine.high %v976, %v976
    %992 = vmatprep.subr.mxu0 0.0
    %993 = vmatpush1.msra.mxu0 %v23
    %994 = vmatprep.subr.mxu0 0.0
    %995 = vmatpush1.msra.mxu0 %v24
    %996 = vmatprep.subr.mxu0 0.0
    %997 = vmatpush1.msra.mxu0 %v25
    %998 = vmatprep.subr.mxu0 0.0
    %999 = vmatpush1.msra.mxu0 %v26
    %1000 = vmatprep.subr.mxu0 0.0
    %1001 = vmatpush1.msra.mxu0 %v27
    %1002 = vmatprep.subr.mxu0 0.0
    %1003 = vmatpush1.msra.mxu0 %v28
    %1004 = vmatprep.subr.mxu0 0.0
    %1005 = vmatpush1.msra.mxu0 %v29
    %1006 = vmatprep.subr.mxu0 0.0
    %1007 = vmatpush1.msra.mxu0 %v30
    %1008 = vmatprep.subr.mxu0 0.0
    %1009 = vmatpush1.msra.mxu0 %v31
    %1010 = vmatprep.subr.mxu0 0.0
    %1011 = vmatpush1.msra.mxu0 %v32
    %1012 = vmatprep.subr.mxu0 0.0
    %1013 = vmatpush1.msra.mxu0 %v33
    %1014 = vmatprep.subr.mxu0 0.0
    %1015 = vmatpush1.msra.mxu0 %v34
    %1016 = vmatprep.subr.mxu0 0.0
    %1017 = vmatpush1.msra.mxu0 %v35
    %1018 = vmatprep.subr.mxu0 0.0
    %1019 = vmatpush1.msra.mxu0 %v36
    %1020 = vmatprep.subr.mxu0 0.0
    %1021 = vmatpush1.msra.mxu0 %v37
    %1022 = vmatprep.subr.mxu0 0.0
    %1023 = vmatpush1.msra.mxu0 %v38
    %1024 = vmatprep.subr.mxu0 0.0
    %1025 = vmatpush1.msra.mxu0 %v39
    %1026 = vmatprep.subr.mxu0 0.0
    %1027 = vmatpush1.msra.mxu0 %v40
    %1028 = vmatprep.subr.mxu0 0.0
    %1029 = vmatpush1.msra.mxu0 %v41
    %1030 = vmatprep.subr.mxu0 0.0
    %1031 = vmatpush1.msra.mxu0 %v42
    %1032 = vmatprep.subr.mxu0 0.0
    %1033 = vmatpush1.msra.mxu0 %v43
    %1034 = vmatprep.subr.mxu0 0.0
    %1035 = vmatpush1.msra.mxu0 %v44
    %1036 = vmatprep.subr.mxu0 0.0
    %1037 = vmatpush1.msra.mxu0 %v45
    %1038 = vmatprep.subr.mxu0 0.0
    %1039 = vmatpush1.msra.mxu0 %v46
    %1040 = vmatprep.subr.mxu0 0.0
    %1041 = vmatpush1.msra.mxu0 %v47
    %1042 = vmatprep.subr.mxu0 0.0
    %1043 = vmatpush1.msra.mxu0 %v48
    %1044 = vmatprep.subr.mxu0 0.0
    %1045 = vmatpush1.msra.mxu0 %v49
    %1046 = vmatprep.subr.mxu0 0.0
    %1047 = vmatpush1.msra.mxu0 %v50
    %1048 = vmatprep.subr.mxu0 0.0
    %1049 = vmatpush1.msra.mxu0 %v51
    %1050 = vmatprep.subr.mxu0 0.0
    %1051 = vmatpush1.msra.mxu0 %v52
    %1052 = vmatprep.subr.mxu0 0.0
    %1053 = vmatpush1.msra.mxu0 %v53
    %1054 = vmatprep.subr.mxu0 0.0
    %1055 = vmatpush1.msra.mxu0 %v54
    %1056 = vmatprep.mubr.f32.mxu0 %v967
    %1057 = vmatmul.mubr.f32.gmra.mrb[0].mxu0 %v959
    %v1058 = vpop.f32.mrb[0].mxu0
    %v1059 = vadd.f32 %v140, %v1058
    %v1060 = vpop.f32.mrb[0].mxu0
    %1061 = vdwg.mxu0
    %1062 = vmatprep.subr.mxu0 0.0
    %1063 = vmatpush1.msra.mxu0 %v55
    %1064 = vmatprep.subr.mxu0 0.0
    %1065 = vmatpush1.msra.mxu0 %v56
    %1066 = vmatprep.subr.mxu0 0.0
    %1067 = vmatpush1.msra.mxu0 %v57
    %1068 = vmatprep.subr.mxu0 0.0
    %1069 = vmatpush1.msra.mxu0 %v58
    %1070 = vmatprep.subr.mxu0 0.0
    %1071 = vmatpush1.msra.mxu0 %v59
    %1072 = vmatprep.subr.mxu0 0.0
    %1073 = vmatpush1.msra.mxu0 %v60
    %1074 = vmatprep.subr.mxu0 0.0
    %1075 = vmatpush1.msra.mxu0 %v61
    %1076 = vmatprep.subr.mxu0 0.0
    %1077 = vmatpush1.msra.mxu0 %v62
    %1078 = vmatprep.subr.mxu0 0.0
    %1079 = vmatpush1.msra.mxu0 %v63
    %1080 = vmatprep.subr.mxu0 0.0
    %1081 = vmatpush1.msra.mxu0 %v64
    %1082 = vmatprep.subr.mxu0 0.0
    %1083 = vmatpush1.msra.mxu0 %v65
    %1084 = vmatprep.subr.mxu0 0.0
    %1085 = vmatpush1.msra.mxu0 %v66
    %1086 = vmatprep.subr.mxu0 0.0
    %1087 = vmatpush1.msra.mxu0 %v67
    %1088 = vmatprep.subr.mxu0 0.0
    %1089 = vmatpush1.msra.mxu0 %v68
    %1090 = vmatprep.subr.mxu0 0.0
    %1091 = vmatpush1.msra.mxu0 %v69
    %1092 = vmatprep.subr.mxu0 0.0
    %1093 = vmatpush1.msra.mxu0 %v70
    %1094 = vmatprep.subr.mxu0 0.0
    %1095 = vmatpush1.msra.mxu0 %v71
    %1096 = vmatprep.subr.mxu0 0.0
    %1097 = vmatpush1.msra.mxu0 %v72
    %1098 = vmatprep.subr.mxu0 0.0
    %1099 = vmatpush1.msra.mxu0 %v73
    %1100 = vmatprep.subr.mxu0 0.0
    %1101 = vmatpush1.msra.mxu0 %v74
    %1102 = vmatprep.subr.mxu0 0.0
    %1103 = vmatpush1.msra.mxu0 %v75
    %1104 = vmatprep.subr.mxu0 0.0
    %1105 = vmatpush1.msra.mxu0 %v76
    %1106 = vmatprep.subr.mxu0 0.0
    %1107 = vmatpush1.msra.mxu0 %v77
    %1108 = vmatprep.subr.mxu0 0.0
    %1109 = vmatpush1.msra.mxu0 %v78
    %1110 = vmatprep.subr.mxu0 0.0
    %1111 = vmatpush1.msra.mxu0 %v79
    %1112 = vmatprep.subr.mxu0 0.0
    %1113 = vmatpush1.msra.mxu0 %v80
    %1114 = vmatprep.subr.mxu0 0.0
    %1115 = vmatpush1.msra.mxu0 %v81
    %1116 = vmatprep.subr.mxu0 0.0
    %1117 = vmatpush1.msra.mxu0 %v82
    %1118 = vmatprep.subr.mxu0 0.0
    %1119 = vmatpush1.msra.mxu0 %v83
    %1120 = vmatprep.subr.mxu0 0.0
    %1121 = vmatpush1.msra.mxu0 %v84
    %1122 = vmatprep.subr.mxu0 0.0
    %1123 = vmatpush1.msra.mxu0 %v85
    %1124 = vmatprep.subr.mxu0 0.0
    %1125 = vmatpush1.msra.mxu0 %v86
    %1126 = vmatprep.mubr.f32.mxu0 %v968
    %1127 = vmatmul.mubr.f32.gmra.mrb[0].mxu0 %v966
    %v1128 = vpop.f32.mrb[0].mxu0
    %v1129 = vadd.f32 %v1059, %v1128
    %v1130 = vpop.f32.mrb[0].mxu0
    %1131 = vdwg.mxu0
    %1132 = vmatprep.subr.mxu0 0.0
    %1133 = vmatpush1.msra.mxu0 %v87
    %1134 = vmatprep.subr.mxu0 0.0
    %1135 = vmatpush1.msra.mxu0 %v88
    %1136 = vmatprep.subr.mxu0 0.0
    %1137 = vmatpush1.msra.mxu0 %v89
    %1138 = vmatprep.subr.mxu0 0.0
    %1139 = vmatpush1.msra.mxu0 %v90
    %1140 = vmatprep.subr.mxu0 0.0
    %1141 = vmatpush1.msra.mxu0 %v91
    %1142 = vmatprep.subr.mxu0 0.0
    %1143 = vmatpush1.msra.mxu0 %v92
    %1144 = vmatprep.subr.mxu0 0.0
    %1145 = vmatpush1.msra.mxu0 %v93
    %1146 = vmatprep.subr.mxu0 0.0
    %1147 = vmatpush1.msra.mxu0 %v94
    %1148 = vmatprep.subr.mxu0 0.0
    %1149 = vmatpush1.msra.mxu0 %v95
    %1150 = vmatprep.subr.mxu0 0.0
    %1151 = vmatpush1.msra.mxu0 %v96
    %1152 = vmatprep.subr.mxu0 0.0
    %1153 = vmatpush1.msra.mxu0 %v97
    %1154 = vmatprep.subr.mxu0 0.0
    %1155 = vmatpush1.msra.mxu0 %v98
    %1156 = vmatprep.subr.mxu0 0.0
    %1157 = vmatpush1.msra.mxu0 %v99
    %1158 = vmatprep.subr.mxu0 0.0
    %1159 = vmatpush1.msra.mxu0 %v100
    %1160 = vmatprep.subr.mxu0 0.0
    %1161 = vmatpush1.msra.mxu0 %v101
    %1162 = vmatprep.subr.mxu0 0.0
    %1163 = vmatpush1.msra.mxu0 %v102
    %1164 = vmatprep.subr.mxu0 0.0
    %1165 = vmatpush1.msra.mxu0 %v103
    %1166 = vmatprep.subr.mxu0 0.0
    %1167 = vmatpush1.msra.mxu0 %v104
    %1168 = vmatprep.subr.mxu0 0.0
    %1169 = vmatpush1.msra.mxu0 %v105
    %1170 = vmatprep.subr.mxu0 0.0
    %1171 = vmatpush1.msra.mxu0 %v106
    %1172 = vmatprep.subr.mxu0 0.0
    %1173 = vmatpush1.msra.mxu0 %v107
    %1174 = vmatprep.subr.mxu0 0.0
    %1175 = vmatpush1.msra.mxu0 %v108
    %1176 = vmatprep.subr.mxu0 0.0
    %1177 = vmatpush1.msra.mxu0 %v109
    %1178 = vmatprep.subr.mxu0 0.0
    %1179 = vmatpush1.msra.mxu0 %v110
    %1180 = vmatprep.subr.mxu0 0.0
    %1181 = vmatpush1.msra.mxu0 %v111
    %1182 = vmatprep.subr.mxu0 0.0
    %1183 = vmatpush1.msra.mxu0 %v112
    %1184 = vmatprep.subr.mxu0 0.0
    %1185 = vmatpush1.msra.mxu0 %v113
    %1186 = vmatprep.subr.mxu0 0.0
    %1187 = vmatpush1.msra.mxu0 %v114
    %1188 = vmatprep.subr.mxu0 0.0
    %1189 = vmatpush1.msra.mxu0 %v115
    %1190 = vmatprep.subr.mxu0 0.0
    %1191 = vmatpush1.msra.mxu0 %v116
    %1192 = vmatprep.subr.mxu0 0.0
    %1193 = vmatpush1.msra.mxu0 %v117
    %1194 = vmatprep.subr.mxu0 0.0
    %1195 = vmatpush1.msra.mxu0 %v118
    %1196 = vmatprep.mubr.f32.mxu0 %v984
    %1197 = vmatmul.mubr.f32.gmra.mrb[0].mxu0 %v976
    %v1198 = vpop.f32.mrb[0].mxu0
    %v1199 = vadd.f32 %v1129, %v1198
    %v1200 = vpop.f32.mrb[0].mxu0
    %1201 = vdwg.mxu0
    %1202 = vmatprep.subr.mxu0 0.0
    %1203 = vmatpush1.msra.mxu0 %v119
    %1204 = vmatprep.subr.mxu0 0.0
    %1205 = vmatpush1.msra.mxu0 %v120
    %1206 = vmatprep.subr.mxu0 0.0
    %1207 = vmatpush1.msra.mxu0 %v121
    %1208 = vmatprep.subr.mxu0 0.0
    %1209 = vmatpush1.msra.mxu0 %v122
    %1210 = vmatprep.subr.mxu0 0.0
    %1211 = vmatpush1.msra.mxu0 %v123
    %1212 = vmatprep.subr.mxu0 0.0
    %1213 = vmatpush1.msra.mxu0 %v124
    %1214 = vmatprep.subr.mxu0 0.0
    %1215 = vmatpush1.msra.mxu0 %v125
    %1216 = vmatprep.subr.mxu0 0.0
    %1217 = vmatpush1.msra.mxu0 %v126
    %1218 = vmatprep.subr.mxu0 0.0
    %1219 = vmatpush1.msra.mxu0 %v127
    %1220 = vmatprep.subr.mxu0 0.0
    %1221 = vmatpush1.msra.mxu0 %v128
    %1222 = vmatprep.subr.mxu0 0.0
    %1223 = vmatpush1.msra.mxu0 %v129
    %1224 = vmatprep.subr.mxu0 0.0
    %1225 = vmatpush1.msra.mxu0 %v130
    %1226 = vmatprep.subr.mxu0 0.0
    %1227 = vmatpush1.msra.mxu0 %v131
    %1228 = vmatprep.subr.mxu0 0.0
    %1229 = vmatpush1.msra.mxu0 %v132
    %1230 = vmatprep.subr.mxu0 0.0
    %1231 = vmatpush1.msra.mxu0 %v133
    %1232 = vmatprep.subr.mxu0 0.0
    %1233 = vmatpush1.msra.mxu0 %v134
    %1234 = vmatprep.subr.mxu0 0.0
    %1235 = vmatpush1.msra.mxu0 0.0
    %1236 = vmatprep.subr.mxu0 0.0
    %1237 = vmatpush1.msra.mxu0 0.0
    %1238 = vmatprep.subr.mxu0 0.0
    %1239 = vmatpush1.msra.mxu0 0.0
    %1240 = vmatprep.subr.mxu0 0.0
    %1241 = vmatpush1.msra.mxu0 0.0
    %1242 = vmatprep.subr.mxu0 0.0
    %1243 = vmatpush1.msra.mxu0 0.0
    %1244 = vmatprep.subr.mxu0 0.0
    %1245 = vmatpush1.msra.mxu0 0.0
    %1246 = vmatprep.subr.mxu0 0.0
    %1247 = vmatpush1.msra.mxu0 0.0
    %1248 = vmatprep.subr.mxu0 0.0
    %1249 = vmatpush1.msra.mxu0 0.0
    %1250 = vmatprep.subr.mxu0 0.0
    %1251 = vmatpush1.msra.mxu0 0.0
    %1252 = vmatprep.subr.mxu0 0.0
    %1253 = vmatpush1.msra.mxu0 0.0
    %1254 = vmatprep.subr.mxu0 0.0
    %1255 = vmatpush1.msra.mxu0 0.0
    %1256 = vmatprep.subr.mxu0 0.0
    %1257 = vmatpush1.msra.mxu0 0.0
    %1258 = vmatprep.subr.mxu0 0.0
    %1259 = vmatpush1.msra.mxu0 0.0
    %1260 = vmatprep.subr.mxu0 0.0
    %1261 = vmatpush1.msra.mxu0 0.0
    %1262 = vmatprep.subr.mxu0 0.0
    %1263 = vmatpush1.msra.mxu0 0.0
    %1264 = vmatprep.subr.mxu0 0.0
    %1265 = vmatpush1.msra.mxu0 0.0
    %1266 = vmatprep.mubr.f32.mxu0 0.0
    %1267 = vmatmul.mubr.f32.gmra.mrb[0].mxu0 %v983
    %v1268 = vpop.f32.mrb[0].mxu0
    %v1269 = vadd.f32 %v1199, %v1268
    %v1270 = vpop.f32.mrb[0].mxu0
    %1271 = vdwg.mxu0
    %v1272 = vmax.f32 %v1269, 0.0
    %s1273 = scalar_lea.vmem %s3, 64
    %v1274 = vld [vmem:[%s1273] sm:$0xff]
    %v1275 = vld [vmem:[%s1273 + $0x8] sm:$0xff]
    %v1276 = vld [vmem:[%s1273 + $0x10] sm:$0xff]
    %v1277 = vld [vmem:[%s1273 + $0x18] sm:$0xff]
    %v1279 = vsel %vm800, %v1272, 0
    %1281 = vmatprep.subr.mxu0 0.0
    %1282 = vmatpush1.msra.mxu0 %v1274
    %1283 = vmatprep.subr.mxu0 0.0
    %1284 = vmatpush1.msra.mxu0 %v1275
    %1285 = vmatprep.subr.mxu0 0.0
    %1286 = vmatpush1.msra.mxu0 %v1276
    %1287 = vmatprep.subr.mxu0 0.0
    %1288 = vmatpush1.msra.mxu0 %v1277
    %1289 = vmatprep.subr.mxu0 0.0
    %1290 = vmatpush1.msra.mxu0 0.0
    %1291 = vmatprep.subr.mxu0 0.0
    %1292 = vmatpush1.msra.mxu0 0.0
    %1293 = vmatprep.subr.mxu0 0.0
    %1294 = vmatpush1.msra.mxu0 0.0
    %1295 = vmatprep.subr.mxu0 0.0
    %1296 = vmatpush1.msra.mxu0 0.0
    %1297 = vmatprep.subr.mxu0 0.0
    %1298 = vmatpush1.msra.mxu0 0.0
    %1299 = vmatprep.subr.mxu0 0.0
    %1300 = vmatpush1.msra.mxu0 0.0
    %1301 = vmatprep.subr.mxu0 0.0
    %1302 = vmatpush1.msra.mxu0 0.0
    %1303 = vmatprep.subr.mxu0 0.0
    %1304 = vmatpush1.msra.mxu0 0.0
    %1305 = vmatprep.subr.mxu0 0.0
    %1306 = vmatpush1.msra.mxu0 0.0
    %1307 = vmatprep.subr.mxu0 0.0
    %1308 = vmatpush1.msra.mxu0 0.0
    %1309 = vmatprep.subr.mxu0 0.0
    %1310 = vmatpush1.msra.mxu0 0.0
    %1311 = vmatprep.subr.mxu0 0.0
    %1312 = vmatpush1.msra.mxu0 0.0
    %1313 = vmatprep.subr.mxu0 0.0
    %1314 = vmatpush1.msra.mxu0 0.0
    %1315 = vmatprep.subr.mxu0 0.0
    %1316 = vmatpush1.msra.mxu0 0.0
    %1317 = vmatprep.subr.mxu0 0.0
    %1318 = vmatpush1.msra.mxu0 0.0
    %1319 = vmatprep.subr.mxu0 0.0
    %1320 = vmatpush1.msra.mxu0 0.0
    %1321 = vmatprep.subr.mxu0 0.0
    %1322 = vmatpush1.msra.mxu0 0.0
    %1323 = vmatprep.subr.mxu0 0.0
    %1324 = vmatpush1.msra.mxu0 0.0
    %1325 = vmatprep.subr.mxu0 0.0
    %1326 = vmatpush1.msra.mxu0 0.0
    %1327 = vmatprep.subr.mxu0 0.0
    %1328 = vmatpush1.msra.mxu0 0.0
    %1329 = vmatprep.subr.mxu0 0.0
    %1330 = vmatpush1.msra.mxu0 0.0
    %1331 = vmatprep.subr.mxu0 0.0
    %1332 = vmatpush1.msra.mxu0 0.0
    %1333 = vmatprep.subr.mxu0 0.0
    %1334 = vmatpush1.msra.mxu0 0.0
    %1335 = vmatprep.subr.mxu0 0.0
    %1336 = vmatpush1.msra.mxu0 0.0
    %1337 = vmatprep.subr.mxu0 0.0
    %1338 = vmatpush1.msra.mxu0 0.0
    %1339 = vmatprep.subr.mxu0 0.0
    %1340 = vmatpush1.msra.mxu0 0.0
    %1341 = vmatprep.subr.mxu0 0.0
    %1342 = vmatpush1.msra.mxu0 0.0
    %1343 = vmatprep.subr.mxu0 0.0
    %1344 = vmatpush1.msra.mxu0 0.0
    %1345 = vmatprep.mubr.f32.mxu0 0.0
    %1346 = vmatmul.mubr.f32.gmra.mrb[0].mxu0 %v1279
    %v1347 = vpop.f32.mrb[0].mxu0
    %v1348 = vadd.f32 0.0, %v1347
    %v1349 = vpop.f32.mrb[0].mxu0
    %1350 = vdwg.mxu0
    %v1351 = vadd.f32 %v944, %v1348
    %s1352 = scalar_lea.vmem %s0, 42
    %v1353 = vld [vmem:[%s1352] sm:$0xff]
    %v1354 = vld [vmem:[%s1352 + $0x8] sm:$0x3f]
    %v1357 = vcombine.high %v1353, %v1353
    %v1359 = vunpack.c.l.s4 1983009808
    %v1360 = vunpack.c.0.s8 %v1359
    %v1361 = vlaneseq
    %v1362 = vshrl.u32 %v1361, 7
    %v1363 = vsub.s32 %v1360, %v1362
    %v1364 = vrot.slane %v1353, %v1363
    %v1366 = vunpack.c.l.s4 1983009808
    %v1367 = vunpack.c.0.s8 %v1366
    %v1368 = vlaneseq
    %v1369 = vshrl.u32 %v1368, 7
    %v1370 = vsub.s32 %v1367, %v1369
    %v1371 = vrot.slane %v1357, %v1370
    %v1372 = vcombine.high %v1364, %v1364
    %v1373 = vcombine.high %v1371, %v1371
    %v1374 = vcombine.high %v1354, %v1354
    %v1376 = vunpack.c.l.s4 1983009808
    %v1377 = vunpack.c.0.s8 %v1376
    %v1378 = vlaneseq
    %v1379 = vshrl.u32 %v1378, 7
    %v1380 = vsub.s32 %v1377, %v1379
    %v1381 = vrot.slane %v1354, %v1380
    %v1383 = vunpack.c.l.s4 1983009808
    %v1384 = vunpack.c.0.s8 %v1383
    %v1385 = vlaneseq
    %v1386 = vshrl.u32 %v1385, 7
    %v1387 = vsub.s32 %v1384, %v1386
    %v1388 = vrot.slane %v1374, %v1387
    %v1389 = vcombine.high %v1381, %v1381
    %1397 = vmatprep.subr.mxu0 0.0
    %1398 = vmatpush1.msra.mxu0 %v23
    %1399 = vmatprep.subr.mxu0 0.0
    %1400 = vmatpush1.msra.mxu0 %v24
    %1401 = vmatprep.subr.mxu0 0.0
    %1402 = vmatpush1.msra.mxu0 %v25
    %1403 = vmatprep.subr.mxu0 0.0
    %1404 = vmatpush1.msra.mxu0 %v26
    %1405 = vmatprep.subr.mxu0 0.0
    %1406 = vmatpush1.msra.mxu0 %v27
    %1407 = vmatprep.subr.mxu0 0.0
    %1408 = vmatpush1.msra.mxu0 %v28
    %1409 = vmatprep.subr.mxu0 0.0
    %1410 = vmatpush1.msra.mxu0 %v29
    %1411 = vmatprep.subr.mxu0 0.0
    %1412 = vmatpush1.msra.mxu0 %v30
    %1413 = vmatprep.subr.mxu0 0.0
    %1414 = vmatpush1.msra.mxu0 %v31
    %1415 = vmatprep.subr.mxu0 0.0
    %1416 = vmatpush1.msra.mxu0 %v32
    %1417 = vmatprep.subr.mxu0 0.0
    %1418 = vmatpush1.msra.mxu0 %v33
    %1419 = vmatprep.subr.mxu0 0.0
    %1420 = vmatpush1.msra.mxu0 %v34
    %1421 = vmatprep.subr.mxu0 0.0
    %1422 = vmatpush1.msra.mxu0 %v35
    %1423 = vmatprep.subr.mxu0 0.0
    %1424 = vmatpush1.msra.mxu0 %v36
    %1425 = vmatprep.subr.mxu0 0.0
    %1426 = vmatpush1.msra.mxu0 %v37
    %1427 = vmatprep.subr.mxu0 0.0
    %1428 = vmatpush1.msra.mxu0 %v38
    %1429 = vmatprep.subr.mxu0 0.0
    %1430 = vmatpush1.msra.mxu0 %v39
    %1431 = vmatprep.subr.mxu0 0.0
    %1432 = vmatpush1.msra.mxu0 %v40
    %1433 = vmatprep.subr.mxu0 0.0
    %1434 = vmatpush1.msra.mxu0 %v41
    %1435 = vmatprep.subr.mxu0 0.0
    %1436 = vmatpush1.msra.mxu0 %v42
    %1437 = vmatprep.subr.mxu0 0.0
    %1438 = vmatpush1.msra.mxu0 %v43
    %1439 = vmatprep.subr.mxu0 0.0
    %1440 = vmatpush1.msra.mxu0 %v44
    %1441 = vmatprep.subr.mxu0 0.0
    %1442 = vmatpush1.msra.mxu0 %v45
    %1443 = vmatprep.subr.mxu0 0.0
    %1444 = vmatpush1.msra.mxu0 %v46
    %1445 = vmatprep.subr.mxu0 0.0
    %1446 = vmatpush1.msra.mxu0 %v47
    %1447 = vmatprep.subr.mxu0 0.0
    %1448 = vmatpush1.msra.mxu0 %v48
    %1449 = vmatprep.subr.mxu0 0.0
    %1450 = vmatpush1.msra.mxu0 %v49
    %1451 = vmatprep.subr.mxu0 0.0
    %1452 = vmatpush1.msra.mxu0 %v50
    %1453 = vmatprep.subr.mxu0 0.0
    %1454 = vmatpush1.msra.mxu0 %v51
    %1455 = vmatprep.subr.mxu0 0.0
    %1456 = vmatpush1.msra.mxu0 %v52
    %1457 = vmatprep.subr.mxu0 0.0
    %1458 = vmatpush1.msra.mxu0 %v53
    %1459 = vmatprep.subr.mxu0 0.0
    %1460 = vmatpush1.msra.mxu0 %v54
    %1461 = vmatprep.mubr.f32.mxu0 %v1372
    %1462 = vmatmul.mubr.f32.gmra.mrb[0].mxu0 %v1364
    %v1463 = vpop.f32.mrb[0].mxu0
    %v1464 = vadd.f32 %v140, %v1463
    %v1465 = vpop.f32.mrb[0].mxu0
    %1466 = vdwg.mxu0
    %1467 = vmatprep.subr.mxu0 0.0
    %1468 = vmatpush1.msra.mxu0 %v55
    %1469 = vmatprep.subr.mxu0 0.0
    %1470 = vmatpush1.msra.mxu0 %v56
    %1471 = vmatprep.subr.mxu0 0.0
    %1472 = vmatpush1.msra.mxu0 %v57
    %1473 = vmatprep.subr.mxu0 0.0
    %1474 = vmatpush1.msra.mxu0 %v58
    %1475 = vmatprep.subr.mxu0 0.0
    %1476 = vmatpush1.msra.mxu0 %v59
    %1477 = vmatprep.subr.mxu0 0.0
    %1478 = vmatpush1.msra.mxu0 %v60
    %1479 = vmatprep.subr.mxu0 0.0
    %1480 = vmatpush1.msra.mxu0 %v61
    %1481 = vmatprep.subr.mxu0 0.0
    %1482 = vmatpush1.msra.mxu0 %v62
    %1483 = vmatprep.subr.mxu0 0.0
    %1484 = vmatpush1.msra.mxu0 %v63
    %1485 = vmatprep.subr.mxu0 0.0
    %1486 = vmatpush1.msra.mxu0 %v64
    %1487 = vmatprep.subr.mxu0 0.0
    %1488 = vmatpush1.msra.mxu0 %v65
    %1489 = vmatprep.subr.mxu0 0.0
    %1490 = vmatpush1.msra.mxu0 %v66
    %1491 = vmatprep.subr.mxu0 0.0
    %1492 = vmatpush1.msra.mxu0 %v67
    %1493 = vmatprep.subr.mxu0 0.0
    %1494 = vmatpush1.msra.mxu0 %v68
    %1495 = vmatprep.subr.mxu0 0.0
    %1496 = vmatpush1.msra.mxu0 %v69
    %1497 = vmatprep.subr.mxu0 0.0
    %1498 = vmatpush1.msra.mxu0 %v70
    %1499 = vmatprep.subr.mxu0 0.0
    %1500 = vmatpush1.msra.mxu0 %v71
    %1501 = vmatprep.subr.mxu0 0.0
    %1502 = vmatpush1.msra.mxu0 %v72
    %1503 = vmatprep.subr.mxu0 0.0
    %1504 = vmatpush1.msra.mxu0 %v73
    %1505 = vmatprep.subr.mxu0 0.0
    %1506 = vmatpush1.msra.mxu0 %v74
    %1507 = vmatprep.subr.mxu0 0.0
    %1508 = vmatpush1.msra.mxu0 %v75
    %1509 = vmatprep.subr.mxu0 0.0
    %1510 = vmatpush1.msra.mxu0 %v76
    %1511 = vmatprep.subr.mxu0 0.0
    %1512 = vmatpush1.msra.mxu0 %v77
    %1513 = vmatprep.subr.mxu0 0.0
    %1514 = vmatpush1.msra.mxu0 %v78
    %1515 = vmatprep.subr.mxu0 0.0
    %1516 = vmatpush1.msra.mxu0 %v79
    %1517 = vmatprep.subr.mxu0 0.0
    %1518 = vmatpush1.msra.mxu0 %v80
    %1519 = vmatprep.subr.mxu0 0.0
    %1520 = vmatpush1.msra.mxu0 %v81
    %1521 = vmatprep.subr.mxu0 0.0
    %1522 = vmatpush1.msra.mxu0 %v82
    %1523 = vmatprep.subr.mxu0 0.0
    %1524 = vmatpush1.msra.mxu0 %v83
    %1525 = vmatprep.subr.mxu0 0.0
    %1526 = vmatpush1.msra.mxu0 %v84
    %1527 = vmatprep.subr.mxu0 0.0
    %1528 = vmatpush1.msra.mxu0 %v85
    %1529 = vmatprep.subr.mxu0 0.0
    %1530 = vmatpush1.msra.mxu0 %v86
    %1531 = vmatprep.mubr.f32.mxu0 %v1373
    %1532 = vmatmul.mubr.f32.gmra.mrb[0].mxu0 %v1371
    %v1533 = vpop.f32.mrb[0].mxu0
    %v1534 = vadd.f32 %v1464, %v1533
    %v1535 = vpop.f32.mrb[0].mxu0
    %1536 = vdwg.mxu0
    %1537 = vmatprep.subr.mxu0 0.0
    %1538 = vmatpush1.msra.mxu0 %v87
    %1539 = vmatprep.subr.mxu0 0.0
    %1540 = vmatpush1.msra.mxu0 %v88
    %1541 = vmatprep.subr.mxu0 0.0
    %1542 = vmatpush1.msra.mxu0 %v89
    %1543 = vmatprep.subr.mxu0 0.0
    %1544 = vmatpush1.msra.mxu0 %v90
    %1545 = vmatprep.subr.mxu0 0.0
    %1546 = vmatpush1.msra.mxu0 %v91
    %1547 = vmatprep.subr.mxu0 0.0
    %1548 = vmatpush1.msra.mxu0 %v92
    %1549 = vmatprep.subr.mxu0 0.0
    %1550 = vmatpush1.msra.mxu0 %v93
    %1551 = vmatprep.subr.mxu0 0.0
    %1552 = vmatpush1.msra.mxu0 %v94
    %1553 = vmatprep.subr.mxu0 0.0
    %1554 = vmatpush1.msra.mxu0 %v95
    %1555 = vmatprep.subr.mxu0 0.0
    %1556 = vmatpush1.msra.mxu0 %v96
    %1557 = vmatprep.subr.mxu0 0.0
    %1558 = vmatpush1.msra.mxu0 %v97
    %1559 = vmatprep.subr.mxu0 0.0
    %1560 = vmatpush1.msra.mxu0 %v98
    %1561 = vmatprep.subr.mxu0 0.0
    %1562 = vmatpush1.msra.mxu0 %v99
    %1563 = vmatprep.subr.mxu0 0.0
    %1564 = vmatpush1.msra.mxu0 %v100
    %1565 = vmatprep.subr.mxu0 0.0
    %1566 = vmatpush1.msra.mxu0 %v101
    %1567 = vmatprep.subr.mxu0 0.0
    %1568 = vmatpush1.msra.mxu0 %v102
    %1569 = vmatprep.subr.mxu0 0.0
    %1570 = vmatpush1.msra.mxu0 %v103
    %1571 = vmatprep.subr.mxu0 0.0
    %1572 = vmatpush1.msra.mxu0 %v104
    %1573 = vmatprep.subr.mxu0 0.0
    %1574 = vmatpush1.msra.mxu0 %v105
    %1575 = vmatprep.subr.mxu0 0.0
    %1576 = vmatpush1.msra.mxu0 %v106
    %1577 = vmatprep.subr.mxu0 0.0
    %1578 = vmatpush1.msra.mxu0 %v107
    %1579 = vmatprep.subr.mxu0 0.0
    %1580 = vmatpush1.msra.mxu0 %v108
    %1581 = vmatprep.subr.mxu0 0.0
    %1582 = vmatpush1.msra.mxu0 %v109
    %1583 = vmatprep.subr.mxu0 0.0
    %1584 = vmatpush1.msra.mxu0 %v110
    %1585 = vmatprep.subr.mxu0 0.0
    %1586 = vmatpush1.msra.mxu0 %v111
    %1587 = vmatprep.subr.mxu0 0.0
    %1588 = vmatpush1.msra.mxu0 %v112
    %1589 = vmatprep.subr.mxu0 0.0
    %1590 = vmatpush1.msra.mxu0 %v113
    %1591 = vmatprep.subr.mxu0 0.0
    %1592 = vmatpush1.msra.mxu0 %v114
    %1593 = vmatprep.subr.mxu0 0.0
    %1594 = vmatpush1.msra.mxu0 %v115
    %1595 = vmatprep.subr.mxu0 0.0
    %1596 = vmatpush1.msra.mxu0 %v116
    %1597 = vmatprep.subr.mxu0 0.0
    %1598 = vmatpush1.msra.mxu0 %v117
    %1599 = vmatprep.subr.mxu0 0.0
    %1600 = vmatpush1.msra.mxu0 %v118
    %1601 = vmatprep.mubr.f32.mxu0 %v1389
    %1602 = vmatmul.mubr.f32.gmra.mrb[0].mxu0 %v1381
    %v1603 = vpop.f32.mrb[0].mxu0
    %v1604 = vadd.f32 %v1534, %v1603
    %v1605 = vpop.f32.mrb[0].mxu0
    %1606 = vdwg.mxu0
    %1607 = vmatprep.subr.mxu0 0.0
    %1608 = vmatpush1.msra.mxu0 %v119
    %1609 = vmatprep.subr.mxu0 0.0
    %1610 = vmatpush1.msra.mxu0 %v120
    %1611 = vmatprep.subr.mxu0 0.0
    %1612 = vmatpush1.msra.mxu0 %v121
    %1613 = vmatprep.subr.mxu0 0.0
    %1614 = vmatpush1.msra.mxu0 %v122
    %1615 = vmatprep.subr.mxu0 0.0
    %1616 = vmatpush1.msra.mxu0 %v123
    %1617 = vmatprep.subr.mxu0 0.0
    %1618 = vmatpush1.msra.mxu0 %v124
    %1619 = vmatprep.subr.mxu0 0.0
    %1620 = vmatpush1.msra.mxu0 %v125
    %1621 = vmatprep.subr.mxu0 0.0
    %1622 = vmatpush1.msra.mxu0 %v126
    %1623 = vmatprep.subr.mxu0 0.0
    %1624 = vmatpush1.msra.mxu0 %v127
    %1625 = vmatprep.subr.mxu0 0.0
    %1626 = vmatpush1.msra.mxu0 %v128
    %1627 = vmatprep.subr.mxu0 0.0
    %1628 = vmatpush1.msra.mxu0 %v129
    %1629 = vmatprep.subr.mxu0 0.0
    %1630 = vmatpush1.msra.mxu0 %v130
    %1631 = vmatprep.subr.mxu0 0.0
    %1632 = vmatpush1.msra.mxu0 %v131
    %1633 = vmatprep.subr.mxu0 0.0
    %1634 = vmatpush1.msra.mxu0 %v132
    %1635 = vmatprep.subr.mxu0 0.0
    %1636 = vmatpush1.msra.mxu0 %v133
    %1637 = vmatprep.subr.mxu0 0.0
    %1638 = vmatpush1.msra.mxu0 %v134
    %1639 = vmatprep.subr.mxu0 0.0
    %1640 = vmatpush1.msra.mxu0 0.0
    %1641 = vmatprep.subr.mxu0 0.0
    %1642 = vmatpush1.msra.mxu0 0.0
    %1643 = vmatprep.subr.mxu0 0.0
    %1644 = vmatpush1.msra.mxu0 0.0
    %1645 = vmatprep.subr.mxu0 0.0
    %1646 = vmatpush1.msra.mxu0 0.0
    %1647 = vmatprep.subr.mxu0 0.0
    %1648 = vmatpush1.msra.mxu0 0.0
    %1649 = vmatprep.subr.mxu0 0.0
    %1650 = vmatpush1.msra.mxu0 0.0
    %1651 = vmatprep.subr.mxu0 0.0
    %1652 = vmatpush1.msra.mxu0 0.0
    %1653 = vmatprep.subr.mxu0 0.0
    %1654 = vmatpush1.msra.mxu0 0.0
    %1655 = vmatprep.subr.mxu0 0.0
    %1656 = vmatpush1.msra.mxu0 0.0
    %1657 = vmatprep.subr.mxu0 0.0
    %1658 = vmatpush1.msra.mxu0 0.0
    %1659 = vmatprep.subr.mxu0 0.0
    %1660 = vmatpush1.msra.mxu0 0.0
    %1661 = vmatprep.subr.mxu0 0.0
    %1662 = vmatpush1.msra.mxu0 0.0
    %1663 = vmatprep.subr.mxu0 0.0
    %1664 = vmatpush1.msra.mxu0 0.0
    %1665 = vmatprep.subr.mxu0 0.0
    %1666 = vmatpush1.msra.mxu0 0.0
    %1667 = vmatprep.subr.mxu0 0.0
    %1668 = vmatpush1.msra.mxu0 0.0
    %1669 = vmatprep.subr.mxu0 0.0
    %1670 = vmatpush1.msra.mxu0 0.0
    %1671 = vmatprep.mubr.f32.mxu0 0.0
    %1672 = vmatmul.mubr.f32.gmra.mrb[0].mxu0 %v1388
    %v1673 = vpop.f32.mrb[0].mxu0
    %v1674 = vadd.f32 %v1604, %v1673
    %v1675 = vpop.f32.mrb[0].mxu0
    %1676 = vdwg.mxu0
    %v1677 = vmax.f32 %v1674, 0.0
    %s1678 = scalar_lea.vmem %s3, 96
    %v1679 = vld [vmem:[%s1678] sm:$0xff]
    %v1680 = vld [vmem:[%s1678 + $0x8] sm:$0xff]
    %v1681 = vld [vmem:[%s1678 + $0x10] sm:$0xff]
    %v1682 = vld [vmem:[%s1678 + $0x18] sm:$0xff]
    %v1684 = vsel %vm800, %v1677, 0
    %1686 = vmatprep.subr.mxu0 0.0
    %1687 = vmatpush1.msra.mxu0 %v1679
    %1688 = vmatprep.subr.mxu0 0.0
    %1689 = vmatpush1.msra.mxu0 %v1680
    %1690 = vmatprep.subr.mxu0 0.0
    %1691 = vmatpush1.msra.mxu0 %v1681
    %1692 = vmatprep.subr.mxu0 0.0
    %1693 = vmatpush1.msra.mxu0 %v1682
    %1694 = vmatprep.subr.mxu0 0.0
    %1695 = vmatpush1.msra.mxu0 0.0
    %1696 = vmatprep.subr.mxu0 0.0
    %1697 = vmatpush1.msra.mxu0 0.0
    %1698 = vmatprep.subr.mxu0 0.0
    %1699 = vmatpush1.msra.mxu0 0.0
    %1700 = vmatprep.subr.mxu0 0.0
    %1701 = vmatpush1.msra.mxu0 0.0
    %1702 = vmatprep.subr.mxu0 0.0
    %1703 = vmatpush1.msra.mxu0 0.0
    %1704 = vmatprep.subr.mxu0 0.0
    %1705 = vmatpush1.msra.mxu0 0.0
    %1706 = vmatprep.subr.mxu0 0.0
    %1707 = vmatpush1.msra.mxu0 0.0
    %1708 = vmatprep.subr.mxu0 0.0
    %1709 = vmatpush1.msra.mxu0 0.0
    %1710 = vmatprep.subr.mxu0 0.0
    %1711 = vmatpush1.msra.mxu0 0.0
    %1712 = vmatprep.subr.mxu0 0.0
    %1713 = vmatpush1.msra.mxu0 0.0
    %1714 = vmatprep.subr.mxu0 0.0
    %1715 = vmatpush1.msra.mxu0 0.0
    %1716 = vmatprep.subr.mxu0 0.0
    %1717 = vmatpush1.msra.mxu0 0.0
    %1718 = vmatprep.subr.mxu0 0.0
    %1719 = vmatpush1.msra.mxu0 0.0
    %1720 = vmatprep.subr.mxu0 0.0
    %1721 = vmatpush1.msra.mxu0 0.0
    %1722 = vmatprep.subr.mxu0 0.0
    %1723 = vmatpush1.msra.mxu0 0.0
    %1724 = vmatprep.subr.mxu0 0.0
    %1725 = vmatpush1.msra.mxu0 0.0
    %1726 = vmatprep.subr.mxu0 0.0
    %1727 = vmatpush1.msra.mxu0 0.0
    %1728 = vmatprep.subr.mxu0 0.0
    %1729 = vmatpush1.msra.mxu0 0.0
    %1730 = vmatprep.subr.mxu0 0.0
    %1731 = vmatpush1.msra.mxu0 0.0
    %1732 = vmatprep.subr.mxu0 0.0
    %1733 = vmatpush1.msra.mxu0 0.0
    %1734 = vmatprep.subr.mxu0 0.0
    %1735 = vmatpush1.msra.mxu0 0.0
    %1736 = vmatprep.subr.mxu0 0.0
    %1737 = vmatpush1.msra.mxu0 0.0
    %1738 = vmatprep.subr.mxu0 0.0
    %1739 = vmatpush1.msra.mxu0 0.0
    %1740 = vmatprep.subr.mxu0 0.0
    %1741 = vmatpush1.msra.mxu0 0.0
    %1742 = vmatprep.subr.mxu0 0.0
    %1743 = vmatpush1.msra.mxu0 0.0
    %1744 = vmatprep.subr.mxu0 0.0
    %1745 = vmatpush1.msra.mxu0 0.0
    %1746 = vmatprep.subr.mxu0 0.0
    %1747 = vmatpush1.msra.mxu0 0.0
    %1748 = vmatprep.subr.mxu0 0.0
    %1749 = vmatpush1.msra.mxu0 0.0
    %1750 = vmatprep.mubr.f32.mxu0 0.0
    %1751 = vmatmul.mubr.f32.gmra.mrb[0].mxu0 %v1684
    %v1752 = vpop.f32.mrb[0].mxu0
    %v1753 = vadd.f32 0.0, %v1752
    %v1754 = vpop.f32.mrb[0].mxu0
    %1755 = vdwg.mxu0
    %v1756 = vadd.f32 %v1351, %v1753
    %v1757 = vld [vmem:[%s4] sm:$0x1]
    %v1759 = vlaneseq
    %v1760 = vshrl.u32 %v1759, 7
    %v1761 = vsub.s32 0, %v1760
    %v1762 = vrot.slane %v1757, %v1761
    %v1764 = vadd.f32 %v1756, %v1762
    %vm1765 = vcmask 9216
    %1766 = vst.msk [vmem:[#allocation2] sm:$0x3] %vm1765, %v1764
    // Predicated region
    $region22: #{dqn_forward.5} parent=1 // pred_check
      _
    $region23: #{dqn_forward.5} parent=1 // pred_check_branch
      %1768 = sbr.rel (0) target = $region25
    $region24: #{dqn_forward.5} parent=1 // pred_region
      %s1770 = ssub.s32 32, 32
      %1771 = vsyncadd [#allocation3], %s1770
      %s1773 = sshll.u32 [#allocation2], 4
      %s1774 = int_to_ptr.vmem [resolvable:$true] %s1773
      %1776 = dma.vmem_to_hbm [thread:$0]  %s1774, 32, %s5, [#allocation3]
    $region25: #{dqn_forward.5} parent=1 // pred_fallthru
      _
    // Predicated region
    $region26: #{dqn_forward.5} parent=1 // pred_check
      _
    $region27: #{dqn_forward.5} parent=1 // pred_check_branch
      %1778 = sbr.rel (0) target = $region29
    $region28: #{dqn_forward.5} parent=1 // pred_region
      %1779 = dma.done [#allocation3], 32
    $region29: #{dqn_forward.5} parent=1 // pred_fallthru
      _
    %1780 = vsyncpa [#allocation3], 1

</llo_original>
